<compile_context>
chip_gen: v6e
topology: v6e:2x2x1
jax: 0.10.0
libtpu: 0.0.40
codegen_flags: <defaults>
</compile_context>

<pallas_src>
import functools

import jax
import jax.numpy as jnp
import numpy as np
from jax.experimental import pallas as pl
from jax.experimental.pallas import tpu as pltpu


# ----------------------------------------------------------------------------
# Kernel
# ----------------------------------------------------------------------------
def downblock_kernel(p1_ref, pd_ref, mask_ref,
                     w1_ref, a1_ref, c1_ref,
                     w2_ref, a2_ref, c2_ref,
                     wd_ref, ad_ref, cd_ref,
                     out_ref, pad_ref,
                     *, wo, pad_rows, m_rows, cout):
    bf16 = jnp.bfloat16

    def lrelu(v):                                  # LeakyReLU(0.2)
        return jnp.maximum(v, 0.2 * v)

    # Guard rows of the flat-spatial staging buffer must read as zero.  Only
    # the two small pad regions are cleared (the body is fully overwritten
    # below); cleared every step because with "parallel" megacore sharding a
    # core may never execute program_id == 0.
    zpad = jnp.zeros((pad_rows, cout), bf16)
    pad_ref[0:pad_rows, :] = zpad
    pad_ref[pad_rows + m_rows:2 * pad_rows + m_rows, :] = zpad

    # ---- main path, conv1: stride-2 3x3 conv as a single im2col matmul ----
    y1 = jnp.dot(p1_ref[...], w1_ref[...], preferred_element_type=jnp.float32)
    y1 = lrelu(y1 * a1_ref[...] + c1_ref[...])     # folded BN + LeakyReLU
    y1b = y1.astype(bf16)                          # MXU operand dtype

    # ---- direct path: (pre-pooled) 1x1 conv + folded BN + LeakyReLU ----
    d = jnp.dot(pd_ref[...], wd_ref[...], preferred_element_type=jnp.float32)
    d = lrelu(d * ad_ref[...] + cd_ref[...])

    # ---- main path, conv2: 3x3 stride-1 conv on the in-kernel activation.
    # Stage y1 (bf16) into the zero-guarded flat-(b, ho, wo) buffer; each of
    # the 8 non-centre taps is a shifted (m_rows, cout) window (image-edge /
    # batch-boundary rows zeroed via a precomputed bf16 mask) feeding one
    # accumulating MXU matmul.  The centre tap needs neither shift nor mask,
    # so it uses y1b directly and seeds the accumulator.
    pad_ref[pad_rows:pad_rows + m_rows, :] = y1b

    acc = jnp.dot(y1b, w2_ref[4], preferred_element_type=jnp.float32)
    for t in range(9):                             # unrolled at trace time
        if t == 4:
            continue
        kh, kw = t // 3, t % 3
        start = pad_rows + (kh - 1) * wo + (kw - 1)
        win = pad_ref[start:start + m_rows, :] * mask_ref[:, t:t + 1]
        acc += jnp.dot(win, w2_ref[t], preferred_element_type=jnp.float32)
    main = lrelu(acc * a2_ref[...] + c2_ref[...])

    out_ref[...] = ((main + d) * 0.5).astype(out_ref.dtype)


# ----------------------------------------------------------------------------
# Wrapper
# ----------------------------------------------------------------------------
def downblock_pallas(x, params, eps=1e-5):
    B, cin, H, W = x.shape
    cout = params["w1"].shape[0]
    ho, wo = H // 2, W // 2
    hw = ho * wo

    # batch tile: fill the MXU M dimension per grid step (prefer >=256 rows,
    # 8-row aligned so blocked specs stay (8,128)-legal, capped for VMEM).
    bt = None
    for cand in range(1, B + 1):
        if B % cand == 0 and (cand * hw) % 8 == 0 and 256 <= cand * hw <= 4096:
            bt = cand
            break
    if bt is None:
        fits = [c for c in range(1, B + 1)
                if B % c == 0 and (c * hw) % 8 == 0 and c * hw <= 4096]
        bt = max(fits) if fits else B              # fall back to one grid step
    nb = B // bt
    m_rows = bt * hw
    pad_rows = ((wo + 1 + 7) // 8) * 8             # >= wo+1, sublane aligned

    f32, bf16 = jnp.float32, jnp.bfloat16

    # ---- XLA-side layout plumbing (no FLOPs) ----
    xh = jnp.transpose(x, (0, 2, 3, 1)).astype(f32)               # NHWC
    xp = jnp.pad(xh, ((0, 0), (1, 1), (1, 1), (0, 0)))
    taps = [xp[:, kh:kh + 2 * ho:2, kw:kw + 2 * wo:2, :]
            for kh in range(3) for kw in range(3)]
    p1 = jnp.concatenate(taps, axis=-1).reshape(B * hw, 9 * cin).astype(bf16)
    pd = xh.reshape(B, ho, 2, wo, 2, cin).mean(axis=(2, 4))
    pd = pd.reshape(B * hw, cin).astype(bf16)

    # conv weights as matmul operands (tap-major, in-channel-minor K layout)
    w1m = jnp.transpose(params["w1"], (2, 3, 1, 0)).reshape(9 * cin, cout).astype(bf16)
    w2m = jnp.transpose(params["w2"], (2, 3, 1, 0)).reshape(9, cout, cout).astype(bf16)
    wdm = jnp.transpose(params["wd"][:, :, 0, 0], (1, 0)).astype(bf16)

    # fold inference-mode BatchNorm into per-channel scale/shift
    def bn_fold(g, b, mean, var):
        s = g / jnp.sqrt(var + eps)
        return (s.reshape(1, cout).astype(f32),
                (b - mean * s).reshape(1, cout).astype(f32))

    a1, c1 = bn_fold(params["bn1_g"], params["bn1_b"], params["bn1_m"], params["bn1_v"])
    a2, c2 = bn_fold(params["bn2_g"], params["bn2_b"], params["bn2_m"], params["bn2_v"])
    ad, cd = bn_fold(params["bnd_g"], params["bnd_b"], params["bnd_m"], params["bnd_v"])

    # per-tap validity masks (bf16, {0,1}) for the in-kernel 3x3 stride-1 conv
    p = jnp.arange(m_rows)
    i_loc = (p % hw) // wo
    j_loc = p % wo
    row_ok = [i_loc >= 1, jnp.ones_like(i_loc, dtype=bool), i_loc <= ho - 2]
    col_ok = [j_loc >= 1, jnp.ones_like(j_loc, dtype=bool), j_loc <= wo - 2]
    masks = jnp.stack([(row_ok[kh] & col_ok[kw]).astype(bf16)
                       for kh in range(3) for kw in range(3)], axis=1)   # (m_rows, 9)

    kernel = functools.partial(downblock_kernel, wo=wo, pad_rows=pad_rows,
                               m_rows=m_rows, cout=cout)

    grid_spec = pltpu.PrefetchScalarGridSpec(
        num_scalar_prefetch=0,
        grid=(nb,),
        in_specs=[
            pl.BlockSpec((m_rows, 9 * cin), lambda i: (i, 0)),    # p1 patches
            pl.BlockSpec((m_rows, cin), lambda i: (i, 0)),        # pooled input
            pl.BlockSpec((m_rows, 9), lambda i: (0, 0)),          # tap masks
            pl.BlockSpec((9 * cin, cout), lambda i: (0, 0)),      # w1
            pl.BlockSpec((1, cout), lambda i: (0, 0)),            # bn1 scale
            pl.BlockSpec((1, cout), lambda i: (0, 0)),            # bn1 shift
            pl.BlockSpec((9, cout, cout), lambda i: (0, 0, 0)),   # w2 (per tap)
            pl.BlockSpec((1, cout), lambda i: (0, 0)),            # bn2 scale
            pl.BlockSpec((1, cout), lambda i: (0, 0)),            # bn2 shift
            pl.BlockSpec((cin, cout), lambda i: (0, 0)),          # wd (1x1)
            pl.BlockSpec((1, cout), lambda i: (0, 0)),            # bnd scale
            pl.BlockSpec((1, cout), lambda i: (0, 0)),            # bnd shift
        ],
        out_specs=pl.BlockSpec((m_rows, cout), lambda i: (i, 0)),
        scratch_shapes=[pltpu.VMEM((m_rows + 2 * pad_rows, cout), jnp.bfloat16)],
    )

    out_flat = pl.pallas_call(
        kernel,
        grid_spec=grid_spec,
        out_shape=jax.ShapeDtypeStruct((B * hw, cout), jnp.float32),
        compiler_params=pltpu.CompilerParams(dimension_semantics=("parallel",)),
    )(p1, pd, masks, w1m, a1, c1, w2m, a2, c2, wdm, ad, cd)

    return jnp.transpose(out_flat.reshape(B, ho, wo, cout), (0, 3, 1, 2))


# ----------------------------------------------------------------------------
# Pure-JAX reference (mirrors the PyTorch forward, eval-mode BatchNorm)
# ----------------------------------------------------------------------------
def downblock_ref(x, params, eps=1e-5):
    def conv(v, w, stride, pad):
        return jax.lax.conv_general_dilated(
            v, w, window_strides=(stride, stride),
            padding=[(pad, pad), (pad, pad)],
            dimension_numbers=("NCHW", "OIHW", "NCHW"))

    def bn(v, g, b, mean, var):
        s = g / jnp.sqrt(var + eps)
        return v * s.reshape(1, -1, 1, 1) + (b - mean * s).reshape(1, -1, 1, 1)

    def lrelu(v):
        return jnp.maximum(v, 0.2 * v)

    y = lrelu(bn(conv(x, params["w1"], 2, 1),
                 params["bn1_g"], params["bn1_b"], params["bn1_m"], params["bn1_v"]))
    main = lrelu(bn(conv(y, params["w2"], 1, 1),
                    params["bn2_g"], params["bn2_b"], params["bn2_m"], params["bn2_v"]))

    B, C, H, W = x.shape
    d = x.reshape(B, C, H // 2, 2, W // 2, 2).mean(axis=(3, 5))
    direct = lrelu(bn(conv(d, params["wd"], 1, 0),
                      params["bnd_g"], params["bnd_b"], params["bnd_m"], params["bnd_v"]))
    return (main + direct) / 2


# ----------------------------------------------------------------------------
def init_params(key, cin, cout):
    ks = jax.random.split(key, 15)

    def winit(k, shape, fan_in):
        return jax.random.normal(k, shape, jnp.float32) / np.sqrt(fan_in)

    def bninit(kg, kb, km, kv, c):
        return (1.0 + 0.1 * jax.random.normal(kg, (c,), jnp.float32),
                0.1 * jax.random.normal(kb, (c,), jnp.float32),
                0.1 * jax.random.normal(km, (c,), jnp.float32),
                1.0 + 0.1 * jnp.abs(jax.random.normal(kv, (c,), jnp.float32)))

    p = {}
    p["w1"] = winit(ks[0], (cout, cin, 3, 3), 9 * cin)
    p["w2"] = winit(ks[1], (cout, cout, 3, 3), 9 * cout)
    p["wd"] = winit(ks[2], (cout, cin, 1, 1), cin)
    p["bn1_g"], p["bn1_b"], p["bn1_m"], p["bn1_v"] = bninit(ks[3], ks[4], ks[5], ks[6], cout)
    p["bn2_g"], p["bn2_b"], p["bn2_m"], p["bn2_v"] = bninit(ks[7], ks[8], ks[9], ks[10], cout)
    p["bnd_g"], p["bnd_b"], p["bnd_m"], p["bnd_v"] = bninit(ks[11], ks[12], ks[13], ks[14], cout)
    return p


if __name__ == "__main__":
    B, CIN, COUT, H, W = 2, 4, 8, 16, 16

    key = jax.random.PRNGKey(0)
    kx, kp = jax.random.split(key)
    x = jax.random.normal(kx, (B, CIN, H, W), jnp.float32)
    params = init_params(kp, CIN, COUT)

    out = downblock_pallas(x, params)
    out = jax.block_until_ready(out)

    ref = downblock_ref(x, params)
    np.testing.assert_allclose(np.asarray(out), np.asarray(ref),
                               rtol=5e-2, atol=5e-2)

    print("KERNEL_OK")
</pallas_src>

<mosaic_0001>
module attributes {stable_mosaic.version = 11 : i64} {
  func.func @downblock_kernel(%arg0: i32, %arg1: memref<128x36xbf16, #tpu.memory_space<vmem>>, %arg2: memref<128x4xbf16, #tpu.memory_space<vmem>>, %arg3: memref<128x9xbf16, #tpu.memory_space<vmem>>, %arg4: memref<36x8xbf16, #tpu.memory_space<vmem>>, %arg5: memref<1x8xf32, #tpu.memory_space<vmem>>, %arg6: memref<1x8xf32, #tpu.memory_space<vmem>>, %arg7: memref<9x8x8xbf16, #tpu.memory_space<vmem>>, %arg8: memref<1x8xf32, #tpu.memory_space<vmem>>, %arg9: memref<1x8xf32, #tpu.memory_space<vmem>>, %arg10: memref<4x8xbf16, #tpu.memory_space<vmem>>, %arg11: memref<1x8xf32, #tpu.memory_space<vmem>>, %arg12: memref<1x8xf32, #tpu.memory_space<vmem>>, %arg13: memref<128x8xf32, #tpu.memory_space<vmem>>, %arg14: memref<160x8xbf16, #tpu.memory_space<vmem>>) attributes {dimension_semantics = [#tpu.dimension_semantics<parallel>], iteration_bounds = array<i64: 1>, scalar_prefetch = 0 : i64, scratch_operands = 1 : i64, tpu.core_type = #tpu.core_type<tc>, window_params = [{transform_indices = @transform_0, window_bounds = array<i64: 128, 36>}, {transform_indices = @transform_1, window_bounds = array<i64: 128, 4>}, {pipeline_mode = #tpu.pipeline_mode<synchronous>, transform_indices = @transform_2, window_bounds = array<i64: 128, 9>}, {pipeline_mode = #tpu.pipeline_mode<synchronous>, transform_indices = @transform_3, window_bounds = array<i64: 36, 8>}, {pipeline_mode = #tpu.pipeline_mode<synchronous>, transform_indices = @transform_4, window_bounds = array<i64: 1, 8>}, {pipeline_mode = #tpu.pipeline_mode<synchronous>, transform_indices = @transform_5, window_bounds = array<i64: 1, 8>}, {pipeline_mode = #tpu.pipeline_mode<synchronous>, transform_indices = @transform_6, window_bounds = array<i64: 9, 8, 8>}, {pipeline_mode = #tpu.pipeline_mode<synchronous>, transform_indices = @transform_7, window_bounds = array<i64: 1, 8>}, {pipeline_mode = #tpu.pipeline_mode<synchronous>, transform_indices = @transform_8, window_bounds = array<i64: 1, 8>}, {pipeline_mode = #tpu.pipeline_mode<synchronous>, transform_indices = @transform_9, window_bounds = array<i64: 4, 8>}, {pipeline_mode = #tpu.pipeline_mode<synchronous>, transform_indices = @transform_10, window_bounds = array<i64: 1, 8>}, {pipeline_mode = #tpu.pipeline_mode<synchronous>, transform_indices = @transform_11, window_bounds = array<i64: 1, 8>}, {transform_indices = @transform_12, window_bounds = array<i64: 128, 8>}]} {
    %cst = arith.constant 0.000000e+00 : bf16
    %0 = vector.broadcast %cst : bf16 to vector<16x8xbf16>
    %c0 = arith.constant 0 : index
    %c0_0 = arith.constant 0 : index
    %1 = vector.load %arg14[%c0, %c0_0] : memref<160x8xbf16, #tpu.memory_space<vmem>>, vector<16x8xbf16>
    tpu.vector_store %arg14[%c0, %c0_0], %0 {strides = array<i32>} : memref<160x8xbf16, #tpu.memory_space<vmem>>, vector<16x8xbf16>,
    %c144 = arith.constant 144 : index
    %c0_1 = arith.constant 0 : index
    %2 = vector.load %arg14[%c144, %c0_1] : memref<160x8xbf16, #tpu.memory_space<vmem>>, vector<16x8xbf16>
    tpu.vector_store %arg14[%c144, %c0_1], %0 {strides = array<i32>} : memref<160x8xbf16, #tpu.memory_space<vmem>>, vector<16x8xbf16>,
    %c0_2 = arith.constant 0 : index
    %c0_3 = arith.constant 0 : index
    %3 = vector.load %arg1[%c0_2, %c0_3] : memref<128x36xbf16, #tpu.memory_space<vmem>>, vector<128x36xbf16>
    %c0_4 = arith.constant 0 : index
    %c0_5 = arith.constant 0 : index
    %4 = vector.load %arg4[%c0_4, %c0_5] : memref<36x8xbf16, #tpu.memory_space<vmem>>, vector<36x8xbf16>
    %cst_6 = arith.constant dense<0.000000e+00> : vector<128x8xf32>
    %5 = tpu.matmul %3, %4, %cst_6 {dimension_numbers = #tpu.dot_dimension_numbers<[1], [0], [0], [1], [0, 0, 1, 1], [], []>} : vector<128x36xbf16>, vector<36x8xbf16>, vector<128x8xf32> -> vector<128x8xf32>
    %c0_7 = arith.constant 0 : index
    %c0_8 = arith.constant 0 : index
    %6 = vector.load %arg5[%c0_7, %c0_8] : memref<1x8xf32, #tpu.memory_space<vmem>>, vector<1x8xf32>
    %7 = vector.broadcast %6 : vector<1x8xf32> to vector<128x8xf32>
    %8 = arith.mulf %5, %7 : vector<128x8xf32>
    %c0_9 = arith.constant 0 : index
    %c0_10 = arith.constant 0 : index
    %9 = vector.load %arg6[%c0_9, %c0_10] : memref<1x8xf32, #tpu.memory_space<vmem>>, vector<1x8xf32>
    %10 = vector.broadcast %9 : vector<1x8xf32> to vector<128x8xf32>
    %11 = arith.addf %8, %10 : vector<128x8xf32>
    %cst_11 = arith.constant 2.000000e-01 : f32
    %12 = vector.broadcast %cst_11 : f32 to vector<128x8xf32>
    %13 = arith.mulf %12, %11 : vector<128x8xf32>
    %14 = arith.maximumf %11, %13 : vector<128x8xf32>
    %15 = arith.truncf %14 : vector<128x8xf32> to vector<128x8xbf16>
    %c0_12 = arith.constant 0 : index
    %c0_13 = arith.constant 0 : index
    %16 = vector.load %arg2[%c0_12, %c0_13] : memref<128x4xbf16, #tpu.memory_space<vmem>>, vector<128x4xbf16>
    %c0_14 = arith.constant 0 : index
    %c0_15 = arith.constant 0 : index
    %17 = vector.load %arg10[%c0_14, %c0_15] : memref<4x8xbf16, #tpu.memory_space<vmem>>, vector<4x8xbf16>
    %cst_16 = arith.constant dense<0.000000e+00> : vector<128x8xf32>
    %18 = tpu.matmul %16, %17, %cst_16 {dimension_numbers = #tpu.dot_dimension_numbers<[1], [0], [0], [1], [0, 0, 1, 1], [], []>} : vector<128x4xbf16>, vector<4x8xbf16>, vector<128x8xf32> -> vector<128x8xf32>
    %c0_17 = arith.constant 0 : index
    %c0_18 = arith.constant 0 : index
    %19 = vector.load %arg11[%c0_17, %c0_18] : memref<1x8xf32, #tpu.memory_space<vmem>>, vector<1x8xf32>
    %20 = vector.broadcast %19 : vector<1x8xf32> to vector<128x8xf32>
    %21 = arith.mulf %18, %20 : vector<128x8xf32>
    %c0_19 = arith.constant 0 : index
    %c0_20 = arith.constant 0 : index
    %22 = vector.load %arg12[%c0_19, %c0_20] : memref<1x8xf32, #tpu.memory_space<vmem>>, vector<1x8xf32>
    %23 = vector.broadcast %22 : vector<1x8xf32> to vector<128x8xf32>
    %24 = arith.addf %21, %23 : vector<128x8xf32>
    %cst_21 = arith.constant 2.000000e-01 : f32
    %25 = vector.broadcast %cst_21 : f32 to vector<128x8xf32>
    %26 = arith.mulf %25, %24 : vector<128x8xf32>
    %27 = arith.maximumf %24, %26 : vector<128x8xf32>
    %c16 = arith.constant 16 : index
    %c0_22 = arith.constant 0 : index
    %28 = vector.load %arg14[%c16, %c0_22] : memref<160x8xbf16, #tpu.memory_space<vmem>>, vector<128x8xbf16>
    tpu.vector_store %arg14[%c16, %c0_22], %15 {strides = array<i32>} : memref<160x8xbf16, #tpu.memory_space<vmem>>, vector<128x8xbf16>,
    %c4 = arith.constant 4 : index
    %c0_23 = arith.constant 0 : index
    %c0_24 = arith.constant 0 : index
    %29 = vector.load %arg7[%c4, %c0_23, %c0_24] : memref<9x8x8xbf16, #tpu.memory_space<vmem>>, vector<1x8x8xbf16>
    %30 = vector.shape_cast %29 : vector<1x8x8xbf16> to vector<8x8xbf16>
    %cst_25 = arith.constant dense<0.000000e+00> : vector<128x8xf32>
    %31 = tpu.matmul %15, %30, %cst_25 {dimension_numbers = #tpu.dot_dimension_numbers<[1], [0], [0], [1], [0, 0, 1, 1], [], []>} : vector<128x8xbf16>, vector<8x8xbf16>, vector<128x8xf32> -> vector<128x8xf32>
    %c7 = arith.constant 7 : index
    %c0_26 = arith.constant 0 : index
    %32 = vector.load %arg14[%c7, %c0_26] : memref<160x8xbf16, #tpu.memory_space<vmem>>, vector<128x8xbf16>
    %c0_27 = arith.constant 0 : index
    %c0_28 = arith.constant 0 : index
    %33 = vector.load %arg3[%c0_27, %c0_28] : memref<128x9xbf16, #tpu.memory_space<vmem>>, vector<128x1xbf16>
    %34 = vector.broadcast %33 : vector<128x1xbf16> to vector<128x8xbf16>
    %35 = arith.mulf %32, %34 : vector<128x8xbf16>
    %c0_29 = arith.constant 0 : index
    %c0_30 = arith.constant 0 : index
    %c0_31 = arith.constant 0 : index
    %36 = vector.load %arg7[%c0_29, %c0_30, %c0_31] : memref<9x8x8xbf16, #tpu.memory_space<vmem>>, vector<1x8x8xbf16>
    %37 = vector.shape_cast %36 : vector<1x8x8xbf16> to vector<8x8xbf16>
    %cst_32 = arith.constant dense<0.000000e+00> : vector<128x8xf32>
    %38 = tpu.matmul %35, %37, %cst_32 {dimension_numbers = #tpu.dot_dimension_numbers<[1], [0], [0], [1], [0, 0, 1, 1], [], []>} : vector<128x8xbf16>, vector<8x8xbf16>, vector<128x8xf32> -> vector<128x8xf32>
    %39 = arith.addf %31, %38 : vector<128x8xf32>
    %c8 = arith.constant 8 : index
    %c0_33 = arith.constant 0 : index
    %40 = vector.load %arg14[%c8, %c0_33] : memref<160x8xbf16, #tpu.memory_space<vmem>>, vector<128x8xbf16>
    %c0_34 = arith.constant 0 : index
    %c1 = arith.constant 1 : index
    %41 = vector.load %arg3[%c0_34, %c1] : memref<128x9xbf16, #tpu.memory_space<vmem>>, vector<128x1xbf16>
    %42 = vector.broadcast %41 : vector<128x1xbf16> to vector<128x8xbf16>
    %43 = arith.mulf %40, %42 : vector<128x8xbf16>
    %c1_35 = arith.constant 1 : index
    %c0_36 = arith.constant 0 : index
    %c0_37 = arith.constant 0 : index
    %44 = vector.load %arg7[%c1_35, %c0_36, %c0_37] : memref<9x8x8xbf16, #tpu.memory_space<vmem>>, vector<1x8x8xbf16>
    %45 = vector.shape_cast %44 : vector<1x8x8xbf16> to vector<8x8xbf16>
    %cst_38 = arith.constant dense<0.000000e+00> : vector<128x8xf32>
    %46 = tpu.matmul %43, %45, %cst_38 {dimension_numbers = #tpu.dot_dimension_numbers<[1], [0], [0], [1], [0, 0, 1, 1], [], []>} : vector<128x8xbf16>, vector<8x8xbf16>, vector<128x8xf32> -> vector<128x8xf32>
    %47 = arith.addf %39, %46 : vector<128x8xf32>
    %c9 = arith.constant 9 : index
    %c0_39 = arith.constant 0 : index
    %48 = vector.load %arg14[%c9, %c0_39] : memref<160x8xbf16, #tpu.memory_space<vmem>>, vector<128x8xbf16>
    %c0_40 = arith.constant 0 : index
    %c2 = arith.constant 2 : index
    %49 = vector.load %arg3[%c0_40, %c2] : memref<128x9xbf16, #tpu.memory_space<vmem>>, vector<128x1xbf16>
    %50 = vector.broadcast %49 : vector<128x1xbf16> to vector<128x8xbf16>
    %51 = arith.mulf %48, %50 : vector<128x8xbf16>
    %c2_41 = arith.constant 2 : index
    %c0_42 = arith.constant 0 : index
    %c0_43 = arith.constant 0 : index
    %52 = vector.load %arg7[%c2_41, %c0_42, %c0_43] : memref<9x8x8xbf16, #tpu.memory_space<vmem>>, vector<1x8x8xbf16>
    %53 = vector.shape_cast %52 : vector<1x8x8xbf16> to vector<8x8xbf16>
    %cst_44 = arith.constant dense<0.000000e+00> : vector<128x8xf32>
    %54 = tpu.matmul %51, %53, %cst_44 {dimension_numbers = #tpu.dot_dimension_numbers<[1], [0], [0], [1], [0, 0, 1, 1], [], []>} : vector<128x8xbf16>, vector<8x8xbf16>, vector<128x8xf32> -> vector<128x8xf32>
    %55 = arith.addf %47, %54 : vector<128x8xf32>
    %c15 = arith.constant 15 : index
    %c0_45 = arith.constant 0 : index
    %56 = vector.load %arg14[%c15, %c0_45] : memref<160x8xbf16, #tpu.memory_space<vmem>>, vector<128x8xbf16>
    %c0_46 = arith.constant 0 : index
    %c3 = arith.constant 3 : index
    %57 = vector.load %arg3[%c0_46, %c3] : memref<128x9xbf16, #tpu.memory_space<vmem>>, vector<128x1xbf16>
    %58 = vector.broadcast %57 : vector<128x1xbf16> to vector<128x8xbf16>
    %59 = arith.mulf %56, %58 : vector<128x8xbf16>
    %c3_47 = arith.constant 3 : index
    %c0_48 = arith.constant 0 : index
    %c0_49 = arith.constant 0 : index
    %60 = vector.load %arg7[%c3_47, %c0_48, %c0_49] : memref<9x8x8xbf16, #tpu.memory_space<vmem>>, vector<1x8x8xbf16>
    %61 = vector.shape_cast %60 : vector<1x8x8xbf16> to vector<8x8xbf16>
    %cst_50 = arith.constant dense<0.000000e+00> : vector<128x8xf32>
    %62 = tpu.matmul %59, %61, %cst_50 {dimension_numbers = #tpu.dot_dimension_numbers<[1], [0], [0], [1], [0, 0, 1, 1], [], []>} : vector<128x8xbf16>, vector<8x8xbf16>, vector<128x8xf32> -> vector<128x8xf32>
    %63 = arith.addf %55, %62 : vector<128x8xf32>
    %c17 = arith.constant 17 : index
    %c0_51 = arith.constant 0 : index
    %64 = vector.load %arg14[%c17, %c0_51] : memref<160x8xbf16, #tpu.memory_space<vmem>>, vector<128x8xbf16>
    %c0_52 = arith.constant 0 : index
    %c5 = arith.constant 5 : index
    %65 = vector.load %arg3[%c0_52, %c5] : memref<128x9xbf16, #tpu.memory_space<vmem>>, vector<128x1xbf16>
    %66 = vector.broadcast %65 : vector<128x1xbf16> to vector<128x8xbf16>
    %67 = arith.mulf %64, %66 : vector<128x8xbf16>
    %c5_53 = arith.constant 5 : index
    %c0_54 = arith.constant 0 : index
    %c0_55 = arith.constant 0 : index
    %68 = vector.load %arg7[%c5_53, %c0_54, %c0_55] : memref<9x8x8xbf16, #tpu.memory_space<vmem>>, vector<1x8x8xbf16>
    %69 = vector.shape_cast %68 : vector<1x8x8xbf16> to vector<8x8xbf16>
    %cst_56 = arith.constant dense<0.000000e+00> : vector<128x8xf32>
    %70 = tpu.matmul %67, %69, %cst_56 {dimension_numbers = #tpu.dot_dimension_numbers<[1], [0], [0], [1], [0, 0, 1, 1], [], []>} : vector<128x8xbf16>, vector<8x8xbf16>, vector<128x8xf32> -> vector<128x8xf32>
    %71 = arith.addf %63, %70 : vector<128x8xf32>
    %c23 = arith.constant 23 : index
    %c0_57 = arith.constant 0 : index
    %72 = vector.load %arg14[%c23, %c0_57] : memref<160x8xbf16, #tpu.memory_space<vmem>>, vector<128x8xbf16>
    %c0_58 = arith.constant 0 : index
    %c6 = arith.constant 6 : index
    %73 = vector.load %arg3[%c0_58, %c6] : memref<128x9xbf16, #tpu.memory_space<vmem>>, vector<128x1xbf16>
    %74 = vector.broadcast %73 : vector<128x1xbf16> to vector<128x8xbf16>
    %75 = arith.mulf %72, %74 : vector<128x8xbf16>
    %c6_59 = arith.constant 6 : index
    %c0_60 = arith.constant 0 : index
    %c0_61 = arith.constant 0 : index
    %76 = vector.load %arg7[%c6_59, %c0_60, %c0_61] : memref<9x8x8xbf16, #tpu.memory_space<vmem>>, vector<1x8x8xbf16>
    %77 = vector.shape_cast %76 : vector<1x8x8xbf16> to vector<8x8xbf16>
    %cst_62 = arith.constant dense<0.000000e+00> : vector<128x8xf32>
    %78 = tpu.matmul %75, %77, %cst_62 {dimension_numbers = #tpu.dot_dimension_numbers<[1], [0], [0], [1], [0, 0, 1, 1], [], []>} : vector<128x8xbf16>, vector<8x8xbf16>, vector<128x8xf32> -> vector<128x8xf32>
    %79 = arith.addf %71, %78 : vector<128x8xf32>
    %c24 = arith.constant 24 : index
    %c0_63 = arith.constant 0 : index
    %80 = vector.load %arg14[%c24, %c0_63] : memref<160x8xbf16, #tpu.memory_space<vmem>>, vector<128x8xbf16>
    %c0_64 = arith.constant 0 : index
    %c7_65 = arith.constant 7 : index
    %81 = vector.load %arg3[%c0_64, %c7_65] : memref<128x9xbf16, #tpu.memory_space<vmem>>, vector<128x1xbf16>
    %82 = vector.broadcast %81 : vector<128x1xbf16> to vector<128x8xbf16>
    %83 = arith.mulf %80, %82 : vector<128x8xbf16>
    %c7_66 = arith.constant 7 : index
    %c0_67 = arith.constant 0 : index
    %c0_68 = arith.constant 0 : index
    %84 = vector.load %arg7[%c7_66, %c0_67, %c0_68] : memref<9x8x8xbf16, #tpu.memory_space<vmem>>, vector<1x8x8xbf16>
    %85 = vector.shape_cast %84 : vector<1x8x8xbf16> to vector<8x8xbf16>
    %cst_69 = arith.constant dense<0.000000e+00> : vector<128x8xf32>
    %86 = tpu.matmul %83, %85, %cst_69 {dimension_numbers = #tpu.dot_dimension_numbers<[1], [0], [0], [1], [0, 0, 1, 1], [], []>} : vector<128x8xbf16>, vector<8x8xbf16>, vector<128x8xf32> -> vector<128x8xf32>
    %87 = arith.addf %79, %86 : vector<128x8xf32>
    %c25 = arith.constant 25 : index
    %c0_70 = arith.constant 0 : index
    %88 = vector.load %arg14[%c25, %c0_70] : memref<160x8xbf16, #tpu.memory_space<vmem>>, vector<128x8xbf16>
    %c0_71 = arith.constant 0 : index
    %c8_72 = arith.constant 8 : index
    %89 = vector.load %arg3[%c0_71, %c8_72] : memref<128x9xbf16, #tpu.memory_space<vmem>>, vector<128x1xbf16>
    %90 = vector.broadcast %89 : vector<128x1xbf16> to vector<128x8xbf16>
    %91 = arith.mulf %88, %90 : vector<128x8xbf16>
    %c8_73 = arith.constant 8 : index
    %c0_74 = arith.constant 0 : index
    %c0_75 = arith.constant 0 : index
    %92 = vector.load %arg7[%c8_73, %c0_74, %c0_75] : memref<9x8x8xbf16, #tpu.memory_space<vmem>>, vector<1x8x8xbf16>
    %93 = vector.shape_cast %92 : vector<1x8x8xbf16> to vector<8x8xbf16>
    %cst_76 = arith.constant dense<0.000000e+00> : vector<128x8xf32>
    %94 = tpu.matmul %91, %93, %cst_76 {dimension_numbers = #tpu.dot_dimension_numbers<[1], [0], [0], [1], [0, 0, 1, 1], [], []>} : vector<128x8xbf16>, vector<8x8xbf16>, vector<128x8xf32> -> vector<128x8xf32>
    %95 = arith.addf %87, %94 : vector<128x8xf32>
    %c0_77 = arith.constant 0 : index
    %c0_78 = arith.constant 0 : index
    %96 = vector.load %arg8[%c0_77, %c0_78] : memref<1x8xf32, #tpu.memory_space<vmem>>, vector<1x8xf32>
    %97 = vector.broadcast %96 : vector<1x8xf32> to vector<128x8xf32>
    %98 = arith.mulf %95, %97 : vector<128x8xf32>
    %c0_79 = arith.constant 0 : index
    %c0_80 = arith.constant 0 : index
    %99 = vector.load %arg9[%c0_79, %c0_80] : memref<1x8xf32, #tpu.memory_space<vmem>>, vector<1x8xf32>
    %100 = vector.broadcast %99 : vector<1x8xf32> to vector<128x8xf32>
    %101 = arith.addf %98, %100 : vector<128x8xf32>
    %cst_81 = arith.constant 2.000000e-01 : f32
    %102 = vector.broadcast %cst_81 : f32 to vector<128x8xf32>
    %103 = arith.mulf %102, %101 : vector<128x8xf32>
    %104 = arith.maximumf %101, %103 : vector<128x8xf32>
    %105 = arith.addf %104, %27 : vector<128x8xf32>
    %cst_82 = arith.constant 5.000000e-01 : f32
    %106 = vector.broadcast %cst_82 : f32 to vector<128x8xf32>
    %107 = arith.mulf %105, %106 : vector<128x8xf32>
    %c0_83 = arith.constant 0 : index
    %c0_84 = arith.constant 0 : index
    %108 = vector.load %arg13[%c0_83, %c0_84] : memref<128x8xf32, #tpu.memory_space<vmem>>, vector<128x8xf32>
    tpu.vector_store %arg13[%c0_83, %c0_84], %107 {strides = array<i32>} : memref<128x8xf32, #tpu.memory_space<vmem>>, vector<128x8xf32>,
    return
  }
  func.func @transform_0(%arg0: i32) -> (i32, i32) {
    %c0_i32 = arith.constant 0 : i32
    %c0_i32_0 = arith.constant 0 : i32
    return %arg0, %c0_i32 : i32, i32
  }
  func.func @transform_1(%arg0: i32) -> (i32, i32) {
    %c0_i32 = arith.constant 0 : i32
    %c0_i32_0 = arith.constant 0 : i32
    return %arg0, %c0_i32 : i32, i32
  }
  func.func @transform_2(%arg0: i32) -> (i32, i32) {
    %c0_i32 = arith.constant 0 : i32
    %c0_i32_0 = arith.constant 0 : i32
    %c0_i32_1 = arith.constant 0 : i32
    return %c0_i32, %c0_i32_0 : i32, i32
  }
  func.func @transform_3(%arg0: i32) -> (i32, i32) {
    %c0_i32 = arith.constant 0 : i32
    %c0_i32_0 = arith.constant 0 : i32
    %c0_i32_1 = arith.constant 0 : i32
    return %c0_i32, %c0_i32_0 : i32, i32
  }
  func.func @transform_4(%arg0: i32) -> (i32, i32) {
    %c0_i32 = arith.constant 0 : i32
    %c0_i32_0 = arith.constant 0 : i32
    %c0_i32_1 = arith.constant 0 : i32
    return %c0_i32, %c0_i32_0 : i32, i32
  }
  func.func @transform_5(%arg0: i32) -> (i32, i32) {
    %c0_i32 = arith.constant 0 : i32
    %c0_i32_0 = arith.constant 0 : i32
    %c0_i32_1 = arith.constant 0 : i32
    return %c0_i32, %c0_i32_0 : i32, i32
  }
  func.func @transform_6(%arg0: i32) -> (i32, i32, i32) {
    %c0_i32 = arith.constant 0 : i32
    %c0_i32_0 = arith.constant 0 : i32
    %c0_i32_1 = arith.constant 0 : i32
    %c0_i32_2 = arith.constant 0 : i32
    return %c0_i32, %c0_i32_0, %c0_i32_1 : i32, i32, i32
  }
  func.func @transform_7(%arg0: i32) -> (i32, i32) {
    %c0_i32 = arith.constant 0 : i32
    %c0_i32_0 = arith.constant 0 : i32
    %c0_i32_1 = arith.constant 0 : i32
    return %c0_i32, %c0_i32_0 : i32, i32
  }
  func.func @transform_8(%arg0: i32) -> (i32, i32) {
    %c0_i32 = arith.constant 0 : i32
    %c0_i32_0 = arith.constant 0 : i32
    %c0_i32_1 = arith.constant 0 : i32
    return %c0_i32, %c0_i32_0 : i32, i32
  }
  func.func @transform_9(%arg0: i32) -> (i32, i32) {
    %c0_i32 = arith.constant 0 : i32
    %c0_i32_0 = arith.constant 0 : i32
    %c0_i32_1 = arith.constant 0 : i32
    return %c0_i32, %c0_i32_0 : i32, i32
  }
  func.func @transform_10(%arg0: i32) -> (i32, i32) {
    %c0_i32 = arith.constant 0 : i32
    %c0_i32_0 = arith.constant 0 : i32
    %c0_i32_1 = arith.constant 0 : i32
    return %c0_i32, %c0_i32_0 : i32, i32
  }
  func.func @transform_11(%arg0: i32) -> (i32, i32) {
    %c0_i32 = arith.constant 0 : i32
    %c0_i32_0 = arith.constant 0 : i32
    %c0_i32_1 = arith.constant 0 : i32
    return %c0_i32, %c0_i32_0 : i32, i32
  }
  func.func @transform_12(%arg0: i32) -> (i32, i32) {
    %c0_i32 = arith.constant 0 : i32
    %c0_i32_0 = arith.constant 0 : i32
    return %arg0, %c0_i32 : i32, i32
  }
}

</mosaic_0001>

<llo_original>
// kernel: tpu_custom_call.1
$region0: #{tpu_custom_call.1}
  #allocation0 [shape = 'u32[]', space=smem, size = 0x4, offset = 0x4, fixed_abs, tag = 'smem constant byte address 0x4 - core index']
  #allocation1 [shape = 'u32[144,128]{1,0:T(1,128)}', space=vmem, size = 0x12000, scoped, tag = 'internal scratch']
  #allocation2 [shape = 'bf16[160,8]{1,0:T(8,128)(2,1)}', space=vmem, size = 0xa000, scoped, tag = 'scratch operand']
  %s0 = inlined_call_operand.vmem [shape: bf16[128,36], index: 0, kind: input, shape index: {}]
  %s1 = inlined_call_operand.vmem [shape: bf16[128,4], index: 1, kind: input, shape index: {}]
  %s2 = inlined_call_operand.vmem [shape: bf16[128,9], index: 2, kind: input, shape index: {}]
  %s3 = inlined_call_operand.vmem [shape: bf16[36,8], index: 3, kind: input, shape index: {}]
  %s4 = inlined_call_operand.vmem [shape: f32[1,8], index: 4, kind: input, shape index: {}]
  %s5 = inlined_call_operand.vmem [shape: f32[1,8], index: 5, kind: input, shape index: {}]
  %s6 = inlined_call_operand.vmem [shape: bf16[9,8,8], index: 6, kind: input, shape index: {}]
  %s7 = inlined_call_operand.vmem [shape: f32[1,8], index: 7, kind: input, shape index: {}]
  %s8 = inlined_call_operand.vmem [shape: f32[1,8], index: 8, kind: input, shape index: {}]
  %s9 = inlined_call_operand.vmem [shape: bf16[4,8], index: 9, kind: input, shape index: {}]
  %s10 = inlined_call_operand.vmem [shape: f32[1,8], index: 10, kind: input, shape index: {}]
  %s11 = inlined_call_operand.vmem [shape: f32[1,8], index: 11, kind: input, shape index: {}]
  %s12 = inlined_call_operand.vmem [shape: f32[128,8], index: 12, kind: output, shape index: {}]
  %s13 = sld [smem:[#allocation0]]
  $region58: #{tpu_custom_call.1} parent=0
    _
  %s15 = ssub.s32 1, %s13
  %s16 = scalar_select 0, %s15, %s13
  // Predicated region
  $region2: #{tpu_custom_call.1} parent=0 // pred_check
    _
  $region3: #{tpu_custom_call.1} parent=0 // pred_check_branch
    %18 = sbr.rel (0) target = $region5
  $region4: #{tpu_custom_call.1} parent=0 // pred_region
    _
  $region5: #{tpu_custom_call.1} parent=0 // pred_fallthru
    _
  // Predicated region
  $region6: #{tpu_custom_call.1} parent=0 // pred_check
    _
  $region7: #{tpu_custom_call.1} parent=0 // pred_check_branch
    %20 = sbr.rel (0) target = $region9
  $region8: #{tpu_custom_call.1} parent=0 // pred_region
    _
  $region9: #{tpu_custom_call.1} parent=0 // pred_fallthru
    _
  // Predicated region
  $region10: #{tpu_custom_call.1} parent=0 // pred_check
    _
  $region11: #{tpu_custom_call.1} parent=0 // pred_check_branch
    %22 = sbr.rel (0) target = $region13
  $region12: #{tpu_custom_call.1} parent=0 // pred_region
    _
  $region13: #{tpu_custom_call.1} parent=0 // pred_fallthru
    _
  // Predicated region
  $region14: #{tpu_custom_call.1} parent=0 // pred_check
    _
  $region15: #{tpu_custom_call.1} parent=0 // pred_check_branch
    %24 = sbr.rel (0) target = $region17
  $region16: #{tpu_custom_call.1} parent=0 // pred_region
    _
  $region17: #{tpu_custom_call.1} parent=0 // pred_fallthru
    _
  // Predicated region
  $region18: #{tpu_custom_call.1} parent=0 // pred_check
    _
  $region19: #{tpu_custom_call.1} parent=0 // pred_check_branch
    %26 = sbr.rel (0) target = $region21
  $region20: #{tpu_custom_call.1} parent=0 // pred_region
    _
  $region21: #{tpu_custom_call.1} parent=0 // pred_fallthru
    _
  // Predicated region
  $region22: #{tpu_custom_call.1} parent=0 // pred_check
    _
  $region23: #{tpu_custom_call.1} parent=0 // pred_check_branch
    %28 = sbr.rel (0) target = $region25
  $region24: #{tpu_custom_call.1} parent=0 // pred_region
    _
  $region25: #{tpu_custom_call.1} parent=0 // pred_fallthru
    _
  // Predicated region
  $region26: #{tpu_custom_call.1} parent=0 // pred_check
    _
  $region27: #{tpu_custom_call.1} parent=0 // pred_check_branch
    %30 = sbr.rel (0) target = $region29
  $region28: #{tpu_custom_call.1} parent=0 // pred_region
    _
  $region29: #{tpu_custom_call.1} parent=0 // pred_fallthru
    _
  // Predicated region
  $region30: #{tpu_custom_call.1} parent=0 // pred_check
    _
  $region31: #{tpu_custom_call.1} parent=0 // pred_check_branch
    %32 = sbr.rel (0) target = $region33
  $region32: #{tpu_custom_call.1} parent=0 // pred_region
    _
  $region33: #{tpu_custom_call.1} parent=0 // pred_fallthru
    _
  // Predicated region
  $region34: #{tpu_custom_call.1} parent=0 // pred_check
    _
  $region35: #{tpu_custom_call.1} parent=0 // pred_check_branch
    %34 = sbr.rel (0) target = $region37
  $region36: #{tpu_custom_call.1} parent=0 // pred_region
    _
  $region37: #{tpu_custom_call.1} parent=0 // pred_fallthru
    _
  // Predicated region
  $region38: #{tpu_custom_call.1} parent=0 // pred_check
    _
  $region39: #{tpu_custom_call.1} parent=0 // pred_check_branch
    %36 = sbr.rel (0) target = $region41
  $region40: #{tpu_custom_call.1} parent=0 // pred_region
    _
  $region41: #{tpu_custom_call.1} parent=0 // pred_fallthru
    _
  // Predicated region
  $region42: #{tpu_custom_call.1} parent=0 // pred_check
    _
  $region43: #{tpu_custom_call.1} parent=0 // pred_check_branch
    %38 = sbr.rel (0) target = $region45
  $region44: #{tpu_custom_call.1} parent=0 // pred_region
    _
  $region45: #{tpu_custom_call.1} parent=0 // pred_fallthru
    _
  // Predicated region
  $region46: #{tpu_custom_call.1} parent=0 // pred_check
    _
  $region47: #{tpu_custom_call.1} parent=0 // pred_check_branch
    %40 = sbr.rel (0) target = $region49
  $region48: #{tpu_custom_call.1} parent=0 // pred_region
    _
  $region49: #{tpu_custom_call.1} parent=0 // pred_fallthru
    _
  %vm42 = vcmask 60416
  %43 = vst.msk [vmem:[#allocation2] sm:$0xf] %vm42, 0
  %44 = vst.msk [vmem:[#allocation2 + $0x4] sm:$0xf] %vm42, 0
  %45 = vst.msk [vmem:[#allocation2 + $0x48] sm:$0xf] %vm42, 0
  %46 = vst.msk [vmem:[#allocation2 + $0x4c] sm:$0xf] %vm42, 0
  %v47 = vld [vmem:[%s0] sm:$0xf]
  %v48 = vld [vmem:[%s0 + $0x4] sm:$0xf]
  %v49 = vld [vmem:[%s0 + $0x8] sm:$0xf]
  %v50 = vld [vmem:[%s0 + $0xc] sm:$0xf]
  %v51 = vld [vmem:[%s0 + $0x10] sm:$0xf]
  %v52 = vld [vmem:[%s0 + $0x14] sm:$0xf]
  %v53 = vld [vmem:[%s0 + $0x18] sm:$0xf]
  %v54 = vld [vmem:[%s0 + $0x1c] sm:$0xf]
  %v55 = vld [vmem:[%s0 + $0x20] sm:$0xf]
  %v56 = vld [vmem:[%s0 + $0x24] sm:$0xf]
  %v57 = vld [vmem:[%s0 + $0x28] sm:$0xf]
  %v58 = vld [vmem:[%s0 + $0x2c] sm:$0xf]
  %v59 = vld [vmem:[%s0 + $0x30] sm:$0xf]
  %v60 = vld [vmem:[%s0 + $0x34] sm:$0xf]
  %v61 = vld [vmem:[%s0 + $0x38] sm:$0xf]
  %v62 = vld [vmem:[%s0 + $0x3c] sm:$0xf]
  %v63 = vld [vmem:[%s3] sm:$0xf]
  %v64 = vld [vmem:[%s3 + $0x4] sm:$0xf]
  %v65 = vld [vmem:[%s3 + $0x8] sm:$0xf]
  %v66 = vld [vmem:[%s3 + $0xc] sm:$0xf]
  %v67 = vld [vmem:[%s3 + $0x10] sm:$0x3]
  %v84 = vunpack.c.l.b16 %v47
  %v85 = vunpack.c.l.b16 %v48
  %v86 = vunpack.c.l.b16 %v49
  %v87 = vunpack.c.l.b16 %v50
  %v88 = vunpack.c.l.b16 %v51
  %v89 = vunpack.c.l.b16 %v52
  %v90 = vunpack.c.l.b16 %v53
  %v91 = vunpack.c.l.b16 %v54
  %v92 = vunpack.c.l.b16 %v55
  %v93 = vunpack.c.l.b16 %v56
  %v94 = vunpack.c.l.b16 %v57
  %v95 = vunpack.c.l.b16 %v58
  %v96 = vunpack.c.l.b16 %v59
  %v97 = vunpack.c.l.b16 %v60
  %v98 = vunpack.c.l.b16 %v61
  %v99 = vunpack.c.l.b16 %v62
  %v100 = vpack.c.b16 %v85, %v84
  %v101 = vpack.c.b16 %v87, %v86
  %v102 = vpack.c.b16 %v89, %v88
  %v103 = vpack.c.b16 %v91, %v90
  %v104 = vpack.c.b16 %v93, %v92
  %v105 = vpack.c.b16 %v95, %v94
  %v106 = vpack.c.b16 %v97, %v96
  %v107 = vpack.c.b16 %v99, %v98
  %v113 = vunpack.c.l.b16 %v63
  %v114 = vunpack.c.l.b16 %v64
  %v115 = vunpack.c.l.b16 %v65
  %v116 = vunpack.c.l.b16 %v66
  %v117 = vunpack.c.l.b16 %v67
  %v118 = vpack.c.b16 %v114, %v113
  %v119 = vpack.c.b16 %v116, %v115
  %v120 = vpack.c.b16 %v117, %v117
  %vm123 = vcmask 293888
  %v125 = vsel %vm123, %v100, 0
  %v128 = vsel %vm123, %v101, 0
  %v131 = vsel %vm123, %v102, 0
  %v134 = vsel %vm123, %v103, 0
  %v137 = vsel %vm123, %v104, 0
  %v140 = vsel %vm123, %v105, 0
  %v143 = vsel %vm123, %v106, 0
  %v146 = vsel %vm123, %v107, 0
  %vm148 = vcmask 1041408
  %v150 = vsel %vm148, %v120, 0
  %152 = vmatprep.subr.bf16.mxu0 0
  %153 = vmatpush1.bf16.msra.mxu0 0
  %154 = vmatprep.subr.bf16.mxu0 0
  %155 = vmatpush1.bf16.msra.mxu0 0
  %156 = vmatprep.subr.bf16.mxu0 0
  %157 = vmatpush1.bf16.msra.mxu0 0
  %158 = vmatprep.subr.bf16.mxu0 0
  %159 = vmatpush1.bf16.msra.mxu0 0
  %160 = vmatprep.subr.bf16.mxu0 0
  %161 = vmatpush1.bf16.msra.mxu0 0
  %162 = vmatprep.subr.bf16.mxu0 0
  %163 = vmatpush1.bf16.msra.mxu0 %v150
  %164 = vmatprep.subr.bf16.mxu0 0
  %165 = vmatpush1.bf16.msra.mxu0 %v119
  %166 = vmatprep.subr.bf16.mxu0 0
  %167 = vmatpush1.bf16.msra.mxu0 %v118
  %168 = vmatprep.subr.bf16.mxu0 0
  %169 = vmatpush2.bf16.msra.mxu0 0
  %170 = vmatprep.subr.bf16.mxu0 0
  %171 = vmatpush2.bf16.msra.mxu0 0
  %172 = vmatprep.subr.bf16.mxu0 0
  %173 = vmatpush2.bf16.msra.mxu0 0
  %174 = vmatprep.subr.bf16.mxu0 0
  %175 = vmatpush2.bf16.msra.mxu0 0
  %176 = vmatprep.subr.bf16.mxu0 0
  %177 = vmatpush2.bf16.msra.mxu0 0
  %178 = vmatprep.subr.bf16.mxu0 0
  %179 = vmatpush2.bf16.msra.mxu0 0
  %180 = vmatprep.subr.bf16.mxu0 0
  %181 = vmatpush2.bf16.msra.mxu0 0
  %182 = vmatprep.subr.bf16.mxu0 0
  %183 = vmatpush2.bf16.msra.mxu0 0
  %184 = vmatprep.mubr.bf16.mxu0 0
  %185 = vmatmul.mubr.bf16.gmra.mxu0 %v125
  %v186 = vpop.f32.mrf.mxu0
  %v187 = vadd.f32 0.0, %v186
  %v188 = vpop.f32.mrf.mxu0
  %v189 = vpop.f32.mrf.mxu0
  %v190 = vadd.f32 0.0, %v189
  %v191 = vpop.f32.mrf.mxu0
  %192 = vmatprep.mubr.bf16.mxu0 0
  %193 = vmatmul.mubr.bf16.gmra.mxu0 %v128
  %v194 = vpop.f32.mrf.mxu0
  %v195 = vadd.f32 0.0, %v194
  %v196 = vpop.f32.mrf.mxu0
  %v197 = vpop.f32.mrf.mxu0
  %v198 = vadd.f32 0.0, %v197
  %v199 = vpop.f32.mrf.mxu0
  %200 = vmatprep.mubr.bf16.mxu0 0
  %201 = vmatmul.mubr.bf16.gmra.mxu0 %v131
  %v202 = vpop.f32.mrf.mxu0
  %v203 = vadd.f32 0.0, %v202
  %v204 = vpop.f32.mrf.mxu0
  %v205 = vpop.f32.mrf.mxu0
  %v206 = vadd.f32 0.0, %v205
  %v207 = vpop.f32.mrf.mxu0
  %208 = vmatprep.mubr.bf16.mxu0 0
  %209 = vmatmul.mubr.bf16.gmra.mxu0 %v134
  %v210 = vpop.f32.mrf.mxu0
  %v211 = vadd.f32 0.0, %v210
  %v212 = vpop.f32.mrf.mxu0
  %v213 = vpop.f32.mrf.mxu0
  %v214 = vadd.f32 0.0, %v213
  %v215 = vpop.f32.mrf.mxu0
  %216 = vmatprep.mubr.bf16.mxu0 0
  %217 = vmatmul.mubr.bf16.gmra.mxu0 %v137
  %v218 = vpop.f32.mrf.mxu0
  %v219 = vadd.f32 0.0, %v218
  %v220 = vpop.f32.mrf.mxu0
  %v221 = vpop.f32.mrf.mxu0
  %v222 = vadd.f32 0.0, %v221
  %v223 = vpop.f32.mrf.mxu0
  %224 = vmatprep.mubr.bf16.mxu0 0
  %225 = vmatmul.mubr.bf16.gmra.mxu0 %v140
  %v226 = vpop.f32.mrf.mxu0
  %v227 = vadd.f32 0.0, %v226
  %v228 = vpop.f32.mrf.mxu0
  %v229 = vpop.f32.mrf.mxu0
  %v230 = vadd.f32 0.0, %v229
  %v231 = vpop.f32.mrf.mxu0
  %232 = vmatprep.mubr.bf16.mxu0 0
  %233 = vmatmul.mubr.bf16.gmra.mxu0 %v143
  %v234 = vpop.f32.mrf.mxu0
  %v235 = vadd.f32 0.0, %v234
  %v236 = vpop.f32.mrf.mxu0
  %v237 = vpop.f32.mrf.mxu0
  %v238 = vadd.f32 0.0, %v237
  %v239 = vpop.f32.mrf.mxu0
  %240 = vmatprep.mubr.bf16.mxu0 0
  %241 = vmatmul.mubr.bf16.gmra.mxu0 %v146
  %v242 = vpop.f32.mrf.mxu0
  %v243 = vadd.f32 0.0, %v242
  %v244 = vpop.f32.mrf.mxu0
  %v245 = vpop.f32.mrf.mxu0
  %v246 = vadd.f32 0.0, %v245
  %v247 = vpop.f32.mrf.mxu0
  %248 = vdwg.mxu0
  %v249 = vld [vmem:[%s4] sm:$0x1]
  %v251 = vlaneseq
  %v252 = vshrl.u32 %v251, 7
  %v253 = vsub.s32 0, %v252
  %v254 = vrot.slane %v249, %v253
  %v256 = vmul.f32 %v187, %v254
  %v257 = vmul.f32 %v190, %v254
  %v258 = vmul.f32 %v195, %v254
  %v259 = vmul.f32 %v198, %v254
  %v260 = vmul.f32 %v203, %v254
  %v261 = vmul.f32 %v206, %v254
  %v262 = vmul.f32 %v211, %v254
  %v263 = vmul.f32 %v214, %v254
  %v264 = vmul.f32 %v219, %v254
  %v265 = vmul.f32 %v222, %v254
  %v266 = vmul.f32 %v227, %v254
  %v267 = vmul.f32 %v230, %v254
  %v268 = vmul.f32 %v235, %v254
  %v269 = vmul.f32 %v238, %v254
  %v270 = vmul.f32 %v243, %v254
  %v271 = vmul.f32 %v246, %v254
  %v272 = vld [vmem:[%s5] sm:$0x1]
  %v274 = vlaneseq
  %v275 = vshrl.u32 %v274, 7
  %v276 = vsub.s32 0, %v275
  %v277 = vrot.slane %v272, %v276
  %v279 = vadd.f32 %v256, %v277
  %v280 = vadd.f32 %v257, %v277
  %v281 = vadd.f32 %v258, %v277
  %v282 = vadd.f32 %v259, %v277
  %v283 = vadd.f32 %v260, %v277
  %v284 = vadd.f32 %v261, %v277
  %v285 = vadd.f32 %v262, %v277
  %v286 = vadd.f32 %v263, %v277
  %v287 = vadd.f32 %v264, %v277
  %v288 = vadd.f32 %v265, %v277
  %v289 = vadd.f32 %v266, %v277
  %v290 = vadd.f32 %v267, %v277
  %v291 = vadd.f32 %v268, %v277
  %v292 = vadd.f32 %v269, %v277
  %v293 = vadd.f32 %v270, %v277
  %v294 = vadd.f32 %v271, %v277
  %v295 = vmul.f32 %v279, 0.2
  %v296 = vmul.f32 %v280, 0.2
  %v297 = vmul.f32 %v281, 0.2
  %v298 = vmul.f32 %v282, 0.2
  %v299 = vmul.f32 %v283, 0.2
  %v300 = vmul.f32 %v284, 0.2
  %v301 = vmul.f32 %v285, 0.2
  %v302 = vmul.f32 %v286, 0.2
  %v303 = vmul.f32 %v287, 0.2
  %v304 = vmul.f32 %v288, 0.2
  %v305 = vmul.f32 %v289, 0.2
  %v306 = vmul.f32 %v290, 0.2
  %v307 = vmul.f32 %v291, 0.2
  %v308 = vmul.f32 %v292, 0.2
  %v309 = vmul.f32 %v293, 0.2
  %v310 = vmul.f32 %v294, 0.2
  %v311 = vmax.f32 %v279, %v295
  %v312 = vmax.f32 %v280, %v296
  %v313 = vmax.f32 %v281, %v297
  %v314 = vmax.f32 %v282, %v298
  %v315 = vmax.f32 %v283, %v299
  %v316 = vmax.f32 %v284, %v300
  %v317 = vmax.f32 %v285, %v301
  %v318 = vmax.f32 %v286, %v302
  %v319 = vmax.f32 %v287, %v303
  %v320 = vmax.f32 %v288, %v304
  %v321 = vmax.f32 %v289, %v305
  %v322 = vmax.f32 %v290, %v306
  %v323 = vmax.f32 %v291, %v307
  %v324 = vmax.f32 %v292, %v308
  %v325 = vmax.f32 %v293, %v309
  %v326 = vmax.f32 %v294, %v310
  %v327 = vpack.c.bf16 %v312, %v311
  %v328 = vpack.c.bf16 %v314, %v313
  %v329 = vpack.c.bf16 %v316, %v315
  %v330 = vpack.c.bf16 %v318, %v317
  %v331 = vpack.c.bf16 %v320, %v319
  %v332 = vpack.c.bf16 %v322, %v321
  %v333 = vpack.c.bf16 %v324, %v323
  %v334 = vpack.c.bf16 %v326, %v325
  %v335 = vld [vmem:[%s1] sm:$0xf]
  %v336 = vld [vmem:[%s1 + $0x4] sm:$0xf]
  %v337 = vld [vmem:[%s1 + $0x8] sm:$0xf]
  %v338 = vld [vmem:[%s1 + $0xc] sm:$0xf]
  %v339 = vld [vmem:[%s1 + $0x10] sm:$0xf]
  %v340 = vld [vmem:[%s1 + $0x14] sm:$0xf]
  %v341 = vld [vmem:[%s1 + $0x18] sm:$0xf]
  %v342 = vld [vmem:[%s1 + $0x1c] sm:$0xf]
  %v343 = vld [vmem:[%s1 + $0x20] sm:$0xf]
  %v344 = vld [vmem:[%s1 + $0x24] sm:$0xf]
  %v345 = vld [vmem:[%s1 + $0x28] sm:$0xf]
  %v346 = vld [vmem:[%s1 + $0x2c] sm:$0xf]
  %v347 = vld [vmem:[%s1 + $0x30] sm:$0xf]
  %v348 = vld [vmem:[%s1 + $0x34] sm:$0xf]
  %v349 = vld [vmem:[%s1 + $0x38] sm:$0xf]
  %v350 = vld [vmem:[%s1 + $0x3c] sm:$0xf]
  %v351 = vld [vmem:[%s9] sm:$0x3]
  %v368 = vunpack.c.l.b16 %v335
  %v369 = vunpack.c.l.b16 %v336
  %v370 = vunpack.c.l.b16 %v337
  %v371 = vunpack.c.l.b16 %v338
  %v372 = vunpack.c.l.b16 %v339
  %v373 = vunpack.c.l.b16 %v340
  %v374 = vunpack.c.l.b16 %v341
  %v375 = vunpack.c.l.b16 %v342
  %v376 = vunpack.c.l.b16 %v343
  %v377 = vunpack.c.l.b16 %v344
  %v378 = vunpack.c.l.b16 %v345
  %v379 = vunpack.c.l.b16 %v346
  %v380 = vunpack.c.l.b16 %v347
  %v381 = vunpack.c.l.b16 %v348
  %v382 = vunpack.c.l.b16 %v349
  %v383 = vunpack.c.l.b16 %v350
  %v384 = vpack.c.b16 %v369, %v368
  %v385 = vpack.c.b16 %v371, %v370
  %v386 = vpack.c.b16 %v373, %v372
  %v387 = vpack.c.b16 %v375, %v374
  %v388 = vpack.c.b16 %v377, %v376
  %v389 = vpack.c.b16 %v379, %v378
  %v390 = vpack.c.b16 %v381, %v380
  %v391 = vpack.c.b16 %v383, %v382
  %vm392 = vcmask 31744
  %v394 = vsel %vm392, %v384, 0
  %v397 = vsel %vm392, %v385, 0
  %v400 = vsel %vm392, %v386, 0
  %v403 = vsel %vm392, %v387, 0
  %v406 = vsel %vm392, %v388, 0
  %v409 = vsel %vm392, %v389, 0
  %v412 = vsel %vm392, %v390, 0
  %v415 = vsel %vm392, %v391, 0
  %v418 = vsel %vm148, %v351, 0
  %420 = vmatprep.subr.bf16.mxu0 0
  %421 = vmatpush1.bf16.msra.mxu0 0
  %422 = vmatprep.subr.bf16.mxu0 0
  %423 = vmatpush1.bf16.msra.mxu0 0
  %424 = vmatprep.subr.bf16.mxu0 0
  %425 = vmatpush1.bf16.msra.mxu0 0
  %426 = vmatprep.subr.bf16.mxu0 0
  %427 = vmatpush1.bf16.msra.mxu0 0
  %428 = vmatprep.subr.bf16.mxu0 0
  %429 = vmatpush1.bf16.msra.mxu0 0
  %430 = vmatprep.subr.bf16.mxu0 0
  %431 = vmatpush1.bf16.msra.mxu0 0
  %432 = vmatprep.subr.bf16.mxu0 0
  %433 = vmatpush1.bf16.msra.mxu0 0
  %434 = vmatprep.subr.bf16.mxu0 0
  %435 = vmatpush1.bf16.msra.mxu0 %v418
  %436 = vmatprep.subr.bf16.mxu0 0
  %437 = vmatpush2.bf16.msra.mxu0 0
  %438 = vmatprep.subr.bf16.mxu0 0
  %439 = vmatpush2.bf16.msra.mxu0 0
  %440 = vmatprep.subr.bf16.mxu0 0
  %441 = vmatpush2.bf16.msra.mxu0 0
  %442 = vmatprep.subr.bf16.mxu0 0
  %443 = vmatpush2.bf16.msra.mxu0 0
  %444 = vmatprep.subr.bf16.mxu0 0
  %445 = vmatpush2.bf16.msra.mxu0 0
  %446 = vmatprep.subr.bf16.mxu0 0
  %447 = vmatpush2.bf16.msra.mxu0 0
  %448 = vmatprep.subr.bf16.mxu0 0
  %449 = vmatpush2.bf16.msra.mxu0 0
  %450 = vmatprep.subr.bf16.mxu0 0
  %451 = vmatpush2.bf16.msra.mxu0 0
  %452 = vmatprep.mubr.bf16.mxu0 0
  %453 = vmatmul.mubr.bf16.gmra.mxu0 %v394
  %v454 = vpop.f32.mrf.mxu0
  %v455 = vadd.f32 0.0, %v454
  %v456 = vpop.f32.mrf.mxu0
  %v457 = vpop.f32.mrf.mxu0
  %v458 = vadd.f32 0.0, %v457
  %v459 = vpop.f32.mrf.mxu0
  %460 = vmatprep.mubr.bf16.mxu0 0
  %461 = vmatmul.mubr.bf16.gmra.mxu0 %v397
  %v462 = vpop.f32.mrf.mxu0
  %v463 = vadd.f32 0.0, %v462
  %v464 = vpop.f32.mrf.mxu0
  %v465 = vpop.f32.mrf.mxu0
  %v466 = vadd.f32 0.0, %v465
  %v467 = vpop.f32.mrf.mxu0
  %468 = vmatprep.mubr.bf16.mxu0 0
  %469 = vmatmul.mubr.bf16.gmra.mxu0 %v400
  %v470 = vpop.f32.mrf.mxu0
  %v471 = vadd.f32 0.0, %v470
  %v472 = vpop.f32.mrf.mxu0
  %v473 = vpop.f32.mrf.mxu0
  %v474 = vadd.f32 0.0, %v473
  %v475 = vpop.f32.mrf.mxu0
  %476 = vmatprep.mubr.bf16.mxu0 0
  %477 = vmatmul.mubr.bf16.gmra.mxu0 %v403
  %v478 = vpop.f32.mrf.mxu0
  %v479 = vadd.f32 0.0, %v478
  %v480 = vpop.f32.mrf.mxu0
  %v481 = vpop.f32.mrf.mxu0
  %v482 = vadd.f32 0.0, %v481
  %v483 = vpop.f32.mrf.mxu0
  %484 = vmatprep.mubr.bf16.mxu0 0
  %485 = vmatmul.mubr.bf16.gmra.mxu0 %v406
  %v486 = vpop.f32.mrf.mxu0
  %v487 = vadd.f32 0.0, %v486
  %v488 = vpop.f32.mrf.mxu0
  %v489 = vpop.f32.mrf.mxu0
  %v490 = vadd.f32 0.0, %v489
  %v491 = vpop.f32.mrf.mxu0
  %492 = vmatprep.mubr.bf16.mxu0 0
  %493 = vmatmul.mubr.bf16.gmra.mxu0 %v409
  %v494 = vpop.f32.mrf.mxu0
  %v495 = vadd.f32 0.0, %v494
  %v496 = vpop.f32.mrf.mxu0
  %v497 = vpop.f32.mrf.mxu0
  %v498 = vadd.f32 0.0, %v497
  %v499 = vpop.f32.mrf.mxu0
  %500 = vmatprep.mubr.bf16.mxu0 0
  %501 = vmatmul.mubr.bf16.gmra.mxu0 %v412
  %v502 = vpop.f32.mrf.mxu0
  %v503 = vadd.f32 0.0, %v502
  %v504 = vpop.f32.mrf.mxu0
  %v505 = vpop.f32.mrf.mxu0
  %v506 = vadd.f32 0.0, %v505
  %v507 = vpop.f32.mrf.mxu0
  %508 = vmatprep.mubr.bf16.mxu0 0
  %509 = vmatmul.mubr.bf16.gmra.mxu0 %v415
  %v510 = vpop.f32.mrf.mxu0
  %v511 = vadd.f32 0.0, %v510
  %v512 = vpop.f32.mrf.mxu0
  %v513 = vpop.f32.mrf.mxu0
  %v514 = vadd.f32 0.0, %v513
  %v515 = vpop.f32.mrf.mxu0
  %516 = vdwg.mxu0
  %v517 = vld [vmem:[%s10] sm:$0x1]
  %v519 = vlaneseq
  %v520 = vshrl.u32 %v519, 7
  %v521 = vsub.s32 0, %v520
  %v522 = vrot.slane %v517, %v521
  %v524 = vmul.f32 %v455, %v522
  %v525 = vmul.f32 %v458, %v522
  %v526 = vmul.f32 %v463, %v522
  %v527 = vmul.f32 %v466, %v522
  %v528 = vmul.f32 %v471, %v522
  %v529 = vmul.f32 %v474, %v522
  %v530 = vmul.f32 %v479, %v522
  %v531 = vmul.f32 %v482, %v522
  %v532 = vmul.f32 %v487, %v522
  %v533 = vmul.f32 %v490, %v522
  %v534 = vmul.f32 %v495, %v522
  %v535 = vmul.f32 %v498, %v522
  %v536 = vmul.f32 %v503, %v522
  %v537 = vmul.f32 %v506, %v522
  %v538 = vmul.f32 %v511, %v522
  %v539 = vmul.f32 %v514, %v522
  %v540 = vld [vmem:[%s11] sm:$0x1]
  %v542 = vlaneseq
  %v543 = vshrl.u32 %v542, 7
  %v544 = vsub.s32 0, %v543
  %v545 = vrot.slane %v540, %v544
  %v547 = vadd.f32 %v524, %v545
  %v548 = vadd.f32 %v525, %v545
  %v549 = vadd.f32 %v526, %v545
  %v550 = vadd.f32 %v527, %v545
  %v551 = vadd.f32 %v528, %v545
  %v552 = vadd.f32 %v529, %v545
  %v553 = vadd.f32 %v530, %v545
  %v554 = vadd.f32 %v531, %v545
  %v555 = vadd.f32 %v532, %v545
  %v556 = vadd.f32 %v533, %v545
  %v557 = vadd.f32 %v534, %v545
  %v558 = vadd.f32 %v535, %v545
  %v559 = vadd.f32 %v536, %v545
  %v560 = vadd.f32 %v537, %v545
  %v561 = vadd.f32 %v538, %v545
  %v562 = vadd.f32 %v539, %v545
  %v563 = vmul.f32 %v547, 0.2
  %v564 = vmul.f32 %v548, 0.2
  %v565 = vmul.f32 %v549, 0.2
  %v566 = vmul.f32 %v550, 0.2
  %v567 = vmul.f32 %v551, 0.2
  %v568 = vmul.f32 %v552, 0.2
  %v569 = vmul.f32 %v553, 0.2
  %v570 = vmul.f32 %v554, 0.2
  %v571 = vmul.f32 %v555, 0.2
  %v572 = vmul.f32 %v556, 0.2
  %v573 = vmul.f32 %v557, 0.2
  %v574 = vmul.f32 %v558, 0.2
  %v575 = vmul.f32 %v559, 0.2
  %v576 = vmul.f32 %v560, 0.2
  %v577 = vmul.f32 %v561, 0.2
  %v578 = vmul.f32 %v562, 0.2
  %v579 = vmax.f32 %v547, %v563
  %v580 = vmax.f32 %v548, %v564
  %v581 = vmax.f32 %v549, %v565
  %v582 = vmax.f32 %v550, %v566
  %v583 = vmax.f32 %v551, %v567
  %v584 = vmax.f32 %v552, %v568
  %v585 = vmax.f32 %v553, %v569
  %v586 = vmax.f32 %v554, %v570
  %v587 = vmax.f32 %v555, %v571
  %v588 = vmax.f32 %v556, %v572
  %v589 = vmax.f32 %v557, %v573
  %v590 = vmax.f32 %v558, %v574
  %v591 = vmax.f32 %v559, %v575
  %v592 = vmax.f32 %v560, %v576
  %v593 = vmax.f32 %v561, %v577
  %v594 = vmax.f32 %v562, %v578
  %v603 = vunpack.c.l.b16 %v327
  %v604 = vunpack.c.h.b16 %v327
  %v605 = vunpack.c.l.b16 %v328
  %v606 = vunpack.c.h.b16 %v328
  %v607 = vunpack.c.l.b16 %v329
  %v608 = vunpack.c.h.b16 %v329
  %v609 = vunpack.c.l.b16 %v330
  %v610 = vunpack.c.h.b16 %v330
  %v611 = vunpack.c.l.b16 %v331
  %v612 = vunpack.c.h.b16 %v331
  %v613 = vunpack.c.l.b16 %v332
  %v614 = vunpack.c.h.b16 %v332
  %v615 = vunpack.c.l.b16 %v333
  %v616 = vunpack.c.h.b16 %v333
  %v617 = vunpack.c.l.b16 %v334
  %v618 = vunpack.c.h.b16 %v334
  %v619 = vpack.c.b16 %v603, %v603
  %v620 = vpack.c.b16 %v604, %v604
  %v621 = vpack.c.b16 %v605, %v605
  %v622 = vpack.c.b16 %v606, %v606
  %v623 = vpack.c.b16 %v607, %v607
  %v624 = vpack.c.b16 %v608, %v608
  %v625 = vpack.c.b16 %v609, %v609
  %v626 = vpack.c.b16 %v610, %v610
  %v627 = vpack.c.b16 %v611, %v611
  %v628 = vpack.c.b16 %v612, %v612
  %v629 = vpack.c.b16 %v613, %v613
  %v630 = vpack.c.b16 %v614, %v614
  %v631 = vpack.c.b16 %v615, %v615
  %v632 = vpack.c.b16 %v616, %v616
  %v633 = vpack.c.b16 %v617, %v617
  %v634 = vpack.c.b16 %v618, %v618
  %651 = vst.msk [vmem:[#allocation2 + $0x8] sm:$0xf] %vm42, %v619
  %652 = vst.msk [vmem:[#allocation2 + $0xc] sm:$0xf] %vm42, %v620
  %653 = vst.msk [vmem:[#allocation2 + $0x10] sm:$0xf] %vm42, %v621
  %654 = vst.msk [vmem:[#allocation2 + $0x14] sm:$0xf] %vm42, %v622
  %655 = vst.msk [vmem:[#allocation2 + $0x18] sm:$0xf] %vm42, %v623
  %656 = vst.msk [vmem:[#allocation2 + $0x1c] sm:$0xf] %vm42, %v624
  %657 = vst.msk [vmem:[#allocation2 + $0x20] sm:$0xf] %vm42, %v625
  %658 = vst.msk [vmem:[#allocation2 + $0x24] sm:$0xf] %vm42, %v626
  %659 = vst.msk [vmem:[#allocation2 + $0x28] sm:$0xf] %vm42, %v627
  %660 = vst.msk [vmem:[#allocation2 + $0x2c] sm:$0xf] %vm42, %v628
  %661 = vst.msk [vmem:[#allocation2 + $0x30] sm:$0xf] %vm42, %v629
  %662 = vst.msk [vmem:[#allocation2 + $0x34] sm:$0xf] %vm42, %v630
  %663 = vst.msk [vmem:[#allocation2 + $0x38] sm:$0xf] %vm42, %v631
  %664 = vst.msk [vmem:[#allocation2 + $0x3c] sm:$0xf] %vm42, %v632
  %665 = vst.msk [vmem:[#allocation2 + $0x40] sm:$0xf] %vm42, %v633
  %666 = vst.msk [vmem:[#allocation2 + $0x44] sm:$0xf] %vm42, %v634
  %s667 = scalar_lea.vmem %s6, 16
  %v668 = vld [vmem:[%s667] sm:$0xf]
  %v669 = vld [vmem:[#allocation2] sm:$0x8]
  %v670 = vld [vmem:[#allocation2 + $0x4] sm:$0xf]
  %v671 = vld [vmem:[#allocation2 + $0x8] sm:$0xf]
  %v672 = vld [vmem:[#allocation2 + $0xc] sm:$0xf]
  %v673 = vld [vmem:[#allocation2 + $0x10] sm:$0xf]
  %v674 = vld [vmem:[#allocation2 + $0x14] sm:$0xf]
  %v675 = vld [vmem:[#allocation2 + $0x18] sm:$0xf]
  %v676 = vld [vmem:[#allocation2 + $0x1c] sm:$0xf]
  %v677 = vld [vmem:[#allocation2 + $0x20] sm:$0xf]
  %v678 = vld [vmem:[#allocation2 + $0x24] sm:$0xf]
  %v679 = vld [vmem:[#allocation2 + $0x28] sm:$0xf]
  %v680 = vld [vmem:[#allocation2 + $0x2c] sm:$0xf]
  %v681 = vld [vmem:[#allocation2 + $0x30] sm:$0xf]
  %v682 = vld [vmem:[#allocation2 + $0x34] sm:$0xf]
  %v683 = vld [vmem:[#allocation2 + $0x38] sm:$0xf]
  %v684 = vld [vmem:[#allocation2 + $0x3c] sm:$0xf]
  %v685 = vld [vmem:[#allocation2 + $0x40] sm:$0xf]
  %v686 = vld [vmem:[%s2] sm:$0xf]
  %v687 = vld [vmem:[%s2 + $0x4] sm:$0xf]
  %v688 = vld [vmem:[%s2 + $0x8] sm:$0xf]
  %v689 = vld [vmem:[%s2 + $0xc] sm:$0xf]
  %v690 = vld [vmem:[%s2 + $0x10] sm:$0xf]
  %v691 = vld [vmem:[%s2 + $0x14] sm:$0xf]
  %v692 = vld [vmem:[%s2 + $0x18] sm:$0xf]
  %v693 = vld [vmem:[%s2 + $0x1c] sm:$0xf]
  %v694 = vld [vmem:[%s2 + $0x20] sm:$0xf]
  %v695 = vld [vmem:[%s2 + $0x24] sm:$0xf]
  %v696 = vld [vmem:[%s2 + $0x28] sm:$0xf]
  %v697 = vld [vmem:[%s2 + $0x2c] sm:$0xf]
  %v698 = vld [vmem:[%s2 + $0x30] sm:$0xf]
  %v699 = vld [vmem:[%s2 + $0x34] sm:$0xf]
  %v700 = vld [vmem:[%s2 + $0x38] sm:$0xf]
  %v701 = vld [vmem:[%s2 + $0x3c] sm:$0xf]
  %703 = vset.pattern.permute.xlu0 0
  %704 = vperm.xlu0 %703, %v686
  %v705 = vpop.permute.xlu0 %704
  %v708 = vunpack.c.l.s4 839922192
  %v709 = vunpack.c.0.s8 %v708
  %v710 = vlaneseq
  %v711 = vshrl.u32 %v710, 7
  %v712 = vsub.s32 %v709, %v711
  %v713 = vrot.slane %v705, %v712
  %715 = vset.pattern.permute.xlu0 0
  %716 = vperm.xlu0 %715, %v687
  %v717 = vpop.permute.xlu0 %716
  %v720 = vunpack.c.l.s4 839922192
  %v721 = vunpack.c.0.s8 %v720
  %v722 = vlaneseq
  %v723 = vshrl.u32 %v722, 7
  %v724 = vsub.s32 %v721, %v723
  %v725 = vrot.slane %v717, %v724
  %727 = vset.pattern.permute.xlu0 0
  %728 = vperm.xlu0 %727, %v688
  %v729 = vpop.permute.xlu0 %728
  %v732 = vunpack.c.l.s4 839922192
  %v733 = vunpack.c.0.s8 %v732
  %v734 = vlaneseq
  %v735 = vshrl.u32 %v734, 7
  %v736 = vsub.s32 %v733, %v735
  %v737 = vrot.slane %v729, %v736
  %739 = vset.pattern.permute.xlu0 0
  %740 = vperm.xlu0 %739, %v689
  %v741 = vpop.permute.xlu0 %740
  %v744 = vunpack.c.l.s4 839922192
  %v745 = vunpack.c.0.s8 %v744
  %v746 = vlaneseq
  %v747 = vshrl.u32 %v746, 7
  %v748 = vsub.s32 %v745, %v747
  %v749 = vrot.slane %v741, %v748
  %751 = vset.pattern.permute.xlu0 0
  %752 = vperm.xlu0 %751, %v690
  %v753 = vpop.permute.xlu0 %752
  %v756 = vunpack.c.l.s4 839922192
  %v757 = vunpack.c.0.s8 %v756
  %v758 = vlaneseq
  %v759 = vshrl.u32 %v758, 7
  %v760 = vsub.s32 %v757, %v759
  %v761 = vrot.slane %v753, %v760
  %763 = vset.pattern.permute.xlu0 0
  %764 = vperm.xlu0 %763, %v691
  %v765 = vpop.permute.xlu0 %764
  %v768 = vunpack.c.l.s4 839922192
  %v769 = vunpack.c.0.s8 %v768
  %v770 = vlaneseq
  %v771 = vshrl.u32 %v770, 7
  %v772 = vsub.s32 %v769, %v771
  %v773 = vrot.slane %v765, %v772
  %775 = vset.pattern.permute.xlu0 0
  %776 = vperm.xlu0 %775, %v692
  %v777 = vpop.permute.xlu0 %776
  %v780 = vunpack.c.l.s4 839922192
  %v781 = vunpack.c.0.s8 %v780
  %v782 = vlaneseq
  %v783 = vshrl.u32 %v782, 7
  %v784 = vsub.s32 %v781, %v783
  %v785 = vrot.slane %v777, %v784
  %787 = vset.pattern.permute.xlu0 0
  %788 = vperm.xlu0 %787, %v693
  %v789 = vpop.permute.xlu0 %788
  %v792 = vunpack.c.l.s4 839922192
  %v793 = vunpack.c.0.s8 %v792
  %v794 = vlaneseq
  %v795 = vshrl.u32 %v794, 7
  %v796 = vsub.s32 %v793, %v795
  %v797 = vrot.slane %v789, %v796
  %799 = vset.pattern.permute.xlu0 0
  %800 = vperm.xlu0 %799, %v694
  %v801 = vpop.permute.xlu0 %800
  %v804 = vunpack.c.l.s4 839922192
  %v805 = vunpack.c.0.s8 %v804
  %v806 = vlaneseq
  %v807 = vshrl.u32 %v806, 7
  %v808 = vsub.s32 %v805, %v807
  %v809 = vrot.slane %v801, %v808
  %811 = vset.pattern.permute.xlu0 0
  %812 = vperm.xlu0 %811, %v695
  %v813 = vpop.permute.xlu0 %812
  %v816 = vunpack.c.l.s4 839922192
  %v817 = vunpack.c.0.s8 %v816
  %v818 = vlaneseq
  %v819 = vshrl.u32 %v818, 7
  %v820 = vsub.s32 %v817, %v819
  %v821 = vrot.slane %v813, %v820
  %823 = vset.pattern.permute.xlu0 0
  %824 = vperm.xlu0 %823, %v696
  %v825 = vpop.permute.xlu0 %824
  %v828 = vunpack.c.l.s4 839922192
  %v829 = vunpack.c.0.s8 %v828
  %v830 = vlaneseq
  %v831 = vshrl.u32 %v830, 7
  %v832 = vsub.s32 %v829, %v831
  %v833 = vrot.slane %v825, %v832
  %835 = vset.pattern.permute.xlu0 0
  %836 = vperm.xlu0 %835, %v697
  %v837 = vpop.permute.xlu0 %836
  %v840 = vunpack.c.l.s4 839922192
  %v841 = vunpack.c.0.s8 %v840
  %v842 = vlaneseq
  %v843 = vshrl.u32 %v842, 7
  %v844 = vsub.s32 %v841, %v843
  %v845 = vrot.slane %v837, %v844
  %847 = vset.pattern.permute.xlu0 0
  %848 = vperm.xlu0 %847, %v698
  %v849 = vpop.permute.xlu0 %848
  %v852 = vunpack.c.l.s4 839922192
  %v853 = vunpack.c.0.s8 %v852
  %v854 = vlaneseq
  %v855 = vshrl.u32 %v854, 7
  %v856 = vsub.s32 %v853, %v855
  %v857 = vrot.slane %v849, %v856
  %859 = vset.pattern.permute.xlu0 0
  %860 = vperm.xlu0 %859, %v699
  %v861 = vpop.permute.xlu0 %860
  %v864 = vunpack.c.l.s4 839922192
  %v865 = vunpack.c.0.s8 %v864
  %v866 = vlaneseq
  %v867 = vshrl.u32 %v866, 7
  %v868 = vsub.s32 %v865, %v867
  %v869 = vrot.slane %v861, %v868
  %871 = vset.pattern.permute.xlu0 0
  %872 = vperm.xlu0 %871, %v700
  %v873 = vpop.permute.xlu0 %872
  %v876 = vunpack.c.l.s4 839922192
  %v877 = vunpack.c.0.s8 %v876
  %v878 = vlaneseq
  %v879 = vshrl.u32 %v878, 7
  %v880 = vsub.s32 %v877, %v879
  %v881 = vrot.slane %v873, %v880
  %883 = vset.pattern.permute.xlu0 0
  %884 = vperm.xlu0 %883, %v701
  %v885 = vpop.permute.xlu0 %884
  %v888 = vunpack.c.l.s4 839922192
  %v889 = vunpack.c.0.s8 %v888
  %v890 = vlaneseq
  %v891 = vshrl.u32 %v890, 7
  %v892 = vsub.s32 %v889, %v891
  %v893 = vrot.slane %v885, %v892
  %vm894 = vsmask.f32 3328
  %vm895 = vsmask.f32 7440
  %vm896 = vmor %vm894, %vm895
  %v898 = vshll.u32 %v713, 16
  %v900 = vrot.slane %v898, 5
  %v901 = vshrl.u32 %v713, 16
  %v903 = vrot.slane %v901, 4
  %v904 = vor.u32 %v903, %v900
  %v905 = vrot.slane %v904, 4
  %v907 = vshll.u32 %v725, 16
  %v909 = vrot.slane %v907, 5
  %v910 = vsel %vm896, %v905, %v909
  %v911 = vshrl.u32 %v725, 16
  %v913 = vrot.slane %v911, 4
  %v914 = vor.u32 %v913, %v909
  %v915 = vrot.slane %v914, 4
  %v917 = vshll.u32 %v737, 16
  %v919 = vrot.slane %v917, 5
  %v920 = vsel %vm896, %v915, %v919
  %v921 = vshrl.u32 %v737, 16
  %v923 = vrot.slane %v921, 4
  %v924 = vor.u32 %v923, %v919
  %v925 = vrot.slane %v924, 4
  %v927 = vshll.u32 %v749, 16
  %v929 = vrot.slane %v927, 5
  %v930 = vsel %vm896, %v925, %v929
  %v931 = vshrl.u32 %v749, 16
  %v933 = vrot.slane %v931, 4
  %v934 = vor.u32 %v933, %v929
  %v935 = vrot.slane %v934, 4
  %v937 = vshll.u32 %v761, 16
  %v939 = vrot.slane %v937, 5
  %v940 = vsel %vm896, %v935, %v939
  %v941 = vshrl.u32 %v761, 16
  %v943 = vrot.slane %v941, 4
  %v944 = vor.u32 %v943, %v939
  %v945 = vrot.slane %v944, 4
  %v947 = vshll.u32 %v773, 16
  %v949 = vrot.slane %v947, 5
  %v950 = vsel %vm896, %v945, %v949
  %v951 = vshrl.u32 %v773, 16
  %v953 = vrot.slane %v951, 4
  %v954 = vor.u32 %v953, %v949
  %v955 = vrot.slane %v954, 4
  %v957 = vshll.u32 %v785, 16
  %v959 = vrot.slane %v957, 5
  %v960 = vsel %vm896, %v955, %v959
  %v961 = vshrl.u32 %v785, 16
  %v963 = vrot.slane %v961, 4
  %v964 = vor.u32 %v963, %v959
  %v965 = vrot.slane %v964, 4
  %v967 = vshll.u32 %v797, 16
  %v969 = vrot.slane %v967, 5
  %v970 = vsel %vm896, %v965, %v969
  %v971 = vshrl.u32 %v797, 16
  %v973 = vrot.slane %v971, 4
  %v974 = vor.u32 %v973, %v969
  %v975 = vrot.slane %v974, 4
  %v977 = vshll.u32 %v809, 16
  %v979 = vrot.slane %v977, 5
  %v980 = vsel %vm896, %v975, %v979
  %v981 = vshrl.u32 %v809, 16
  %v983 = vrot.slane %v981, 4
  %v984 = vor.u32 %v983, %v979
  %v985 = vrot.slane %v984, 4
  %v987 = vshll.u32 %v821, 16
  %v989 = vrot.slane %v987, 5
  %v990 = vsel %vm896, %v985, %v989
  %v991 = vshrl.u32 %v821, 16
  %v993 = vrot.slane %v991, 4
  %v994 = vor.u32 %v993, %v989
  %v995 = vrot.slane %v994, 4
  %v997 = vshll.u32 %v833, 16
  %v999 = vrot.slane %v997, 5
  %v1000 = vsel %vm896, %v995, %v999
  %v1001 = vshrl.u32 %v833, 16
  %v1003 = vrot.slane %v1001, 4
  %v1004 = vor.u32 %v1003, %v999
  %v1005 = vrot.slane %v1004, 4
  %v1007 = vshll.u32 %v845, 16
  %v1009 = vrot.slane %v1007, 5
  %v1010 = vsel %vm896, %v1005, %v1009
  %v1011 = vshrl.u32 %v845, 16
  %v1013 = vrot.slane %v1011, 4
  %v1014 = vor.u32 %v1013, %v1009
  %v1015 = vrot.slane %v1014, 4
  %v1017 = vshll.u32 %v857, 16
  %v1019 = vrot.slane %v1017, 5
  %v1020 = vsel %vm896, %v1015, %v1019
  %v1021 = vshrl.u32 %v857, 16
  %v1023 = vrot.slane %v1021, 4
  %v1024 = vor.u32 %v1023, %v1019
  %v1025 = vrot.slane %v1024, 4
  %v1027 = vshll.u32 %v869, 16
  %v1029 = vrot.slane %v1027, 5
  %v1030 = vsel %vm896, %v1025, %v1029
  %v1031 = vshrl.u32 %v869, 16
  %v1033 = vrot.slane %v1031, 4
  %v1034 = vor.u32 %v1033, %v1029
  %v1035 = vrot.slane %v1034, 4
  %v1037 = vshll.u32 %v881, 16
  %v1039 = vrot.slane %v1037, 5
  %v1040 = vsel %vm896, %v1035, %v1039
  %v1041 = vshrl.u32 %v881, 16
  %v1043 = vrot.slane %v1041, 4
  %v1044 = vor.u32 %v1043, %v1039
  %v1045 = vrot.slane %v1044, 4
  %v1047 = vshll.u32 %v893, 16
  %v1049 = vrot.slane %v1047, 5
  %v1050 = vsel %vm896, %v1045, %v1049
  %v1051 = vshrl.u32 %v893, 16
  %v1053 = vrot.slane %v1051, 4
  %v1054 = vor.u32 %v1053, %v1049
  %v1055 = vrot.slane %v1054, 4
  %v1073 = vmul.bf16 %v669, %v900
  %v1074 = vmul.bf16 %v670, %v910
  %v1075 = vmul.bf16 %v671, %v920
  %v1076 = vmul.bf16 %v672, %v930
  %v1077 = vmul.bf16 %v673, %v940
  %v1078 = vmul.bf16 %v674, %v950
  %v1079 = vmul.bf16 %v675, %v960
  %v1080 = vmul.bf16 %v676, %v970
  %v1081 = vmul.bf16 %v677, %v980
  %v1082 = vmul.bf16 %v678, %v990
  %v1083 = vmul.bf16 %v679, %v1000
  %v1084 = vmul.bf16 %v680, %v1010
  %v1085 = vmul.bf16 %v681, %v1020
  %v1086 = vmul.bf16 %v682, %v1030
  %v1087 = vmul.bf16 %v683, %v1040
  %v1088 = vmul.bf16 %v684, %v1050
  %v1089 = vmul.bf16 %v685, %v1055
  %v1090 = vld [vmem:[%s6] sm:$0xf]
  %v1108 = vunpack.c.l.b16 %v1073
  %v1109 = vunpack.c.l.b16 %v1074
  %v1110 = vunpack.c.l.b16 %v1075
  %v1111 = vunpack.c.l.b16 %v1076
  %v1112 = vunpack.c.l.b16 %v1077
  %v1113 = vunpack.c.l.b16 %v1078
  %v1114 = vunpack.c.l.b16 %v1079
  %v1115 = vunpack.c.l.b16 %v1080
  %v1116 = vunpack.c.l.b16 %v1081
  %v1117 = vunpack.c.l.b16 %v1082
  %v1118 = vunpack.c.l.b16 %v1083
  %v1119 = vunpack.c.l.b16 %v1084
  %v1120 = vunpack.c.l.b16 %v1085
  %v1121 = vunpack.c.l.b16 %v1086
  %v1122 = vunpack.c.l.b16 %v1087
  %v1123 = vunpack.c.l.b16 %v1088
  %v1124 = vunpack.c.l.b16 %v1089
  %v1125 = vpack.c.b16 %v1109, %v1108
  %v1126 = vpack.c.b16 %v1111, %v1110
  %v1127 = vpack.c.b16 %v1113, %v1112
  %v1128 = vpack.c.b16 %v1115, %v1114
  %v1129 = vpack.c.b16 %v1117, %v1116
  %v1130 = vpack.c.b16 %v1119, %v1118
  %v1131 = vpack.c.b16 %v1121, %v1120
  %v1132 = vpack.c.b16 %v1123, %v1122
  %v1133 = vpack.c.b16 %v1124, %v1124
  %vm1134 = vsmask.f32 4352
  %v1136 = vshrl.u32 %v1125, 16
  %v1138 = vrot.slane %v1136, 3
  %v1139 = vshll.u32 %v1125, 16
  %v1141 = vrot.slane %v1139, 4
  %v1142 = vor.u32 %v1138, %v1141
  %v1144 = vshrl.u32 %v1126, 16
  %v1146 = vrot.slane %v1144, 3
  %v1147 = vshll.u32 %v1126, 16
  %v1149 = vrot.slane %v1147, 4
  %v1150 = vor.u32 %v1146, %v1149
  %v1151 = vsel %vm1134, %v1142, %v1150
  %v1153 = vshrl.u32 %v1127, 16
  %v1155 = vrot.slane %v1153, 3
  %v1156 = vshll.u32 %v1127, 16
  %v1158 = vrot.slane %v1156, 4
  %v1159 = vor.u32 %v1155, %v1158
  %v1160 = vsel %vm1134, %v1150, %v1159
  %v1162 = vshrl.u32 %v1128, 16
  %v1164 = vrot.slane %v1162, 3
  %v1165 = vshll.u32 %v1128, 16
  %v1167 = vrot.slane %v1165, 4
  %v1168 = vor.u32 %v1164, %v1167
  %v1169 = vsel %vm1134, %v1159, %v1168
  %v1171 = vshrl.u32 %v1129, 16
  %v1173 = vrot.slane %v1171, 3
  %v1174 = vshll.u32 %v1129, 16
  %v1176 = vrot.slane %v1174, 4
  %v1177 = vor.u32 %v1173, %v1176
  %v1178 = vsel %vm1134, %v1168, %v1177
  %v1180 = vshrl.u32 %v1130, 16
  %v1182 = vrot.slane %v1180, 3
  %v1183 = vshll.u32 %v1130, 16
  %v1185 = vrot.slane %v1183, 4
  %v1186 = vor.u32 %v1182, %v1185
  %v1187 = vsel %vm1134, %v1177, %v1186
  %v1189 = vshrl.u32 %v1131, 16
  %v1191 = vrot.slane %v1189, 3
  %v1192 = vshll.u32 %v1131, 16
  %v1194 = vrot.slane %v1192, 4
  %v1195 = vor.u32 %v1191, %v1194
  %v1196 = vsel %vm1134, %v1186, %v1195
  %v1198 = vshrl.u32 %v1132, 16
  %v1200 = vrot.slane %v1198, 3
  %v1201 = vshll.u32 %v1132, 16
  %v1203 = vrot.slane %v1201, 4
  %v1204 = vor.u32 %v1200, %v1203
  %v1205 = vsel %vm1134, %v1195, %v1204
  %v1207 = vshrl.u32 %v1133, 16
  %v1209 = vrot.slane %v1207, 3
  %v1210 = vshll.u32 %v1133, 16
  %v1212 = vrot.slane %v1210, 4
  %v1213 = vor.u32 %v1209, %v1212
  %v1214 = vsel %vm1134, %v1204, %v1213
  %vm1215 = vcmask 64512
  %v1217 = vsel %vm1215, %v1151, 0
  %v1220 = vsel %vm1215, %v1160, 0
  %v1223 = vsel %vm1215, %v1169, 0
  %v1226 = vsel %vm1215, %v1178, 0
  %v1229 = vsel %vm1215, %v1187, 0
  %v1232 = vsel %vm1215, %v1196, 0
  %v1235 = vsel %vm1215, %v1205, 0
  %v1238 = vsel %vm1215, %v1214, 0
  %vm1240 = vcmask 1043456
  %v1242 = vsel %vm1240, %v1090, 0
  %1244 = vmatprep.subr.bf16.mxu0 0
  %1245 = vmatpush1.bf16.msra.mxu0 0
  %1246 = vmatprep.subr.bf16.mxu0 0
  %1247 = vmatpush1.bf16.msra.mxu0 0
  %1248 = vmatprep.subr.bf16.mxu0 0
  %1249 = vmatpush1.bf16.msra.mxu0 0
  %1250 = vmatprep.subr.bf16.mxu0 0
  %1251 = vmatpush1.bf16.msra.mxu0 0
  %1252 = vmatprep.subr.bf16.mxu0 0
  %1253 = vmatpush1.bf16.msra.mxu0 0
  %1254 = vmatprep.subr.bf16.mxu0 0
  %1255 = vmatpush1.bf16.msra.mxu0 0
  %1256 = vmatprep.subr.bf16.mxu0 0
  %1257 = vmatpush1.bf16.msra.mxu0 0
  %1258 = vmatprep.subr.bf16.mxu0 0
  %1259 = vmatpush1.bf16.msra.mxu0 %v1242
  %1260 = vmatprep.subr.bf16.mxu0 0
  %1261 = vmatpush2.bf16.msra.mxu0 0
  %1262 = vmatprep.subr.bf16.mxu0 0
  %1263 = vmatpush2.bf16.msra.mxu0 0
  %1264 = vmatprep.subr.bf16.mxu0 0
  %1265 = vmatpush2.bf16.msra.mxu0 0
  %1266 = vmatprep.subr.bf16.mxu0 0
  %1267 = vmatpush2.bf16.msra.mxu0 0
  %1268 = vmatprep.subr.bf16.mxu0 0
  %1269 = vmatpush2.bf16.msra.mxu0 0
  %1270 = vmatprep.subr.bf16.mxu0 0
  %1271 = vmatpush2.bf16.msra.mxu0 0
  %1272 = vmatprep.subr.bf16.mxu0 0
  %1273 = vmatpush2.bf16.msra.mxu0 0
  %1274 = vmatprep.subr.bf16.mxu0 0
  %1275 = vmatpush2.bf16.msra.mxu0 0
  %1276 = vmatprep.mubr.bf16.mxu0 0
  %1277 = vmatmul.mubr.bf16.gmra.mxu0 %v1217
  %v1278 = vpop.f32.mrf.mxu0
  %v1279 = vadd.f32 0.0, %v1278
  %v1280 = vpop.f32.mrf.mxu0
  %v1281 = vpop.f32.mrf.mxu0
  %v1282 = vadd.f32 0.0, %v1281
  %v1283 = vpop.f32.mrf.mxu0
  %1284 = vmatprep.mubr.bf16.mxu0 0
  %1285 = vmatmul.mubr.bf16.gmra.mxu0 %v1220
  %v1286 = vpop.f32.mrf.mxu0
  %v1287 = vadd.f32 0.0, %v1286
  %v1288 = vpop.f32.mrf.mxu0
  %v1289 = vpop.f32.mrf.mxu0
  %v1290 = vadd.f32 0.0, %v1289
  %v1291 = vpop.f32.mrf.mxu0
  %1292 = vmatprep.mubr.bf16.mxu0 0
  %1293 = vmatmul.mubr.bf16.gmra.mxu0 %v1223
  %v1294 = vpop.f32.mrf.mxu0
  %v1295 = vadd.f32 0.0, %v1294
  %v1296 = vpop.f32.mrf.mxu0
  %v1297 = vpop.f32.mrf.mxu0
  %v1298 = vadd.f32 0.0, %v1297
  %v1299 = vpop.f32.mrf.mxu0
  %1300 = vmatprep.mubr.bf16.mxu0 0
  %1301 = vmatmul.mubr.bf16.gmra.mxu0 %v1226
  %v1302 = vpop.f32.mrf.mxu0
  %v1303 = vadd.f32 0.0, %v1302
  %v1304 = vpop.f32.mrf.mxu0
  %v1305 = vpop.f32.mrf.mxu0
  %v1306 = vadd.f32 0.0, %v1305
  %v1307 = vpop.f32.mrf.mxu0
  %1308 = vmatprep.mubr.bf16.mxu0 0
  %1309 = vmatmul.mubr.bf16.gmra.mxu0 %v1229
  %v1310 = vpop.f32.mrf.mxu0
  %v1311 = vadd.f32 0.0, %v1310
  %v1312 = vpop.f32.mrf.mxu0
  %v1313 = vpop.f32.mrf.mxu0
  %v1314 = vadd.f32 0.0, %v1313
  %v1315 = vpop.f32.mrf.mxu0
  %1316 = vmatprep.mubr.bf16.mxu0 0
  %1317 = vmatmul.mubr.bf16.gmra.mxu0 %v1232
  %v1318 = vpop.f32.mrf.mxu0
  %v1319 = vadd.f32 0.0, %v1318
  %v1320 = vpop.f32.mrf.mxu0
  %v1321 = vpop.f32.mrf.mxu0
  %v1322 = vadd.f32 0.0, %v1321
  %v1323 = vpop.f32.mrf.mxu0
  %1324 = vmatprep.mubr.bf16.mxu0 0
  %1325 = vmatmul.mubr.bf16.gmra.mxu0 %v1235
  %v1326 = vpop.f32.mrf.mxu0
  %v1327 = vadd.f32 0.0, %v1326
  %v1328 = vpop.f32.mrf.mxu0
  %v1329 = vpop.f32.mrf.mxu0
  %v1330 = vadd.f32 0.0, %v1329
  %v1331 = vpop.f32.mrf.mxu0
  %1332 = vmatprep.mubr.bf16.mxu0 0
  %1333 = vmatmul.mubr.bf16.gmra.mxu0 %v1238
  %v1334 = vpop.f32.mrf.mxu0
  %v1335 = vadd.f32 0.0, %v1334
  %v1336 = vpop.f32.mrf.mxu0
  %v1337 = vpop.f32.mrf.mxu0
  %v1338 = vadd.f32 0.0, %v1337
  %v1339 = vpop.f32.mrf.mxu0
  %1340 = vdwg.mxu0
  %v1342 = vsel %vm1215, %v327, 0
  %v1345 = vsel %vm1215, %v328, 0
  %v1348 = vsel %vm1215, %v329, 0
  %v1351 = vsel %vm1215, %v330, 0
  %v1354 = vsel %vm1215, %v331, 0
  %v1357 = vsel %vm1215, %v332, 0
  %v1360 = vsel %vm1215, %v333, 0
  %v1363 = vsel %vm1215, %v334, 0
  %v1366 = vsel %vm1240, %v668, 0
  %1368 = vmatprep.subr.bf16.mxu0 0
  %1369 = vmatpush1.bf16.msra.mxu0 0
  %1370 = vmatprep.subr.bf16.mxu0 0
  %1371 = vmatpush1.bf16.msra.mxu0 0
  %1372 = vmatprep.subr.bf16.mxu0 0
  %1373 = vmatpush1.bf16.msra.mxu0 0
  %1374 = vmatprep.subr.bf16.mxu0 0
  %1375 = vmatpush1.bf16.msra.mxu0 0
  %1376 = vmatprep.subr.bf16.mxu0 0
  %1377 = vmatpush1.bf16.msra.mxu0 0
  %1378 = vmatprep.subr.bf16.mxu0 0
  %1379 = vmatpush1.bf16.msra.mxu0 0
  %1380 = vmatprep.subr.bf16.mxu0 0
  %1381 = vmatpush1.bf16.msra.mxu0 0
  %1382 = vmatprep.subr.bf16.mxu0 0
  %1383 = vmatpush1.bf16.msra.mxu0 %v1366
  %1384 = vmatprep.subr.bf16.mxu0 0
  %1385 = vmatpush2.bf16.msra.mxu0 0
  %1386 = vmatprep.subr.bf16.mxu0 0
  %1387 = vmatpush2.bf16.msra.mxu0 0
  %1388 = vmatprep.subr.bf16.mxu0 0
  %1389 = vmatpush2.bf16.msra.mxu0 0
  %1390 = vmatprep.subr.bf16.mxu0 0
  %1391 = vmatpush2.bf16.msra.mxu0 0
  %1392 = vmatprep.subr.bf16.mxu0 0
  %1393 = vmatpush2.bf16.msra.mxu0 0
  %1394 = vmatprep.subr.bf16.mxu0 0
  %1395 = vmatpush2.bf16.msra.mxu0 0
  %1396 = vmatprep.subr.bf16.mxu0 0
  %1397 = vmatpush2.bf16.msra.mxu0 0
  %1398 = vmatprep.subr.bf16.mxu0 0
  %1399 = vmatpush2.bf16.msra.mxu0 0
  %1400 = vmatprep.mubr.bf16.mxu0 0
  %1401 = vmatmul.mubr.bf16.gmra.mxu0 %v1342
  %v1402 = vpop.f32.mrf.mxu0
  %v1403 = vadd.f32 %v1279, %v1402
  %v1404 = vpop.f32.mrf.mxu0
  %v1405 = vpop.f32.mrf.mxu0
  %v1406 = vadd.f32 %v1282, %v1405
  %v1407 = vpop.f32.mrf.mxu0
  %1408 = vmatprep.mubr.bf16.mxu0 0
  %1409 = vmatmul.mubr.bf16.gmra.mxu0 %v1345
  %v1410 = vpop.f32.mrf.mxu0
  %v1411 = vadd.f32 %v1287, %v1410
  %v1412 = vpop.f32.mrf.mxu0
  %v1413 = vpop.f32.mrf.mxu0
  %v1414 = vadd.f32 %v1290, %v1413
  %v1415 = vpop.f32.mrf.mxu0
  %1416 = vmatprep.mubr.bf16.mxu0 0
  %1417 = vmatmul.mubr.bf16.gmra.mxu0 %v1348
  %v1418 = vpop.f32.mrf.mxu0
  %v1419 = vadd.f32 %v1295, %v1418
  %v1420 = vpop.f32.mrf.mxu0
  %v1421 = vpop.f32.mrf.mxu0
  %v1422 = vadd.f32 %v1298, %v1421
  %v1423 = vpop.f32.mrf.mxu0
  %1424 = vmatprep.mubr.bf16.mxu0 0
  %1425 = vmatmul.mubr.bf16.gmra.mxu0 %v1351
  %v1426 = vpop.f32.mrf.mxu0
  %v1427 = vadd.f32 %v1303, %v1426
  %v1428 = vpop.f32.mrf.mxu0
  %v1429 = vpop.f32.mrf.mxu0
  %v1430 = vadd.f32 %v1306, %v1429
  %v1431 = vpop.f32.mrf.mxu0
  %1432 = vmatprep.mubr.bf16.mxu0 0
  %1433 = vmatmul.mubr.bf16.gmra.mxu0 %v1354
  %v1434 = vpop.f32.mrf.mxu0
  %v1435 = vadd.f32 %v1311, %v1434
  %v1436 = vpop.f32.mrf.mxu0
  %v1437 = vpop.f32.mrf.mxu0
  %v1438 = vadd.f32 %v1314, %v1437
  %v1439 = vpop.f32.mrf.mxu0
  %1440 = vmatprep.mubr.bf16.mxu0 0
  %1441 = vmatmul.mubr.bf16.gmra.mxu0 %v1357
  %v1442 = vpop.f32.mrf.mxu0
  %v1443 = vadd.f32 %v1319, %v1442
  %v1444 = vpop.f32.mrf.mxu0
  %v1445 = vpop.f32.mrf.mxu0
  %v1446 = vadd.f32 %v1322, %v1445
  %v1447 = vpop.f32.mrf.mxu0
  %1448 = vmatprep.mubr.bf16.mxu0 0
  %1449 = vmatmul.mubr.bf16.gmra.mxu0 %v1360
  %v1450 = vpop.f32.mrf.mxu0
  %v1451 = vadd.f32 %v1327, %v1450
  %v1452 = vpop.f32.mrf.mxu0
  %v1453 = vpop.f32.mrf.mxu0
  %v1454 = vadd.f32 %v1330, %v1453
  %v1455 = vpop.f32.mrf.mxu0
  %1456 = vmatprep.mubr.bf16.mxu0 0
  %1457 = vmatmul.mubr.bf16.gmra.mxu0 %v1363
  %v1458 = vpop.f32.mrf.mxu0
  %v1459 = vadd.f32 %v1335, %v1458
  %v1460 = vpop.f32.mrf.mxu0
  %v1461 = vpop.f32.mrf.mxu0
  %v1462 = vadd.f32 %v1338, %v1461
  %v1463 = vpop.f32.mrf.mxu0
  %1464 = vdwg.mxu0
  %1465 = vset.pattern.permute.xlu0 1
  %1466 = vperm.xlu0 %1465, %v686
  %v1467 = vpop.permute.xlu0 %1466
  %v1470 = vunpack.c.l.s4 839922192
  %v1471 = vunpack.c.0.s8 %v1470
  %v1472 = vlaneseq
  %v1473 = vshrl.u32 %v1472, 7
  %v1474 = vsub.s32 %v1471, %v1473
  %v1475 = vrot.slane %v1467, %v1474
  %1476 = vset.pattern.permute.xlu0 1
  %1477 = vperm.xlu0 %1476, %v687
  %v1478 = vpop.permute.xlu0 %1477
  %v1481 = vunpack.c.l.s4 839922192
  %v1482 = vunpack.c.0.s8 %v1481
  %v1483 = vlaneseq
  %v1484 = vshrl.u32 %v1483, 7
  %v1485 = vsub.s32 %v1482, %v1484
  %v1486 = vrot.slane %v1478, %v1485
  %1487 = vset.pattern.permute.xlu0 1
  %1488 = vperm.xlu0 %1487, %v688
  %v1489 = vpop.permute.xlu0 %1488
  %v1492 = vunpack.c.l.s4 839922192
  %v1493 = vunpack.c.0.s8 %v1492
  %v1494 = vlaneseq
  %v1495 = vshrl.u32 %v1494, 7
  %v1496 = vsub.s32 %v1493, %v1495
  %v1497 = vrot.slane %v1489, %v1496
  %1498 = vset.pattern.permute.xlu0 1
  %1499 = vperm.xlu0 %1498, %v689
  %v1500 = vpop.permute.xlu0 %1499
  %v1503 = vunpack.c.l.s4 839922192
  %v1504 = vunpack.c.0.s8 %v1503
  %v1505 = vlaneseq
  %v1506 = vshrl.u32 %v1505, 7
  %v1507 = vsub.s32 %v1504, %v1506
  %v1508 = vrot.slane %v1500, %v1507
  %1509 = vset.pattern.permute.xlu0 1
  %1510 = vperm.xlu0 %1509, %v690
  %v1511 = vpop.permute.xlu0 %1510
  %v1514 = vunpack.c.l.s4 839922192
  %v1515 = vunpack.c.0.s8 %v1514
  %v1516 = vlaneseq
  %v1517 = vshrl.u32 %v1516, 7
  %v1518 = vsub.s32 %v1515, %v1517
  %v1519 = vrot.slane %v1511, %v1518
  %1520 = vset.pattern.permute.xlu0 1
  %1521 = vperm.xlu0 %1520, %v691
  %v1522 = vpop.permute.xlu0 %1521
  %v1525 = vunpack.c.l.s4 839922192
  %v1526 = vunpack.c.0.s8 %v1525
  %v1527 = vlaneseq
  %v1528 = vshrl.u32 %v1527, 7
  %v1529 = vsub.s32 %v1526, %v1528
  %v1530 = vrot.slane %v1522, %v1529
  %1531 = vset.pattern.permute.xlu0 1
  %1532 = vperm.xlu0 %1531, %v692
  %v1533 = vpop.permute.xlu0 %1532
  %v1536 = vunpack.c.l.s4 839922192
  %v1537 = vunpack.c.0.s8 %v1536
  %v1538 = vlaneseq
  %v1539 = vshrl.u32 %v1538, 7
  %v1540 = vsub.s32 %v1537, %v1539
  %v1541 = vrot.slane %v1533, %v1540
  %1542 = vset.pattern.permute.xlu0 1
  %1543 = vperm.xlu0 %1542, %v693
  %v1544 = vpop.permute.xlu0 %1543
  %v1547 = vunpack.c.l.s4 839922192
  %v1548 = vunpack.c.0.s8 %v1547
  %v1549 = vlaneseq
  %v1550 = vshrl.u32 %v1549, 7
  %v1551 = vsub.s32 %v1548, %v1550
  %v1552 = vrot.slane %v1544, %v1551
  %1553 = vset.pattern.permute.xlu0 1
  %1554 = vperm.xlu0 %1553, %v694
  %v1555 = vpop.permute.xlu0 %1554
  %v1558 = vunpack.c.l.s4 839922192
  %v1559 = vunpack.c.0.s8 %v1558
  %v1560 = vlaneseq
  %v1561 = vshrl.u32 %v1560, 7
  %v1562 = vsub.s32 %v1559, %v1561
  %v1563 = vrot.slane %v1555, %v1562
  %1564 = vset.pattern.permute.xlu0 1
  %1565 = vperm.xlu0 %1564, %v695
  %v1566 = vpop.permute.xlu0 %1565
  %v1569 = vunpack.c.l.s4 839922192
  %v1570 = vunpack.c.0.s8 %v1569
  %v1571 = vlaneseq
  %v1572 = vshrl.u32 %v1571, 7
  %v1573 = vsub.s32 %v1570, %v1572
  %v1574 = vrot.slane %v1566, %v1573
  %1575 = vset.pattern.permute.xlu0 1
  %1576 = vperm.xlu0 %1575, %v696
  %v1577 = vpop.permute.xlu0 %1576
  %v1580 = vunpack.c.l.s4 839922192
  %v1581 = vunpack.c.0.s8 %v1580
  %v1582 = vlaneseq
  %v1583 = vshrl.u32 %v1582, 7
  %v1584 = vsub.s32 %v1581, %v1583
  %v1585 = vrot.slane %v1577, %v1584
  %1586 = vset.pattern.permute.xlu0 1
  %1587 = vperm.xlu0 %1586, %v697
  %v1588 = vpop.permute.xlu0 %1587
  %v1591 = vunpack.c.l.s4 839922192
  %v1592 = vunpack.c.0.s8 %v1591
  %v1593 = vlaneseq
  %v1594 = vshrl.u32 %v1593, 7
  %v1595 = vsub.s32 %v1592, %v1594
  %v1596 = vrot.slane %v1588, %v1595
  %1597 = vset.pattern.permute.xlu0 1
  %1598 = vperm.xlu0 %1597, %v698
  %v1599 = vpop.permute.xlu0 %1598
  %v1602 = vunpack.c.l.s4 839922192
  %v1603 = vunpack.c.0.s8 %v1602
  %v1604 = vlaneseq
  %v1605 = vshrl.u32 %v1604, 7
  %v1606 = vsub.s32 %v1603, %v1605
  %v1607 = vrot.slane %v1599, %v1606
  %1608 = vset.pattern.permute.xlu0 1
  %1609 = vperm.xlu0 %1608, %v699
  %v1610 = vpop.permute.xlu0 %1609
  %v1613 = vunpack.c.l.s4 839922192
  %v1614 = vunpack.c.0.s8 %v1613
  %v1615 = vlaneseq
  %v1616 = vshrl.u32 %v1615, 7
  %v1617 = vsub.s32 %v1614, %v1616
  %v1618 = vrot.slane %v1610, %v1617
  %1619 = vset.pattern.permute.xlu0 1
  %1620 = vperm.xlu0 %1619, %v700
  %v1621 = vpop.permute.xlu0 %1620
  %v1624 = vunpack.c.l.s4 839922192
  %v1625 = vunpack.c.0.s8 %v1624
  %v1626 = vlaneseq
  %v1627 = vshrl.u32 %v1626, 7
  %v1628 = vsub.s32 %v1625, %v1627
  %v1629 = vrot.slane %v1621, %v1628
  %1630 = vset.pattern.permute.xlu0 1
  %1631 = vperm.xlu0 %1630, %v701
  %v1632 = vpop.permute.xlu0 %1631
  %v1635 = vunpack.c.l.s4 839922192
  %v1636 = vunpack.c.0.s8 %v1635
  %v1637 = vlaneseq
  %v1638 = vshrl.u32 %v1637, 7
  %v1639 = vsub.s32 %v1636, %v1638
  %v1640 = vrot.slane %v1632, %v1639
  %v1641 = vmul.bf16 %v670, %v1475
  %v1642 = vmul.bf16 %v671, %v1486
  %v1643 = vmul.bf16 %v672, %v1497
  %v1644 = vmul.bf16 %v673, %v1508
  %v1645 = vmul.bf16 %v674, %v1519
  %v1646 = vmul.bf16 %v675, %v1530
  %v1647 = vmul.bf16 %v676, %v1541
  %v1648 = vmul.bf16 %v677, %v1552
  %v1649 = vmul.bf16 %v678, %v1563
  %v1650 = vmul.bf16 %v679, %v1574
  %v1651 = vmul.bf16 %v680, %v1585
  %v1652 = vmul.bf16 %v681, %v1596
  %v1653 = vmul.bf16 %v682, %v1607
  %v1654 = vmul.bf16 %v683, %v1618
  %v1655 = vmul.bf16 %v684, %v1629
  %v1656 = vmul.bf16 %v685, %v1640
  %s1657 = scalar_lea.vmem %s6, 4
  %v1658 = vld [vmem:[%s1657] sm:$0xf]
  %v1675 = vunpack.c.l.b16 %v1641
  %v1676 = vunpack.c.l.b16 %v1642
  %v1677 = vunpack.c.l.b16 %v1643
  %v1678 = vunpack.c.l.b16 %v1644
  %v1679 = vunpack.c.l.b16 %v1645
  %v1680 = vunpack.c.l.b16 %v1646
  %v1681 = vunpack.c.l.b16 %v1647
  %v1682 = vunpack.c.l.b16 %v1648
  %v1683 = vunpack.c.l.b16 %v1649
  %v1684 = vunpack.c.l.b16 %v1650
  %v1685 = vunpack.c.l.b16 %v1651
  %v1686 = vunpack.c.l.b16 %v1652
  %v1687 = vunpack.c.l.b16 %v1653
  %v1688 = vunpack.c.l.b16 %v1654
  %v1689 = vunpack.c.l.b16 %v1655
  %v1690 = vunpack.c.l.b16 %v1656
  %v1691 = vpack.c.b16 %v1676, %v1675
  %v1692 = vpack.c.b16 %v1678, %v1677
  %v1693 = vpack.c.b16 %v1680, %v1679
  %v1694 = vpack.c.b16 %v1682, %v1681
  %v1695 = vpack.c.b16 %v1684, %v1683
  %v1696 = vpack.c.b16 %v1686, %v1685
  %v1697 = vpack.c.b16 %v1688, %v1687
  %v1698 = vpack.c.b16 %v1690, %v1689
  %v1700 = vsel %vm1215, %v1691, 0
  %v1703 = vsel %vm1215, %v1692, 0
  %v1706 = vsel %vm1215, %v1693, 0
  %v1709 = vsel %vm1215, %v1694, 0
  %v1712 = vsel %vm1215, %v1695, 0
  %v1715 = vsel %vm1215, %v1696, 0
  %v1718 = vsel %vm1215, %v1697, 0
  %v1721 = vsel %vm1215, %v1698, 0
  %v1724 = vsel %vm1240, %v1658, 0
  %1726 = vmatprep.subr.bf16.mxu0 0
  %1727 = vmatpush1.bf16.msra.mxu0 0
  %1728 = vmatprep.subr.bf16.mxu0 0
  %1729 = vmatpush1.bf16.msra.mxu0 0
  %1730 = vmatprep.subr.bf16.mxu0 0
  %1731 = vmatpush1.bf16.msra.mxu0 0
  %1732 = vmatprep.subr.bf16.mxu0 0
  %1733 = vmatpush1.bf16.msra.mxu0 0
  %1734 = vmatprep.subr.bf16.mxu0 0
  %1735 = vmatpush1.bf16.msra.mxu0 0
  %1736 = vmatprep.subr.bf16.mxu0 0
  %1737 = vmatpush1.bf16.msra.mxu0 0
  %1738 = vmatprep.subr.bf16.mxu0 0
  %1739 = vmatpush1.bf16.msra.mxu0 0
  %1740 = vmatprep.subr.bf16.mxu0 0
  %1741 = vmatpush1.bf16.msra.mxu0 %v1724
  %1742 = vmatprep.subr.bf16.mxu0 0
  %1743 = vmatpush2.bf16.msra.mxu0 0
  %1744 = vmatprep.subr.bf16.mxu0 0
  %1745 = vmatpush2.bf16.msra.mxu0 0
  %1746 = vmatprep.subr.bf16.mxu0 0
  %1747 = vmatpush2.bf16.msra.mxu0 0
  %1748 = vmatprep.subr.bf16.mxu0 0
  %1749 = vmatpush2.bf16.msra.mxu0 0
  %1750 = vmatprep.subr.bf16.mxu0 0
  %1751 = vmatpush2.bf16.msra.mxu0 0
  %1752 = vmatprep.subr.bf16.mxu0 0
  %1753 = vmatpush2.bf16.msra.mxu0 0
  %1754 = vmatprep.subr.bf16.mxu0 0
  %1755 = vmatpush2.bf16.msra.mxu0 0
  %1756 = vmatprep.subr.bf16.mxu0 0
  %1757 = vmatpush2.bf16.msra.mxu0 0
  %1758 = vmatprep.mubr.bf16.mxu0 0
  %1759 = vmatmul.mubr.bf16.gmra.mxu0 %v1700
  %v1760 = vpop.f32.mrf.mxu0
  %v1761 = vadd.f32 0.0, %v1760
  %v1762 = vpop.f32.mrf.mxu0
  %v1763 = vpop.f32.mrf.mxu0
  %v1764 = vadd.f32 0.0, %v1763
  %v1765 = vpop.f32.mrf.mxu0
  %1766 = vmatprep.mubr.bf16.mxu0 0
  %1767 = vmatmul.mubr.bf16.gmra.mxu0 %v1703
  %v1768 = vpop.f32.mrf.mxu0
  %v1769 = vadd.f32 0.0, %v1768
  %v1770 = vpop.f32.mrf.mxu0
  %v1771 = vpop.f32.mrf.mxu0
  %v1772 = vadd.f32 0.0, %v1771
  %v1773 = vpop.f32.mrf.mxu0
  %1774 = vmatprep.mubr.bf16.mxu0 0
  %1775 = vmatmul.mubr.bf16.gmra.mxu0 %v1706
  %v1776 = vpop.f32.mrf.mxu0
  %v1777 = vadd.f32 0.0, %v1776
  %v1778 = vpop.f32.mrf.mxu0
  %v1779 = vpop.f32.mrf.mxu0
  %v1780 = vadd.f32 0.0, %v1779
  %v1781 = vpop.f32.mrf.mxu0
  %1782 = vmatprep.mubr.bf16.mxu0 0
  %1783 = vmatmul.mubr.bf16.gmra.mxu0 %v1709
  %v1784 = vpop.f32.mrf.mxu0
  %v1785 = vadd.f32 0.0, %v1784
  %v1786 = vpop.f32.mrf.mxu0
  %v1787 = vpop.f32.mrf.mxu0
  %v1788 = vadd.f32 0.0, %v1787
  %v1789 = vpop.f32.mrf.mxu0
  %1790 = vmatprep.mubr.bf16.mxu0 0
  %1791 = vmatmul.mubr.bf16.gmra.mxu0 %v1712
  %v1792 = vpop.f32.mrf.mxu0
  %v1793 = vadd.f32 0.0, %v1792
  %v1794 = vpop.f32.mrf.mxu0
  %v1795 = vpop.f32.mrf.mxu0
  %v1796 = vadd.f32 0.0, %v1795
  %v1797 = vpop.f32.mrf.mxu0
  %1798 = vmatprep.mubr.bf16.mxu0 0
  %1799 = vmatmul.mubr.bf16.gmra.mxu0 %v1715
  %v1800 = vpop.f32.mrf.mxu0
  %v1801 = vadd.f32 0.0, %v1800
  %v1802 = vpop.f32.mrf.mxu0
  %v1803 = vpop.f32.mrf.mxu0
  %v1804 = vadd.f32 0.0, %v1803
  %v1805 = vpop.f32.mrf.mxu0
  %1806 = vmatprep.mubr.bf16.mxu0 0
  %1807 = vmatmul.mubr.bf16.gmra.mxu0 %v1718
  %v1808 = vpop.f32.mrf.mxu0
  %v1809 = vadd.f32 0.0, %v1808
  %v1810 = vpop.f32.mrf.mxu0
  %v1811 = vpop.f32.mrf.mxu0
  %v1812 = vadd.f32 0.0, %v1811
  %v1813 = vpop.f32.mrf.mxu0
  %1814 = vmatprep.mubr.bf16.mxu0 0
  %1815 = vmatmul.mubr.bf16.gmra.mxu0 %v1721
  %v1816 = vpop.f32.mrf.mxu0
  %v1817 = vadd.f32 0.0, %v1816
  %v1818 = vpop.f32.mrf.mxu0
  %v1819 = vpop.f32.mrf.mxu0
  %v1820 = vadd.f32 0.0, %v1819
  %v1821 = vpop.f32.mrf.mxu0
  %1822 = vdwg.mxu0
  %v1823 = vadd.f32 %v1403, %v1761
  %v1824 = vadd.f32 %v1406, %v1764
  %v1825 = vadd.f32 %v1411, %v1769
  %v1826 = vadd.f32 %v1414, %v1772
  %v1827 = vadd.f32 %v1419, %v1777
  %v1828 = vadd.f32 %v1422, %v1780
  %v1829 = vadd.f32 %v1427, %v1785
  %v1830 = vadd.f32 %v1430, %v1788
  %v1831 = vadd.f32 %v1435, %v1793
  %v1832 = vadd.f32 %v1438, %v1796
  %v1833 = vadd.f32 %v1443, %v1801
  %v1834 = vadd.f32 %v1446, %v1804
  %v1835 = vadd.f32 %v1451, %v1809
  %v1836 = vadd.f32 %v1454, %v1812
  %v1837 = vadd.f32 %v1459, %v1817
  %v1838 = vadd.f32 %v1462, %v1820
  %v1839 = vld [vmem:[#allocation2 + $0x4] sm:$0xf]
  %v1840 = vld [vmem:[#allocation2 + $0x8] sm:$0xf]
  %v1841 = vld [vmem:[#allocation2 + $0xc] sm:$0xf]
  %v1842 = vld [vmem:[#allocation2 + $0x10] sm:$0xf]
  %v1843 = vld [vmem:[#allocation2 + $0x14] sm:$0xf]
  %v1844 = vld [vmem:[#allocation2 + $0x18] sm:$0xf]
  %v1845 = vld [vmem:[#allocation2 + $0x1c] sm:$0xf]
  %v1846 = vld [vmem:[#allocation2 + $0x20] sm:$0xf]
  %v1847 = vld [vmem:[#allocation2 + $0x24] sm:$0xf]
  %v1848 = vld [vmem:[#allocation2 + $0x28] sm:$0xf]
  %v1849 = vld [vmem:[#allocation2 + $0x2c] sm:$0xf]
  %v1850 = vld [vmem:[#allocation2 + $0x30] sm:$0xf]
  %v1851 = vld [vmem:[#allocation2 + $0x34] sm:$0xf]
  %v1852 = vld [vmem:[#allocation2 + $0x38] sm:$0xf]
  %v1853 = vld [vmem:[#allocation2 + $0x3c] sm:$0xf]
  %v1854 = vld [vmem:[#allocation2 + $0x40] sm:$0xf]
  %v1855 = vld [vmem:[#allocation2 + $0x44] sm:$0x1]
  %1856 = vset.pattern.permute.xlu0 2
  %1857 = vperm.xlu0 %1856, %v686
  %v1858 = vpop.permute.xlu0 %1857
  %v1861 = vunpack.c.l.s4 839922192
  %v1862 = vunpack.c.0.s8 %v1861
  %v1863 = vlaneseq
  %v1864 = vshrl.u32 %v1863, 7
  %v1865 = vsub.s32 %v1862, %v1864
  %v1866 = vrot.slane %v1858, %v1865
  %1867 = vset.pattern.permute.xlu0 2
  %1868 = vperm.xlu0 %1867, %v687
  %v1869 = vpop.permute.xlu0 %1868
  %v1872 = vunpack.c.l.s4 839922192
  %v1873 = vunpack.c.0.s8 %v1872
  %v1874 = vlaneseq
  %v1875 = vshrl.u32 %v1874, 7
  %v1876 = vsub.s32 %v1873, %v1875
  %v1877 = vrot.slane %v1869, %v1876
  %1878 = vset.pattern.permute.xlu0 2
  %1879 = vperm.xlu0 %1878, %v688
  %v1880 = vpop.permute.xlu0 %1879
  %v1883 = vunpack.c.l.s4 839922192
  %v1884 = vunpack.c.0.s8 %v1883
  %v1885 = vlaneseq
  %v1886 = vshrl.u32 %v1885, 7
  %v1887 = vsub.s32 %v1884, %v1886
  %v1888 = vrot.slane %v1880, %v1887
  %1889 = vset.pattern.permute.xlu0 2
  %1890 = vperm.xlu0 %1889, %v689
  %v1891 = vpop.permute.xlu0 %1890
  %v1894 = vunpack.c.l.s4 839922192
  %v1895 = vunpack.c.0.s8 %v1894
  %v1896 = vlaneseq
  %v1897 = vshrl.u32 %v1896, 7
  %v1898 = vsub.s32 %v1895, %v1897
  %v1899 = vrot.slane %v1891, %v1898
  %1900 = vset.pattern.permute.xlu0 2
  %1901 = vperm.xlu0 %1900, %v690
  %v1902 = vpop.permute.xlu0 %1901
  %v1905 = vunpack.c.l.s4 839922192
  %v1906 = vunpack.c.0.s8 %v1905
  %v1907 = vlaneseq
  %v1908 = vshrl.u32 %v1907, 7
  %v1909 = vsub.s32 %v1906, %v1908
  %v1910 = vrot.slane %v1902, %v1909
  %1911 = vset.pattern.permute.xlu0 2
  %1912 = vperm.xlu0 %1911, %v691
  %v1913 = vpop.permute.xlu0 %1912
  %v1916 = vunpack.c.l.s4 839922192
  %v1917 = vunpack.c.0.s8 %v1916
  %v1918 = vlaneseq
  %v1919 = vshrl.u32 %v1918, 7
  %v1920 = vsub.s32 %v1917, %v1919
  %v1921 = vrot.slane %v1913, %v1920
  %1922 = vset.pattern.permute.xlu0 2
  %1923 = vperm.xlu0 %1922, %v692
  %v1924 = vpop.permute.xlu0 %1923
  %v1927 = vunpack.c.l.s4 839922192
  %v1928 = vunpack.c.0.s8 %v1927
  %v1929 = vlaneseq
  %v1930 = vshrl.u32 %v1929, 7
  %v1931 = vsub.s32 %v1928, %v1930
  %v1932 = vrot.slane %v1924, %v1931
  %1933 = vset.pattern.permute.xlu0 2
  %1934 = vperm.xlu0 %1933, %v693
  %v1935 = vpop.permute.xlu0 %1934
  %v1938 = vunpack.c.l.s4 839922192
  %v1939 = vunpack.c.0.s8 %v1938
  %v1940 = vlaneseq
  %v1941 = vshrl.u32 %v1940, 7
  %v1942 = vsub.s32 %v1939, %v1941
  %v1943 = vrot.slane %v1935, %v1942
  %1944 = vset.pattern.permute.xlu0 2
  %1945 = vperm.xlu0 %1944, %v694
  %v1946 = vpop.permute.xlu0 %1945
  %v1949 = vunpack.c.l.s4 839922192
  %v1950 = vunpack.c.0.s8 %v1949
  %v1951 = vlaneseq
  %v1952 = vshrl.u32 %v1951, 7
  %v1953 = vsub.s32 %v1950, %v1952
  %v1954 = vrot.slane %v1946, %v1953
  %1955 = vset.pattern.permute.xlu0 2
  %1956 = vperm.xlu0 %1955, %v695
  %v1957 = vpop.permute.xlu0 %1956
  %v1960 = vunpack.c.l.s4 839922192
  %v1961 = vunpack.c.0.s8 %v1960
  %v1962 = vlaneseq
  %v1963 = vshrl.u32 %v1962, 7
  %v1964 = vsub.s32 %v1961, %v1963
  %v1965 = vrot.slane %v1957, %v1964
  %1966 = vset.pattern.permute.xlu0 2
  %1967 = vperm.xlu0 %1966, %v696
  %v1968 = vpop.permute.xlu0 %1967
  %v1971 = vunpack.c.l.s4 839922192
  %v1972 = vunpack.c.0.s8 %v1971
  %v1973 = vlaneseq
  %v1974 = vshrl.u32 %v1973, 7
  %v1975 = vsub.s32 %v1972, %v1974
  %v1976 = vrot.slane %v1968, %v1975
  %1977 = vset.pattern.permute.xlu0 2
  %1978 = vperm.xlu0 %1977, %v697
  %v1979 = vpop.permute.xlu0 %1978
  %v1982 = vunpack.c.l.s4 839922192
  %v1983 = vunpack.c.0.s8 %v1982
  %v1984 = vlaneseq
  %v1985 = vshrl.u32 %v1984, 7
  %v1986 = vsub.s32 %v1983, %v1985
  %v1987 = vrot.slane %v1979, %v1986
  %1988 = vset.pattern.permute.xlu0 2
  %1989 = vperm.xlu0 %1988, %v698
  %v1990 = vpop.permute.xlu0 %1989
  %v1993 = vunpack.c.l.s4 839922192
  %v1994 = vunpack.c.0.s8 %v1993
  %v1995 = vlaneseq
  %v1996 = vshrl.u32 %v1995, 7
  %v1997 = vsub.s32 %v1994, %v1996
  %v1998 = vrot.slane %v1990, %v1997
  %1999 = vset.pattern.permute.xlu0 2
  %2000 = vperm.xlu0 %1999, %v699
  %v2001 = vpop.permute.xlu0 %2000
  %v2004 = vunpack.c.l.s4 839922192
  %v2005 = vunpack.c.0.s8 %v2004
  %v2006 = vlaneseq
  %v2007 = vshrl.u32 %v2006, 7
  %v2008 = vsub.s32 %v2005, %v2007
  %v2009 = vrot.slane %v2001, %v2008
  %2010 = vset.pattern.permute.xlu0 2
  %2011 = vperm.xlu0 %2010, %v700
  %v2012 = vpop.permute.xlu0 %2011
  %v2015 = vunpack.c.l.s4 839922192
  %v2016 = vunpack.c.0.s8 %v2015
  %v2017 = vlaneseq
  %v2018 = vshrl.u32 %v2017, 7
  %v2019 = vsub.s32 %v2016, %v2018
  %v2020 = vrot.slane %v2012, %v2019
  %2021 = vset.pattern.permute.xlu0 2
  %2022 = vperm.xlu0 %2021, %v701
  %v2023 = vpop.permute.xlu0 %2022
  %v2026 = vunpack.c.l.s4 839922192
  %v2027 = vunpack.c.0.s8 %v2026
  %v2028 = vlaneseq
  %v2029 = vshrl.u32 %v2028, 7
  %v2030 = vsub.s32 %v2027, %v2029
  %v2031 = vrot.slane %v2023, %v2030
  %vm2032 = vsmask.f32 256
  %vm2033 = vsmask.f32 4368
  %vm2034 = vmor %vm2032, %vm2033
  %v2036 = vshrl.u32 %v1866, 16
  %v2038 = vrot.slane %v2036, 7
  %v2039 = vshll.u32 %v1866, 16
  %v2041 = vor.u32 %v2038, %v2039
  %v2042 = vrot.slane %v2038, 4
  %v2044 = vshrl.u32 %v1877, 16
  %v2046 = vrot.slane %v2044, 7
  %v2047 = vshll.u32 %v1877, 16
  %v2049 = vor.u32 %v2046, %v2047
  %v2050 = vsel %vm2034, %v2042, %v2049
  %v2051 = vrot.slane %v2046, 4
  %v2053 = vshrl.u32 %v1888, 16
  %v2055 = vrot.slane %v2053, 7
  %v2056 = vshll.u32 %v1888, 16
  %v2058 = vor.u32 %v2055, %v2056
  %v2059 = vsel %vm2034, %v2051, %v2058
  %v2060 = vrot.slane %v2055, 4
  %v2062 = vshrl.u32 %v1899, 16
  %v2064 = vrot.slane %v2062, 7
  %v2065 = vshll.u32 %v1899, 16
  %v2067 = vor.u32 %v2064, %v2065
  %v2068 = vsel %vm2034, %v2060, %v2067
  %v2069 = vrot.slane %v2064, 4
  %v2071 = vshrl.u32 %v1910, 16
  %v2073 = vrot.slane %v2071, 7
  %v2074 = vshll.u32 %v1910, 16
  %v2076 = vor.u32 %v2073, %v2074
  %v2077 = vsel %vm2034, %v2069, %v2076
  %v2078 = vrot.slane %v2073, 4
  %v2080 = vshrl.u32 %v1921, 16
  %v2082 = vrot.slane %v2080, 7
  %v2083 = vshll.u32 %v1921, 16
  %v2085 = vor.u32 %v2082, %v2083
  %v2086 = vsel %vm2034, %v2078, %v2085
  %v2087 = vrot.slane %v2082, 4
  %v2089 = vshrl.u32 %v1932, 16
  %v2091 = vrot.slane %v2089, 7
  %v2092 = vshll.u32 %v1932, 16
  %v2094 = vor.u32 %v2091, %v2092
  %v2095 = vsel %vm2034, %v2087, %v2094
  %v2096 = vrot.slane %v2091, 4
  %v2098 = vshrl.u32 %v1943, 16
  %v2100 = vrot.slane %v2098, 7
  %v2101 = vshll.u32 %v1943, 16
  %v2103 = vor.u32 %v2100, %v2101
  %v2104 = vsel %vm2034, %v2096, %v2103
  %v2105 = vrot.slane %v2100, 4
  %v2107 = vshrl.u32 %v1954, 16
  %v2109 = vrot.slane %v2107, 7
  %v2110 = vshll.u32 %v1954, 16
  %v2112 = vor.u32 %v2109, %v2110
  %v2113 = vsel %vm2034, %v2105, %v2112
  %v2114 = vrot.slane %v2109, 4
  %v2116 = vshrl.u32 %v1965, 16
  %v2118 = vrot.slane %v2116, 7
  %v2119 = vshll.u32 %v1965, 16
  %v2121 = vor.u32 %v2118, %v2119
  %v2122 = vsel %vm2034, %v2114, %v2121
  %v2123 = vrot.slane %v2118, 4
  %v2125 = vshrl.u32 %v1976, 16
  %v2127 = vrot.slane %v2125, 7
  %v2128 = vshll.u32 %v1976, 16
  %v2130 = vor.u32 %v2127, %v2128
  %v2131 = vsel %vm2034, %v2123, %v2130
  %v2132 = vrot.slane %v2127, 4
  %v2134 = vshrl.u32 %v1987, 16
  %v2136 = vrot.slane %v2134, 7
  %v2137 = vshll.u32 %v1987, 16
  %v2139 = vor.u32 %v2136, %v2137
  %v2140 = vsel %vm2034, %v2132, %v2139
  %v2141 = vrot.slane %v2136, 4
  %v2143 = vshrl.u32 %v1998, 16
  %v2145 = vrot.slane %v2143, 7
  %v2146 = vshll.u32 %v1998, 16
  %v2148 = vor.u32 %v2145, %v2146
  %v2149 = vsel %vm2034, %v2141, %v2148
  %v2150 = vrot.slane %v2145, 4
  %v2152 = vshrl.u32 %v2009, 16
  %v2154 = vrot.slane %v2152, 7
  %v2155 = vshll.u32 %v2009, 16
  %v2157 = vor.u32 %v2154, %v2155
  %v2158 = vsel %vm2034, %v2150, %v2157
  %v2159 = vrot.slane %v2154, 4
  %v2161 = vshrl.u32 %v2020, 16
  %v2163 = vrot.slane %v2161, 7
  %v2164 = vshll.u32 %v2020, 16
  %v2166 = vor.u32 %v2163, %v2164
  %v2167 = vsel %vm2034, %v2159, %v2166
  %v2168 = vrot.slane %v2163, 4
  %v2170 = vshrl.u32 %v2031, 16
  %v2172 = vrot.slane %v2170, 7
  %v2173 = vshll.u32 %v2031, 16
  %v2175 = vor.u32 %v2172, %v2173
  %v2176 = vsel %vm2034, %v2168, %v2175
  %v2177 = vrot.slane %v2172, 4
  %v2195 = vmul.bf16 %v1839, %v2041
  %v2196 = vmul.bf16 %v1840, %v2050
  %v2197 = vmul.bf16 %v1841, %v2059
  %v2198 = vmul.bf16 %v1842, %v2068
  %v2199 = vmul.bf16 %v1843, %v2077
  %v2200 = vmul.bf16 %v1844, %v2086
  %v2201 = vmul.bf16 %v1845, %v2095
  %v2202 = vmul.bf16 %v1846, %v2104
  %v2203 = vmul.bf16 %v1847, %v2113
  %v2204 = vmul.bf16 %v1848, %v2122
  %v2205 = vmul.bf16 %v1849, %v2131
  %v2206 = vmul.bf16 %v1850, %v2140
  %v2207 = vmul.bf16 %v1851, %v2149
  %v2208 = vmul.bf16 %v1852, %v2158
  %v2209 = vmul.bf16 %v1853, %v2167
  %v2210 = vmul.bf16 %v1854, %v2176
  %v2211 = vmul.bf16 %v1855, %v2177
  %s2212 = scalar_lea.vmem %s6, 8
  %v2213 = vld [vmem:[%s2212] sm:$0xf]
  %v2231 = vunpack.c.l.b16 %v2195
  %v2232 = vunpack.c.l.b16 %v2196
  %v2233 = vunpack.c.l.b16 %v2197
  %v2234 = vunpack.c.l.b16 %v2198
  %v2235 = vunpack.c.l.b16 %v2199
  %v2236 = vunpack.c.l.b16 %v2200
  %v2237 = vunpack.c.l.b16 %v2201
  %v2238 = vunpack.c.l.b16 %v2202
  %v2239 = vunpack.c.l.b16 %v2203
  %v2240 = vunpack.c.l.b16 %v2204
  %v2241 = vunpack.c.l.b16 %v2205
  %v2242 = vunpack.c.l.b16 %v2206
  %v2243 = vunpack.c.l.b16 %v2207
  %v2244 = vunpack.c.l.b16 %v2208
  %v2245 = vunpack.c.l.b16 %v2209
  %v2246 = vunpack.c.l.b16 %v2210
  %v2247 = vunpack.c.l.b16 %v2211
  %v2248 = vpack.c.b16 %v2232, %v2231
  %v2249 = vpack.c.b16 %v2234, %v2233
  %v2250 = vpack.c.b16 %v2236, %v2235
  %v2251 = vpack.c.b16 %v2238, %v2237
  %v2252 = vpack.c.b16 %v2240, %v2239
  %v2253 = vpack.c.b16 %v2242, %v2241
  %v2254 = vpack.c.b16 %v2244, %v2243
  %v2255 = vpack.c.b16 %v2246, %v2245
  %v2256 = vpack.c.b16 %v2247, %v2247
  %vm2257 = vsmask.f32 7424
  %v2259 = vshrl.u32 %v2248, 16
  %v2261 = vshll.u32 %v2248, 16
  %v2263 = vrot.slane %v2261, 1
  %v2264 = vor.u32 %v2259, %v2263
  %v2266 = vshll.u32 %v2249, 16
  %v2268 = vrot.slane %v2266, 1
  %v2269 = vsel %vm2257, %v2264, %v2268
  %v2270 = vshrl.u32 %v2249, 16
  %v2272 = vor.u32 %v2270, %v2268
  %v2274 = vshll.u32 %v2250, 16
  %v2276 = vrot.slane %v2274, 1
  %v2277 = vsel %vm2257, %v2272, %v2276
  %v2278 = vshrl.u32 %v2250, 16
  %v2280 = vor.u32 %v2278, %v2276
  %v2282 = vshll.u32 %v2251, 16
  %v2284 = vrot.slane %v2282, 1
  %v2285 = vsel %vm2257, %v2280, %v2284
  %v2286 = vshrl.u32 %v2251, 16
  %v2288 = vor.u32 %v2286, %v2284
  %v2290 = vshll.u32 %v2252, 16
  %v2292 = vrot.slane %v2290, 1
  %v2293 = vsel %vm2257, %v2288, %v2292
  %v2294 = vshrl.u32 %v2252, 16
  %v2296 = vor.u32 %v2294, %v2292
  %v2298 = vshll.u32 %v2253, 16
  %v2300 = vrot.slane %v2298, 1
  %v2301 = vsel %vm2257, %v2296, %v2300
  %v2302 = vshrl.u32 %v2253, 16
  %v2304 = vor.u32 %v2302, %v2300
  %v2306 = vshll.u32 %v2254, 16
  %v2308 = vrot.slane %v2306, 1
  %v2309 = vsel %vm2257, %v2304, %v2308
  %v2310 = vshrl.u32 %v2254, 16
  %v2312 = vor.u32 %v2310, %v2308
  %v2314 = vshll.u32 %v2255, 16
  %v2316 = vrot.slane %v2314, 1
  %v2317 = vsel %vm2257, %v2312, %v2316
  %v2318 = vshrl.u32 %v2255, 16
  %v2320 = vor.u32 %v2318, %v2316
  %v2322 = vshll.u32 %v2256, 16
  %v2324 = vrot.slane %v2322, 1
  %v2325 = vsel %vm2257, %v2320, %v2324
  %v2327 = vsel %vm1215, %v2269, 0
  %v2330 = vsel %vm1215, %v2277, 0
  %v2333 = vsel %vm1215, %v2285, 0
  %v2336 = vsel %vm1215, %v2293, 0
  %v2339 = vsel %vm1215, %v2301, 0
  %v2342 = vsel %vm1215, %v2309, 0
  %v2345 = vsel %vm1215, %v2317, 0
  %v2348 = vsel %vm1215, %v2325, 0
  %v2351 = vsel %vm1240, %v2213, 0
  %2353 = vmatprep.subr.bf16.mxu0 0
  %2354 = vmatpush1.bf16.msra.mxu0 0
  %2355 = vmatprep.subr.bf16.mxu0 0
  %2356 = vmatpush1.bf16.msra.mxu0 0
  %2357 = vmatprep.subr.bf16.mxu0 0
  %2358 = vmatpush1.bf16.msra.mxu0 0
  %2359 = vmatprep.subr.bf16.mxu0 0
  %2360 = vmatpush1.bf16.msra.mxu0 0
  %2361 = vmatprep.subr.bf16.mxu0 0
  %2362 = vmatpush1.bf16.msra.mxu0 0
  %2363 = vmatprep.subr.bf16.mxu0 0
  %2364 = vmatpush1.bf16.msra.mxu0 0
  %2365 = vmatprep.subr.bf16.mxu0 0
  %2366 = vmatpush1.bf16.msra.mxu0 0
  %2367 = vmatprep.subr.bf16.mxu0 0
  %2368 = vmatpush1.bf16.msra.mxu0 %v2351
  %2369 = vmatprep.subr.bf16.mxu0 0
  %2370 = vmatpush2.bf16.msra.mxu0 0
  %2371 = vmatprep.subr.bf16.mxu0 0
  %2372 = vmatpush2.bf16.msra.mxu0 0
  %2373 = vmatprep.subr.bf16.mxu0 0
  %2374 = vmatpush2.bf16.msra.mxu0 0
  %2375 = vmatprep.subr.bf16.mxu0 0
  %2376 = vmatpush2.bf16.msra.mxu0 0
  %2377 = vmatprep.subr.bf16.mxu0 0
  %2378 = vmatpush2.bf16.msra.mxu0 0
  %2379 = vmatprep.subr.bf16.mxu0 0
  %2380 = vmatpush2.bf16.msra.mxu0 0
  %2381 = vmatprep.subr.bf16.mxu0 0
  %2382 = vmatpush2.bf16.msra.mxu0 0
  %2383 = vmatprep.subr.bf16.mxu0 0
  %2384 = vmatpush2.bf16.msra.mxu0 0
  %2385 = vmatprep.mubr.bf16.mxu0 0
  %2386 = vmatmul.mubr.bf16.gmra.mxu0 %v2327
  %v2387 = vpop.f32.mrf.mxu0
  %v2388 = vadd.f32 0.0, %v2387
  %v2389 = vpop.f32.mrf.mxu0
  %v2390 = vpop.f32.mrf.mxu0
  %v2391 = vadd.f32 0.0, %v2390
  %v2392 = vpop.f32.mrf.mxu0
  %2393 = vmatprep.mubr.bf16.mxu0 0
  %2394 = vmatmul.mubr.bf16.gmra.mxu0 %v2330
  %v2395 = vpop.f32.mrf.mxu0
  %v2396 = vadd.f32 0.0, %v2395
  %v2397 = vpop.f32.mrf.mxu0
  %v2398 = vpop.f32.mrf.mxu0
  %v2399 = vadd.f32 0.0, %v2398
  %v2400 = vpop.f32.mrf.mxu0
  %2401 = vmatprep.mubr.bf16.mxu0 0
  %2402 = vmatmul.mubr.bf16.gmra.mxu0 %v2333
  %v2403 = vpop.f32.mrf.mxu0
  %v2404 = vadd.f32 0.0, %v2403
  %v2405 = vpop.f32.mrf.mxu0
  %v2406 = vpop.f32.mrf.mxu0
  %v2407 = vadd.f32 0.0, %v2406
  %v2408 = vpop.f32.mrf.mxu0
  %2409 = vmatprep.mubr.bf16.mxu0 0
  %2410 = vmatmul.mubr.bf16.gmra.mxu0 %v2336
  %v2411 = vpop.f32.mrf.mxu0
  %v2412 = vadd.f32 0.0, %v2411
  %v2413 = vpop.f32.mrf.mxu0
  %v2414 = vpop.f32.mrf.mxu0
  %v2415 = vadd.f32 0.0, %v2414
  %v2416 = vpop.f32.mrf.mxu0
  %2417 = vmatprep.mubr.bf16.mxu0 0
  %2418 = vmatmul.mubr.bf16.gmra.mxu0 %v2339
  %v2419 = vpop.f32.mrf.mxu0
  %v2420 = vadd.f32 0.0, %v2419
  %v2421 = vpop.f32.mrf.mxu0
  %v2422 = vpop.f32.mrf.mxu0
  %v2423 = vadd.f32 0.0, %v2422
  %v2424 = vpop.f32.mrf.mxu0
  %2425 = vmatprep.mubr.bf16.mxu0 0
  %2426 = vmatmul.mubr.bf16.gmra.mxu0 %v2342
  %v2427 = vpop.f32.mrf.mxu0
  %v2428 = vadd.f32 0.0, %v2427
  %v2429 = vpop.f32.mrf.mxu0
  %v2430 = vpop.f32.mrf.mxu0
  %v2431 = vadd.f32 0.0, %v2430
  %v2432 = vpop.f32.mrf.mxu0
  %2433 = vmatprep.mubr.bf16.mxu0 0
  %2434 = vmatmul.mubr.bf16.gmra.mxu0 %v2345
  %v2435 = vpop.f32.mrf.mxu0
  %v2436 = vadd.f32 0.0, %v2435
  %v2437 = vpop.f32.mrf.mxu0
  %v2438 = vpop.f32.mrf.mxu0
  %v2439 = vadd.f32 0.0, %v2438
  %v2440 = vpop.f32.mrf.mxu0
  %2441 = vmatprep.mubr.bf16.mxu0 0
  %2442 = vmatmul.mubr.bf16.gmra.mxu0 %v2348
  %v2443 = vpop.f32.mrf.mxu0
  %v2444 = vadd.f32 0.0, %v2443
  %v2445 = vpop.f32.mrf.mxu0
  %v2446 = vpop.f32.mrf.mxu0
  %v2447 = vadd.f32 0.0, %v2446
  %v2448 = vpop.f32.mrf.mxu0
  %2449 = vdwg.mxu0
  %v2450 = vadd.f32 %v1823, %v2388
  %v2451 = vadd.f32 %v1824, %v2391
  %v2452 = vadd.f32 %v1825, %v2396
  %v2453 = vadd.f32 %v1826, %v2399
  %v2454 = vadd.f32 %v1827, %v2404
  %v2455 = vadd.f32 %v1828, %v2407
  %v2456 = vadd.f32 %v1829, %v2412
  %v2457 = vadd.f32 %v1830, %v2415
  %v2458 = vadd.f32 %v1831, %v2420
  %v2459 = vadd.f32 %v1832, %v2423
  %v2460 = vadd.f32 %v1833, %v2428
  %v2461 = vadd.f32 %v1834, %v2431
  %v2462 = vadd.f32 %v1835, %v2436
  %v2463 = vadd.f32 %v1836, %v2439
  %v2464 = vadd.f32 %v1837, %v2444
  %v2465 = vadd.f32 %v1838, %v2447
  %v2466 = vld [vmem:[#allocation2 + $0x4] sm:$0x8]
  %v2467 = vld [vmem:[#allocation2 + $0x44] sm:$0xf]
  %2468 = vset.pattern.permute.xlu0 3
  %2469 = vperm.xlu0 %2468, %v686
  %v2470 = vpop.permute.xlu0 %2469
  %v2473 = vunpack.c.l.s4 839922192
  %v2474 = vunpack.c.0.s8 %v2473
  %v2475 = vlaneseq
  %v2476 = vshrl.u32 %v2475, 7
  %v2477 = vsub.s32 %v2474, %v2476
  %v2478 = vrot.slane %v2470, %v2477
  %2479 = vset.pattern.permute.xlu0 3
  %2480 = vperm.xlu0 %2479, %v687
  %v2481 = vpop.permute.xlu0 %2480
  %v2484 = vunpack.c.l.s4 839922192
  %v2485 = vunpack.c.0.s8 %v2484
  %v2486 = vlaneseq
  %v2487 = vshrl.u32 %v2486, 7
  %v2488 = vsub.s32 %v2485, %v2487
  %v2489 = vrot.slane %v2481, %v2488
  %2490 = vset.pattern.permute.xlu0 3
  %2491 = vperm.xlu0 %2490, %v688
  %v2492 = vpop.permute.xlu0 %2491
  %v2495 = vunpack.c.l.s4 839922192
  %v2496 = vunpack.c.0.s8 %v2495
  %v2497 = vlaneseq
  %v2498 = vshrl.u32 %v2497, 7
  %v2499 = vsub.s32 %v2496, %v2498
  %v2500 = vrot.slane %v2492, %v2499
  %2501 = vset.pattern.permute.xlu0 3
  %2502 = vperm.xlu0 %2501, %v689
  %v2503 = vpop.permute.xlu0 %2502
  %v2506 = vunpack.c.l.s4 839922192
  %v2507 = vunpack.c.0.s8 %v2506
  %v2508 = vlaneseq
  %v2509 = vshrl.u32 %v2508, 7
  %v2510 = vsub.s32 %v2507, %v2509
  %v2511 = vrot.slane %v2503, %v2510
  %2512 = vset.pattern.permute.xlu0 3
  %2513 = vperm.xlu0 %2512, %v690
  %v2514 = vpop.permute.xlu0 %2513
  %v2517 = vunpack.c.l.s4 839922192
  %v2518 = vunpack.c.0.s8 %v2517
  %v2519 = vlaneseq
  %v2520 = vshrl.u32 %v2519, 7
  %v2521 = vsub.s32 %v2518, %v2520
  %v2522 = vrot.slane %v2514, %v2521
  %2523 = vset.pattern.permute.xlu0 3
  %2524 = vperm.xlu0 %2523, %v691
  %v2525 = vpop.permute.xlu0 %2524
  %v2528 = vunpack.c.l.s4 839922192
  %v2529 = vunpack.c.0.s8 %v2528
  %v2530 = vlaneseq
  %v2531 = vshrl.u32 %v2530, 7
  %v2532 = vsub.s32 %v2529, %v2531
  %v2533 = vrot.slane %v2525, %v2532
  %2534 = vset.pattern.permute.xlu0 3
  %2535 = vperm.xlu0 %2534, %v692
  %v2536 = vpop.permute.xlu0 %2535
  %v2539 = vunpack.c.l.s4 839922192
  %v2540 = vunpack.c.0.s8 %v2539
  %v2541 = vlaneseq
  %v2542 = vshrl.u32 %v2541, 7
  %v2543 = vsub.s32 %v2540, %v2542
  %v2544 = vrot.slane %v2536, %v2543
  %2545 = vset.pattern.permute.xlu0 3
  %2546 = vperm.xlu0 %2545, %v693
  %v2547 = vpop.permute.xlu0 %2546
  %v2550 = vunpack.c.l.s4 839922192
  %v2551 = vunpack.c.0.s8 %v2550
  %v2552 = vlaneseq
  %v2553 = vshrl.u32 %v2552, 7
  %v2554 = vsub.s32 %v2551, %v2553
  %v2555 = vrot.slane %v2547, %v2554
  %2556 = vset.pattern.permute.xlu0 3
  %2557 = vperm.xlu0 %2556, %v694
  %v2558 = vpop.permute.xlu0 %2557
  %v2561 = vunpack.c.l.s4 839922192
  %v2562 = vunpack.c.0.s8 %v2561
  %v2563 = vlaneseq
  %v2564 = vshrl.u32 %v2563, 7
  %v2565 = vsub.s32 %v2562, %v2564
  %v2566 = vrot.slane %v2558, %v2565
  %2567 = vset.pattern.permute.xlu0 3
  %2568 = vperm.xlu0 %2567, %v695
  %v2569 = vpop.permute.xlu0 %2568
  %v2572 = vunpack.c.l.s4 839922192
  %v2573 = vunpack.c.0.s8 %v2572
  %v2574 = vlaneseq
  %v2575 = vshrl.u32 %v2574, 7
  %v2576 = vsub.s32 %v2573, %v2575
  %v2577 = vrot.slane %v2569, %v2576
  %2578 = vset.pattern.permute.xlu0 3
  %2579 = vperm.xlu0 %2578, %v696
  %v2580 = vpop.permute.xlu0 %2579
  %v2583 = vunpack.c.l.s4 839922192
  %v2584 = vunpack.c.0.s8 %v2583
  %v2585 = vlaneseq
  %v2586 = vshrl.u32 %v2585, 7
  %v2587 = vsub.s32 %v2584, %v2586
  %v2588 = vrot.slane %v2580, %v2587
  %2589 = vset.pattern.permute.xlu0 3
  %2590 = vperm.xlu0 %2589, %v697
  %v2591 = vpop.permute.xlu0 %2590
  %v2594 = vunpack.c.l.s4 839922192
  %v2595 = vunpack.c.0.s8 %v2594
  %v2596 = vlaneseq
  %v2597 = vshrl.u32 %v2596, 7
  %v2598 = vsub.s32 %v2595, %v2597
  %v2599 = vrot.slane %v2591, %v2598
  %2600 = vset.pattern.permute.xlu0 3
  %2601 = vperm.xlu0 %2600, %v698
  %v2602 = vpop.permute.xlu0 %2601
  %v2605 = vunpack.c.l.s4 839922192
  %v2606 = vunpack.c.0.s8 %v2605
  %v2607 = vlaneseq
  %v2608 = vshrl.u32 %v2607, 7
  %v2609 = vsub.s32 %v2606, %v2608
  %v2610 = vrot.slane %v2602, %v2609
  %2611 = vset.pattern.permute.xlu0 3
  %2612 = vperm.xlu0 %2611, %v699
  %v2613 = vpop.permute.xlu0 %2612
  %v2616 = vunpack.c.l.s4 839922192
  %v2617 = vunpack.c.0.s8 %v2616
  %v2618 = vlaneseq
  %v2619 = vshrl.u32 %v2618, 7
  %v2620 = vsub.s32 %v2617, %v2619
  %v2621 = vrot.slane %v2613, %v2620
  %2622 = vset.pattern.permute.xlu0 3
  %2623 = vperm.xlu0 %2622, %v700
  %v2624 = vpop.permute.xlu0 %2623
  %v2627 = vunpack.c.l.s4 839922192
  %v2628 = vunpack.c.0.s8 %v2627
  %v2629 = vlaneseq
  %v2630 = vshrl.u32 %v2629, 7
  %v2631 = vsub.s32 %v2628, %v2630
  %v2632 = vrot.slane %v2624, %v2631
  %2633 = vset.pattern.permute.xlu0 3
  %2634 = vperm.xlu0 %2633, %v701
  %v2635 = vpop.permute.xlu0 %2634
  %v2638 = vunpack.c.l.s4 839922192
  %v2639 = vunpack.c.0.s8 %v2638
  %v2640 = vlaneseq
  %v2641 = vshrl.u32 %v2640, 7
  %v2642 = vsub.s32 %v2639, %v2641
  %v2643 = vrot.slane %v2635, %v2642
  %v2645 = vshll.u32 %v2478, 16
  %v2647 = vrot.slane %v2645, 5
  %v2648 = vshrl.u32 %v2478, 16
  %v2650 = vrot.slane %v2648, 4
  %v2651 = vor.u32 %v2650, %v2647
  %v2652 = vrot.slane %v2651, 4
  %v2654 = vshll.u32 %v2489, 16
  %v2656 = vrot.slane %v2654, 5
  %v2657 = vsel %vm896, %v2652, %v2656
  %v2658 = vshrl.u32 %v2489, 16
  %v2660 = vrot.slane %v2658, 4
  %v2661 = vor.u32 %v2660, %v2656
  %v2662 = vrot.slane %v2661, 4
  %v2664 = vshll.u32 %v2500, 16
  %v2666 = vrot.slane %v2664, 5
  %v2667 = vsel %vm896, %v2662, %v2666
  %v2668 = vshrl.u32 %v2500, 16
  %v2670 = vrot.slane %v2668, 4
  %v2671 = vor.u32 %v2670, %v2666
  %v2672 = vrot.slane %v2671, 4
  %v2674 = vshll.u32 %v2511, 16
  %v2676 = vrot.slane %v2674, 5
  %v2677 = vsel %vm896, %v2672, %v2676
  %v2678 = vshrl.u32 %v2511, 16
  %v2680 = vrot.slane %v2678, 4
  %v2681 = vor.u32 %v2680, %v2676
  %v2682 = vrot.slane %v2681, 4
  %v2684 = vshll.u32 %v2522, 16
  %v2686 = vrot.slane %v2684, 5
  %v2687 = vsel %vm896, %v2682, %v2686
  %v2688 = vshrl.u32 %v2522, 16
  %v2690 = vrot.slane %v2688, 4
  %v2691 = vor.u32 %v2690, %v2686
  %v2692 = vrot.slane %v2691, 4
  %v2694 = vshll.u32 %v2533, 16
  %v2696 = vrot.slane %v2694, 5
  %v2697 = vsel %vm896, %v2692, %v2696
  %v2698 = vshrl.u32 %v2533, 16
  %v2700 = vrot.slane %v2698, 4
  %v2701 = vor.u32 %v2700, %v2696
  %v2702 = vrot.slane %v2701, 4
  %v2704 = vshll.u32 %v2544, 16
  %v2706 = vrot.slane %v2704, 5
  %v2707 = vsel %vm896, %v2702, %v2706
  %v2708 = vshrl.u32 %v2544, 16
  %v2710 = vrot.slane %v2708, 4
  %v2711 = vor.u32 %v2710, %v2706
  %v2712 = vrot.slane %v2711, 4
  %v2714 = vshll.u32 %v2555, 16
  %v2716 = vrot.slane %v2714, 5
  %v2717 = vsel %vm896, %v2712, %v2716
  %v2718 = vshrl.u32 %v2555, 16
  %v2720 = vrot.slane %v2718, 4
  %v2721 = vor.u32 %v2720, %v2716
  %v2722 = vrot.slane %v2721, 4
  %v2724 = vshll.u32 %v2566, 16
  %v2726 = vrot.slane %v2724, 5
  %v2727 = vsel %vm896, %v2722, %v2726
  %v2728 = vshrl.u32 %v2566, 16
  %v2730 = vrot.slane %v2728, 4
  %v2731 = vor.u32 %v2730, %v2726
  %v2732 = vrot.slane %v2731, 4
  %v2734 = vshll.u32 %v2577, 16
  %v2736 = vrot.slane %v2734, 5
  %v2737 = vsel %vm896, %v2732, %v2736
  %v2738 = vshrl.u32 %v2577, 16
  %v2740 = vrot.slane %v2738, 4
  %v2741 = vor.u32 %v2740, %v2736
  %v2742 = vrot.slane %v2741, 4
  %v2744 = vshll.u32 %v2588, 16
  %v2746 = vrot.slane %v2744, 5
  %v2747 = vsel %vm896, %v2742, %v2746
  %v2748 = vshrl.u32 %v2588, 16
  %v2750 = vrot.slane %v2748, 4
  %v2751 = vor.u32 %v2750, %v2746
  %v2752 = vrot.slane %v2751, 4
  %v2754 = vshll.u32 %v2599, 16
  %v2756 = vrot.slane %v2754, 5
  %v2757 = vsel %vm896, %v2752, %v2756
  %v2758 = vshrl.u32 %v2599, 16
  %v2760 = vrot.slane %v2758, 4
  %v2761 = vor.u32 %v2760, %v2756
  %v2762 = vrot.slane %v2761, 4
  %v2764 = vshll.u32 %v2610, 16
  %v2766 = vrot.slane %v2764, 5
  %v2767 = vsel %vm896, %v2762, %v2766
  %v2768 = vshrl.u32 %v2610, 16
  %v2770 = vrot.slane %v2768, 4
  %v2771 = vor.u32 %v2770, %v2766
  %v2772 = vrot.slane %v2771, 4
  %v2774 = vshll.u32 %v2621, 16
  %v2776 = vrot.slane %v2774, 5
  %v2777 = vsel %vm896, %v2772, %v2776
  %v2778 = vshrl.u32 %v2621, 16
  %v2780 = vrot.slane %v2778, 4
  %v2781 = vor.u32 %v2780, %v2776
  %v2782 = vrot.slane %v2781, 4
  %v2784 = vshll.u32 %v2632, 16
  %v2786 = vrot.slane %v2784, 5
  %v2787 = vsel %vm896, %v2782, %v2786
  %v2788 = vshrl.u32 %v2632, 16
  %v2790 = vrot.slane %v2788, 4
  %v2791 = vor.u32 %v2790, %v2786
  %v2792 = vrot.slane %v2791, 4
  %v2794 = vshll.u32 %v2643, 16
  %v2796 = vrot.slane %v2794, 5
  %v2797 = vsel %vm896, %v2792, %v2796
  %v2798 = vshrl.u32 %v2643, 16
  %v2800 = vrot.slane %v2798, 4
  %v2801 = vor.u32 %v2800, %v2796
  %v2802 = vrot.slane %v2801, 4
  %v2820 = vmul.bf16 %v2466, %v2647
  %v2821 = vmul.bf16 %v1840, %v2657
  %v2822 = vmul.bf16 %v1841, %v2667
  %v2823 = vmul.bf16 %v1842, %v2677
  %v2824 = vmul.bf16 %v1843, %v2687
  %v2825 = vmul.bf16 %v1844, %v2697
  %v2826 = vmul.bf16 %v1845, %v2707
  %v2827 = vmul.bf16 %v1846, %v2717
  %v2828 = vmul.bf16 %v1847, %v2727
  %v2829 = vmul.bf16 %v1848, %v2737
  %v2830 = vmul.bf16 %v1849, %v2747
  %v2831 = vmul.bf16 %v1850, %v2757
  %v2832 = vmul.bf16 %v1851, %v2767
  %v2833 = vmul.bf16 %v1852, %v2777
  %v2834 = vmul.bf16 %v1853, %v2787
  %v2835 = vmul.bf16 %v1854, %v2797
  %v2836 = vmul.bf16 %v2467, %v2802
  %s2837 = scalar_lea.vmem %s6, 12
  %v2838 = vld [vmem:[%s2837] sm:$0xf]
  %v2856 = vunpack.c.l.b16 %v2820
  %v2857 = vunpack.c.l.b16 %v2821
  %v2858 = vunpack.c.l.b16 %v2822
  %v2859 = vunpack.c.l.b16 %v2823
  %v2860 = vunpack.c.l.b16 %v2824
  %v2861 = vunpack.c.l.b16 %v2825
  %v2862 = vunpack.c.l.b16 %v2826
  %v2863 = vunpack.c.l.b16 %v2827
  %v2864 = vunpack.c.l.b16 %v2828
  %v2865 = vunpack.c.l.b16 %v2829
  %v2866 = vunpack.c.l.b16 %v2830
  %v2867 = vunpack.c.l.b16 %v2831
  %v2868 = vunpack.c.l.b16 %v2832
  %v2869 = vunpack.c.l.b16 %v2833
  %v2870 = vunpack.c.l.b16 %v2834
  %v2871 = vunpack.c.l.b16 %v2835
  %v2872 = vunpack.c.l.b16 %v2836
  %v2873 = vpack.c.b16 %v2857, %v2856
  %v2874 = vpack.c.b16 %v2859, %v2858
  %v2875 = vpack.c.b16 %v2861, %v2860
  %v2876 = vpack.c.b16 %v2863, %v2862
  %v2877 = vpack.c.b16 %v2865, %v2864
  %v2878 = vpack.c.b16 %v2867, %v2866
  %v2879 = vpack.c.b16 %v2869, %v2868
  %v2880 = vpack.c.b16 %v2871, %v2870
  %v2881 = vpack.c.b16 %v2872, %v2872
  %v2883 = vshrl.u32 %v2873, 16
  %v2885 = vrot.slane %v2883, 3
  %v2886 = vshll.u32 %v2873, 16
  %v2888 = vrot.slane %v2886, 4
  %v2889 = vor.u32 %v2885, %v2888
  %v2891 = vshrl.u32 %v2874, 16
  %v2893 = vrot.slane %v2891, 3
  %v2894 = vshll.u32 %v2874, 16
  %v2896 = vrot.slane %v2894, 4
  %v2897 = vor.u32 %v2893, %v2896
  %v2898 = vsel %vm1134, %v2889, %v2897
  %v2900 = vshrl.u32 %v2875, 16
  %v2902 = vrot.slane %v2900, 3
  %v2903 = vshll.u32 %v2875, 16
  %v2905 = vrot.slane %v2903, 4
  %v2906 = vor.u32 %v2902, %v2905
  %v2907 = vsel %vm1134, %v2897, %v2906
  %v2909 = vshrl.u32 %v2876, 16
  %v2911 = vrot.slane %v2909, 3
  %v2912 = vshll.u32 %v2876, 16
  %v2914 = vrot.slane %v2912, 4
  %v2915 = vor.u32 %v2911, %v2914
  %v2916 = vsel %vm1134, %v2906, %v2915
  %v2918 = vshrl.u32 %v2877, 16
  %v2920 = vrot.slane %v2918, 3
  %v2921 = vshll.u32 %v2877, 16
  %v2923 = vrot.slane %v2921, 4
  %v2924 = vor.u32 %v2920, %v2923
  %v2925 = vsel %vm1134, %v2915, %v2924
  %v2927 = vshrl.u32 %v2878, 16
  %v2929 = vrot.slane %v2927, 3
  %v2930 = vshll.u32 %v2878, 16
  %v2932 = vrot.slane %v2930, 4
  %v2933 = vor.u32 %v2929, %v2932
  %v2934 = vsel %vm1134, %v2924, %v2933
  %v2936 = vshrl.u32 %v2879, 16
  %v2938 = vrot.slane %v2936, 3
  %v2939 = vshll.u32 %v2879, 16
  %v2941 = vrot.slane %v2939, 4
  %v2942 = vor.u32 %v2938, %v2941
  %v2943 = vsel %vm1134, %v2933, %v2942
  %v2945 = vshrl.u32 %v2880, 16
  %v2947 = vrot.slane %v2945, 3
  %v2948 = vshll.u32 %v2880, 16
  %v2950 = vrot.slane %v2948, 4
  %v2951 = vor.u32 %v2947, %v2950
  %v2952 = vsel %vm1134, %v2942, %v2951
  %v2954 = vshrl.u32 %v2881, 16
  %v2956 = vrot.slane %v2954, 3
  %v2957 = vshll.u32 %v2881, 16
  %v2959 = vrot.slane %v2957, 4
  %v2960 = vor.u32 %v2956, %v2959
  %v2961 = vsel %vm1134, %v2951, %v2960
  %v2963 = vsel %vm1215, %v2898, 0
  %v2966 = vsel %vm1215, %v2907, 0
  %v2969 = vsel %vm1215, %v2916, 0
  %v2972 = vsel %vm1215, %v2925, 0
  %v2975 = vsel %vm1215, %v2934, 0
  %v2978 = vsel %vm1215, %v2943, 0
  %v2981 = vsel %vm1215, %v2952, 0
  %v2984 = vsel %vm1215, %v2961, 0
  %v2987 = vsel %vm1240, %v2838, 0
  %2989 = vmatprep.subr.bf16.mxu0 0
  %2990 = vmatpush1.bf16.msra.mxu0 0
  %2991 = vmatprep.subr.bf16.mxu0 0
  %2992 = vmatpush1.bf16.msra.mxu0 0
  %2993 = vmatprep.subr.bf16.mxu0 0
  %2994 = vmatpush1.bf16.msra.mxu0 0
  %2995 = vmatprep.subr.bf16.mxu0 0
  %2996 = vmatpush1.bf16.msra.mxu0 0
  %2997 = vmatprep.subr.bf16.mxu0 0
  %2998 = vmatpush1.bf16.msra.mxu0 0
  %2999 = vmatprep.subr.bf16.mxu0 0
  %3000 = vmatpush1.bf16.msra.mxu0 0
  %3001 = vmatprep.subr.bf16.mxu0 0
  %3002 = vmatpush1.bf16.msra.mxu0 0
  %3003 = vmatprep.subr.bf16.mxu0 0
  %3004 = vmatpush1.bf16.msra.mxu0 %v2987
  %3005 = vmatprep.subr.bf16.mxu0 0
  %3006 = vmatpush2.bf16.msra.mxu0 0
  %3007 = vmatprep.subr.bf16.mxu0 0
  %3008 = vmatpush2.bf16.msra.mxu0 0
  %3009 = vmatprep.subr.bf16.mxu0 0
  %3010 = vmatpush2.bf16.msra.mxu0 0
  %3011 = vmatprep.subr.bf16.mxu0 0
  %3012 = vmatpush2.bf16.msra.mxu0 0
  %3013 = vmatprep.subr.bf16.mxu0 0
  %3014 = vmatpush2.bf16.msra.mxu0 0
  %3015 = vmatprep.subr.bf16.mxu0 0
  %3016 = vmatpush2.bf16.msra.mxu0 0
  %3017 = vmatprep.subr.bf16.mxu0 0
  %3018 = vmatpush2.bf16.msra.mxu0 0
  %3019 = vmatprep.subr.bf16.mxu0 0
  %3020 = vmatpush2.bf16.msra.mxu0 0
  %3021 = vmatprep.mubr.bf16.mxu0 0
  %3022 = vmatmul.mubr.bf16.gmra.mxu0 %v2963
  %v3023 = vpop.f32.mrf.mxu0
  %v3024 = vadd.f32 0.0, %v3023
  %v3025 = vpop.f32.mrf.mxu0
  %v3026 = vpop.f32.mrf.mxu0
  %v3027 = vadd.f32 0.0, %v3026
  %v3028 = vpop.f32.mrf.mxu0
  %3029 = vmatprep.mubr.bf16.mxu0 0
  %3030 = vmatmul.mubr.bf16.gmra.mxu0 %v2966
  %v3031 = vpop.f32.mrf.mxu0
  %v3032 = vadd.f32 0.0, %v3031
  %v3033 = vpop.f32.mrf.mxu0
  %v3034 = vpop.f32.mrf.mxu0
  %v3035 = vadd.f32 0.0, %v3034
  %v3036 = vpop.f32.mrf.mxu0
  %3037 = vmatprep.mubr.bf16.mxu0 0
  %3038 = vmatmul.mubr.bf16.gmra.mxu0 %v2969
  %v3039 = vpop.f32.mrf.mxu0
  %v3040 = vadd.f32 0.0, %v3039
  %v3041 = vpop.f32.mrf.mxu0
  %v3042 = vpop.f32.mrf.mxu0
  %v3043 = vadd.f32 0.0, %v3042
  %v3044 = vpop.f32.mrf.mxu0
  %3045 = vmatprep.mubr.bf16.mxu0 0
  %3046 = vmatmul.mubr.bf16.gmra.mxu0 %v2972
  %v3047 = vpop.f32.mrf.mxu0
  %v3048 = vadd.f32 0.0, %v3047
  %v3049 = vpop.f32.mrf.mxu0
  %v3050 = vpop.f32.mrf.mxu0
  %v3051 = vadd.f32 0.0, %v3050
  %v3052 = vpop.f32.mrf.mxu0
  %3053 = vmatprep.mubr.bf16.mxu0 0
  %3054 = vmatmul.mubr.bf16.gmra.mxu0 %v2975
  %v3055 = vpop.f32.mrf.mxu0
  %v3056 = vadd.f32 0.0, %v3055
  %v3057 = vpop.f32.mrf.mxu0
  %v3058 = vpop.f32.mrf.mxu0
  %v3059 = vadd.f32 0.0, %v3058
  %v3060 = vpop.f32.mrf.mxu0
  %3061 = vmatprep.mubr.bf16.mxu0 0
  %3062 = vmatmul.mubr.bf16.gmra.mxu0 %v2978
  %v3063 = vpop.f32.mrf.mxu0
  %v3064 = vadd.f32 0.0, %v3063
  %v3065 = vpop.f32.mrf.mxu0
  %v3066 = vpop.f32.mrf.mxu0
  %v3067 = vadd.f32 0.0, %v3066
  %v3068 = vpop.f32.mrf.mxu0
  %3069 = vmatprep.mubr.bf16.mxu0 0
  %3070 = vmatmul.mubr.bf16.gmra.mxu0 %v2981
  %v3071 = vpop.f32.mrf.mxu0
  %v3072 = vadd.f32 0.0, %v3071
  %v3073 = vpop.f32.mrf.mxu0
  %v3074 = vpop.f32.mrf.mxu0
  %v3075 = vadd.f32 0.0, %v3074
  %v3076 = vpop.f32.mrf.mxu0
  %3077 = vmatprep.mubr.bf16.mxu0 0
  %3078 = vmatmul.mubr.bf16.gmra.mxu0 %v2984
  %v3079 = vpop.f32.mrf.mxu0
  %v3080 = vadd.f32 0.0, %v3079
  %v3081 = vpop.f32.mrf.mxu0
  %v3082 = vpop.f32.mrf.mxu0
  %v3083 = vadd.f32 0.0, %v3082
  %v3084 = vpop.f32.mrf.mxu0
  %3085 = vdwg.mxu0
  %v3086 = vadd.f32 %v2450, %v3024
  %v3087 = vadd.f32 %v2451, %v3027
  %v3088 = vadd.f32 %v2452, %v3032
  %v3089 = vadd.f32 %v2453, %v3035
  %v3090 = vadd.f32 %v2454, %v3040
  %v3091 = vadd.f32 %v2455, %v3043
  %v3092 = vadd.f32 %v2456, %v3048
  %v3093 = vadd.f32 %v2457, %v3051
  %v3094 = vadd.f32 %v2458, %v3056
  %v3095 = vadd.f32 %v2459, %v3059
  %v3096 = vadd.f32 %v2460, %v3064
  %v3097 = vadd.f32 %v2461, %v3067
  %v3098 = vadd.f32 %v2462, %v3072
  %v3099 = vadd.f32 %v2463, %v3075
  %v3100 = vadd.f32 %v2464, %v3080
  %v3101 = vadd.f32 %v2465, %v3083
  %v3102 = vld [vmem:[#allocation2 + $0x8] sm:$0xf]
  %v3103 = vld [vmem:[#allocation2 + $0xc] sm:$0xf]
  %v3104 = vld [vmem:[#allocation2 + $0x10] sm:$0xf]
  %v3105 = vld [vmem:[#allocation2 + $0x14] sm:$0xf]
  %v3106 = vld [vmem:[#allocation2 + $0x18] sm:$0xf]
  %v3107 = vld [vmem:[#allocation2 + $0x1c] sm:$0xf]
  %v3108 = vld [vmem:[#allocation2 + $0x20] sm:$0xf]
  %v3109 = vld [vmem:[#allocation2 + $0x24] sm:$0xf]
  %v3110 = vld [vmem:[#allocation2 + $0x28] sm:$0xf]
  %v3111 = vld [vmem:[#allocation2 + $0x2c] sm:$0xf]
  %v3112 = vld [vmem:[#allocation2 + $0x30] sm:$0xf]
  %v3113 = vld [vmem:[#allocation2 + $0x34] sm:$0xf]
  %v3114 = vld [vmem:[#allocation2 + $0x38] sm:$0xf]
  %v3115 = vld [vmem:[#allocation2 + $0x3c] sm:$0xf]
  %v3116 = vld [vmem:[#allocation2 + $0x40] sm:$0xf]
  %v3117 = vld [vmem:[#allocation2 + $0x44] sm:$0xf]
  %v3118 = vld [vmem:[#allocation2 + $0x48] sm:$0x1]
  %3119 = vset.pattern.permute.xlu0 5
  %3120 = vperm.xlu0 %3119, %v686
  %v3121 = vpop.permute.xlu0 %3120
  %v3124 = vunpack.c.l.s4 839922192
  %v3125 = vunpack.c.0.s8 %v3124
  %v3126 = vlaneseq
  %v3127 = vshrl.u32 %v3126, 7
  %v3128 = vsub.s32 %v3125, %v3127
  %v3129 = vrot.slane %v3121, %v3128
  %3130 = vset.pattern.permute.xlu0 5
  %3131 = vperm.xlu0 %3130, %v687
  %v3132 = vpop.permute.xlu0 %3131
  %v3135 = vunpack.c.l.s4 839922192
  %v3136 = vunpack.c.0.s8 %v3135
  %v3137 = vlaneseq
  %v3138 = vshrl.u32 %v3137, 7
  %v3139 = vsub.s32 %v3136, %v3138
  %v3140 = vrot.slane %v3132, %v3139
  %3141 = vset.pattern.permute.xlu0 5
  %3142 = vperm.xlu0 %3141, %v688
  %v3143 = vpop.permute.xlu0 %3142
  %v3146 = vunpack.c.l.s4 839922192
  %v3147 = vunpack.c.0.s8 %v3146
  %v3148 = vlaneseq
  %v3149 = vshrl.u32 %v3148, 7
  %v3150 = vsub.s32 %v3147, %v3149
  %v3151 = vrot.slane %v3143, %v3150
  %3152 = vset.pattern.permute.xlu0 5
  %3153 = vperm.xlu0 %3152, %v689
  %v3154 = vpop.permute.xlu0 %3153
  %v3157 = vunpack.c.l.s4 839922192
  %v3158 = vunpack.c.0.s8 %v3157
  %v3159 = vlaneseq
  %v3160 = vshrl.u32 %v3159, 7
  %v3161 = vsub.s32 %v3158, %v3160
  %v3162 = vrot.slane %v3154, %v3161
  %3163 = vset.pattern.permute.xlu0 5
  %3164 = vperm.xlu0 %3163, %v690
  %v3165 = vpop.permute.xlu0 %3164
  %v3168 = vunpack.c.l.s4 839922192
  %v3169 = vunpack.c.0.s8 %v3168
  %v3170 = vlaneseq
  %v3171 = vshrl.u32 %v3170, 7
  %v3172 = vsub.s32 %v3169, %v3171
  %v3173 = vrot.slane %v3165, %v3172
  %3174 = vset.pattern.permute.xlu0 5
  %3175 = vperm.xlu0 %3174, %v691
  %v3176 = vpop.permute.xlu0 %3175
  %v3179 = vunpack.c.l.s4 839922192
  %v3180 = vunpack.c.0.s8 %v3179
  %v3181 = vlaneseq
  %v3182 = vshrl.u32 %v3181, 7
  %v3183 = vsub.s32 %v3180, %v3182
  %v3184 = vrot.slane %v3176, %v3183
  %3185 = vset.pattern.permute.xlu0 5
  %3186 = vperm.xlu0 %3185, %v692
  %v3187 = vpop.permute.xlu0 %3186
  %v3190 = vunpack.c.l.s4 839922192
  %v3191 = vunpack.c.0.s8 %v3190
  %v3192 = vlaneseq
  %v3193 = vshrl.u32 %v3192, 7
  %v3194 = vsub.s32 %v3191, %v3193
  %v3195 = vrot.slane %v3187, %v3194
  %3196 = vset.pattern.permute.xlu0 5
  %3197 = vperm.xlu0 %3196, %v693
  %v3198 = vpop.permute.xlu0 %3197
  %v3201 = vunpack.c.l.s4 839922192
  %v3202 = vunpack.c.0.s8 %v3201
  %v3203 = vlaneseq
  %v3204 = vshrl.u32 %v3203, 7
  %v3205 = vsub.s32 %v3202, %v3204
  %v3206 = vrot.slane %v3198, %v3205
  %3207 = vset.pattern.permute.xlu0 5
  %3208 = vperm.xlu0 %3207, %v694
  %v3209 = vpop.permute.xlu0 %3208
  %v3212 = vunpack.c.l.s4 839922192
  %v3213 = vunpack.c.0.s8 %v3212
  %v3214 = vlaneseq
  %v3215 = vshrl.u32 %v3214, 7
  %v3216 = vsub.s32 %v3213, %v3215
  %v3217 = vrot.slane %v3209, %v3216
  %3218 = vset.pattern.permute.xlu0 5
  %3219 = vperm.xlu0 %3218, %v695
  %v3220 = vpop.permute.xlu0 %3219
  %v3223 = vunpack.c.l.s4 839922192
  %v3224 = vunpack.c.0.s8 %v3223
  %v3225 = vlaneseq
  %v3226 = vshrl.u32 %v3225, 7
  %v3227 = vsub.s32 %v3224, %v3226
  %v3228 = vrot.slane %v3220, %v3227
  %3229 = vset.pattern.permute.xlu0 5
  %3230 = vperm.xlu0 %3229, %v696
  %v3231 = vpop.permute.xlu0 %3230
  %v3234 = vunpack.c.l.s4 839922192
  %v3235 = vunpack.c.0.s8 %v3234
  %v3236 = vlaneseq
  %v3237 = vshrl.u32 %v3236, 7
  %v3238 = vsub.s32 %v3235, %v3237
  %v3239 = vrot.slane %v3231, %v3238
  %3240 = vset.pattern.permute.xlu0 5
  %3241 = vperm.xlu0 %3240, %v697
  %v3242 = vpop.permute.xlu0 %3241
  %v3245 = vunpack.c.l.s4 839922192
  %v3246 = vunpack.c.0.s8 %v3245
  %v3247 = vlaneseq
  %v3248 = vshrl.u32 %v3247, 7
  %v3249 = vsub.s32 %v3246, %v3248
  %v3250 = vrot.slane %v3242, %v3249
  %3251 = vset.pattern.permute.xlu0 5
  %3252 = vperm.xlu0 %3251, %v698
  %v3253 = vpop.permute.xlu0 %3252
  %v3256 = vunpack.c.l.s4 839922192
  %v3257 = vunpack.c.0.s8 %v3256
  %v3258 = vlaneseq
  %v3259 = vshrl.u32 %v3258, 7
  %v3260 = vsub.s32 %v3257, %v3259
  %v3261 = vrot.slane %v3253, %v3260
  %3262 = vset.pattern.permute.xlu0 5
  %3263 = vperm.xlu0 %3262, %v699
  %v3264 = vpop.permute.xlu0 %3263
  %v3267 = vunpack.c.l.s4 839922192
  %v3268 = vunpack.c.0.s8 %v3267
  %v3269 = vlaneseq
  %v3270 = vshrl.u32 %v3269, 7
  %v3271 = vsub.s32 %v3268, %v3270
  %v3272 = vrot.slane %v3264, %v3271
  %3273 = vset.pattern.permute.xlu0 5
  %3274 = vperm.xlu0 %3273, %v700
  %v3275 = vpop.permute.xlu0 %3274
  %v3278 = vunpack.c.l.s4 839922192
  %v3279 = vunpack.c.0.s8 %v3278
  %v3280 = vlaneseq
  %v3281 = vshrl.u32 %v3280, 7
  %v3282 = vsub.s32 %v3279, %v3281
  %v3283 = vrot.slane %v3275, %v3282
  %3284 = vset.pattern.permute.xlu0 5
  %3285 = vperm.xlu0 %3284, %v701
  %v3286 = vpop.permute.xlu0 %3285
  %v3289 = vunpack.c.l.s4 839922192
  %v3290 = vunpack.c.0.s8 %v3289
  %v3291 = vlaneseq
  %v3292 = vshrl.u32 %v3291, 7
  %v3293 = vsub.s32 %v3290, %v3292
  %v3294 = vrot.slane %v3286, %v3293
  %v3296 = vshrl.u32 %v3129, 16
  %v3298 = vrot.slane %v3296, 7
  %v3299 = vshll.u32 %v3129, 16
  %v3301 = vor.u32 %v3298, %v3299
  %v3302 = vrot.slane %v3298, 4
  %v3304 = vshrl.u32 %v3140, 16
  %v3306 = vrot.slane %v3304, 7
  %v3307 = vshll.u32 %v3140, 16
  %v3309 = vor.u32 %v3306, %v3307
  %v3310 = vsel %vm2034, %v3302, %v3309
  %v3311 = vrot.slane %v3306, 4
  %v3313 = vshrl.u32 %v3151, 16
  %v3315 = vrot.slane %v3313, 7
  %v3316 = vshll.u32 %v3151, 16
  %v3318 = vor.u32 %v3315, %v3316
  %v3319 = vsel %vm2034, %v3311, %v3318
  %v3320 = vrot.slane %v3315, 4
  %v3322 = vshrl.u32 %v3162, 16
  %v3324 = vrot.slane %v3322, 7
  %v3325 = vshll.u32 %v3162, 16
  %v3327 = vor.u32 %v3324, %v3325
  %v3328 = vsel %vm2034, %v3320, %v3327
  %v3329 = vrot.slane %v3324, 4
  %v3331 = vshrl.u32 %v3173, 16
  %v3333 = vrot.slane %v3331, 7
  %v3334 = vshll.u32 %v3173, 16
  %v3336 = vor.u32 %v3333, %v3334
  %v3337 = vsel %vm2034, %v3329, %v3336
  %v3338 = vrot.slane %v3333, 4
  %v3340 = vshrl.u32 %v3184, 16
  %v3342 = vrot.slane %v3340, 7
  %v3343 = vshll.u32 %v3184, 16
  %v3345 = vor.u32 %v3342, %v3343
  %v3346 = vsel %vm2034, %v3338, %v3345
  %v3347 = vrot.slane %v3342, 4
  %v3349 = vshrl.u32 %v3195, 16
  %v3351 = vrot.slane %v3349, 7
  %v3352 = vshll.u32 %v3195, 16
  %v3354 = vor.u32 %v3351, %v3352
  %v3355 = vsel %vm2034, %v3347, %v3354
  %v3356 = vrot.slane %v3351, 4
  %v3358 = vshrl.u32 %v3206, 16
  %v3360 = vrot.slane %v3358, 7
  %v3361 = vshll.u32 %v3206, 16
  %v3363 = vor.u32 %v3360, %v3361
  %v3364 = vsel %vm2034, %v3356, %v3363
  %v3365 = vrot.slane %v3360, 4
  %v3367 = vshrl.u32 %v3217, 16
  %v3369 = vrot.slane %v3367, 7
  %v3370 = vshll.u32 %v3217, 16
  %v3372 = vor.u32 %v3369, %v3370
  %v3373 = vsel %vm2034, %v3365, %v3372
  %v3374 = vrot.slane %v3369, 4
  %v3376 = vshrl.u32 %v3228, 16
  %v3378 = vrot.slane %v3376, 7
  %v3379 = vshll.u32 %v3228, 16
  %v3381 = vor.u32 %v3378, %v3379
  %v3382 = vsel %vm2034, %v3374, %v3381
  %v3383 = vrot.slane %v3378, 4
  %v3385 = vshrl.u32 %v3239, 16
  %v3387 = vrot.slane %v3385, 7
  %v3388 = vshll.u32 %v3239, 16
  %v3390 = vor.u32 %v3387, %v3388
  %v3391 = vsel %vm2034, %v3383, %v3390
  %v3392 = vrot.slane %v3387, 4
  %v3394 = vshrl.u32 %v3250, 16
  %v3396 = vrot.slane %v3394, 7
  %v3397 = vshll.u32 %v3250, 16
  %v3399 = vor.u32 %v3396, %v3397
  %v3400 = vsel %vm2034, %v3392, %v3399
  %v3401 = vrot.slane %v3396, 4
  %v3403 = vshrl.u32 %v3261, 16
  %v3405 = vrot.slane %v3403, 7
  %v3406 = vshll.u32 %v3261, 16
  %v3408 = vor.u32 %v3405, %v3406
  %v3409 = vsel %vm2034, %v3401, %v3408
  %v3410 = vrot.slane %v3405, 4
  %v3412 = vshrl.u32 %v3272, 16
  %v3414 = vrot.slane %v3412, 7
  %v3415 = vshll.u32 %v3272, 16
  %v3417 = vor.u32 %v3414, %v3415
  %v3418 = vsel %vm2034, %v3410, %v3417
  %v3419 = vrot.slane %v3414, 4
  %v3421 = vshrl.u32 %v3283, 16
  %v3423 = vrot.slane %v3421, 7
  %v3424 = vshll.u32 %v3283, 16
  %v3426 = vor.u32 %v3423, %v3424
  %v3427 = vsel %vm2034, %v3419, %v3426
  %v3428 = vrot.slane %v3423, 4
  %v3430 = vshrl.u32 %v3294, 16
  %v3432 = vrot.slane %v3430, 7
  %v3433 = vshll.u32 %v3294, 16
  %v3435 = vor.u32 %v3432, %v3433
  %v3436 = vsel %vm2034, %v3428, %v3435
  %v3437 = vrot.slane %v3432, 4
  %v3455 = vmul.bf16 %v3102, %v3301
  %v3456 = vmul.bf16 %v3103, %v3310
  %v3457 = vmul.bf16 %v3104, %v3319
  %v3458 = vmul.bf16 %v3105, %v3328
  %v3459 = vmul.bf16 %v3106, %v3337
  %v3460 = vmul.bf16 %v3107, %v3346
  %v3461 = vmul.bf16 %v3108, %v3355
  %v3462 = vmul.bf16 %v3109, %v3364
  %v3463 = vmul.bf16 %v3110, %v3373
  %v3464 = vmul.bf16 %v3111, %v3382
  %v3465 = vmul.bf16 %v3112, %v3391
  %v3466 = vmul.bf16 %v3113, %v3400
  %v3467 = vmul.bf16 %v3114, %v3409
  %v3468 = vmul.bf16 %v3115, %v3418
  %v3469 = vmul.bf16 %v3116, %v3427
  %v3470 = vmul.bf16 %v3117, %v3436
  %v3471 = vmul.bf16 %v3118, %v3437
  %s3472 = scalar_lea.vmem %s6, 20
  %v3473 = vld [vmem:[%s3472] sm:$0xf]
  %v3491 = vunpack.c.l.b16 %v3455
  %v3492 = vunpack.c.l.b16 %v3456
  %v3493 = vunpack.c.l.b16 %v3457
  %v3494 = vunpack.c.l.b16 %v3458
  %v3495 = vunpack.c.l.b16 %v3459
  %v3496 = vunpack.c.l.b16 %v3460
  %v3497 = vunpack.c.l.b16 %v3461
  %v3498 = vunpack.c.l.b16 %v3462
  %v3499 = vunpack.c.l.b16 %v3463
  %v3500 = vunpack.c.l.b16 %v3464
  %v3501 = vunpack.c.l.b16 %v3465
  %v3502 = vunpack.c.l.b16 %v3466
  %v3503 = vunpack.c.l.b16 %v3467
  %v3504 = vunpack.c.l.b16 %v3468
  %v3505 = vunpack.c.l.b16 %v3469
  %v3506 = vunpack.c.l.b16 %v3470
  %v3507 = vunpack.c.l.b16 %v3471
  %v3508 = vpack.c.b16 %v3492, %v3491
  %v3509 = vpack.c.b16 %v3494, %v3493
  %v3510 = vpack.c.b16 %v3496, %v3495
  %v3511 = vpack.c.b16 %v3498, %v3497
  %v3512 = vpack.c.b16 %v3500, %v3499
  %v3513 = vpack.c.b16 %v3502, %v3501
  %v3514 = vpack.c.b16 %v3504, %v3503
  %v3515 = vpack.c.b16 %v3506, %v3505
  %v3516 = vpack.c.b16 %v3507, %v3507
  %v3518 = vshrl.u32 %v3508, 16
  %v3520 = vshll.u32 %v3508, 16
  %v3522 = vrot.slane %v3520, 1
  %v3523 = vor.u32 %v3518, %v3522
  %v3525 = vshll.u32 %v3509, 16
  %v3527 = vrot.slane %v3525, 1
  %v3528 = vsel %vm2257, %v3523, %v3527
  %v3529 = vshrl.u32 %v3509, 16
  %v3531 = vor.u32 %v3529, %v3527
  %v3533 = vshll.u32 %v3510, 16
  %v3535 = vrot.slane %v3533, 1
  %v3536 = vsel %vm2257, %v3531, %v3535
  %v3537 = vshrl.u32 %v3510, 16
  %v3539 = vor.u32 %v3537, %v3535
  %v3541 = vshll.u32 %v3511, 16
  %v3543 = vrot.slane %v3541, 1
  %v3544 = vsel %vm2257, %v3539, %v3543
  %v3545 = vshrl.u32 %v3511, 16
  %v3547 = vor.u32 %v3545, %v3543
  %v3549 = vshll.u32 %v3512, 16
  %v3551 = vrot.slane %v3549, 1
  %v3552 = vsel %vm2257, %v3547, %v3551
  %v3553 = vshrl.u32 %v3512, 16
  %v3555 = vor.u32 %v3553, %v3551
  %v3557 = vshll.u32 %v3513, 16
  %v3559 = vrot.slane %v3557, 1
  %v3560 = vsel %vm2257, %v3555, %v3559
  %v3561 = vshrl.u32 %v3513, 16
  %v3563 = vor.u32 %v3561, %v3559
  %v3565 = vshll.u32 %v3514, 16
  %v3567 = vrot.slane %v3565, 1
  %v3568 = vsel %vm2257, %v3563, %v3567
  %v3569 = vshrl.u32 %v3514, 16
  %v3571 = vor.u32 %v3569, %v3567
  %v3573 = vshll.u32 %v3515, 16
  %v3575 = vrot.slane %v3573, 1
  %v3576 = vsel %vm2257, %v3571, %v3575
  %v3577 = vshrl.u32 %v3515, 16
  %v3579 = vor.u32 %v3577, %v3575
  %v3581 = vshll.u32 %v3516, 16
  %v3583 = vrot.slane %v3581, 1
  %v3584 = vsel %vm2257, %v3579, %v3583
  %v3586 = vsel %vm1215, %v3528, 0
  %v3589 = vsel %vm1215, %v3536, 0
  %v3592 = vsel %vm1215, %v3544, 0
  %v3595 = vsel %vm1215, %v3552, 0
  %v3598 = vsel %vm1215, %v3560, 0
  %v3601 = vsel %vm1215, %v3568, 0
  %v3604 = vsel %vm1215, %v3576, 0
  %v3607 = vsel %vm1215, %v3584, 0
  %v3610 = vsel %vm1240, %v3473, 0
  %3612 = vmatprep.subr.bf16.mxu0 0
  %3613 = vmatpush1.bf16.msra.mxu0 0
  %3614 = vmatprep.subr.bf16.mxu0 0
  %3615 = vmatpush1.bf16.msra.mxu0 0
  %3616 = vmatprep.subr.bf16.mxu0 0
  %3617 = vmatpush1.bf16.msra.mxu0 0
  %3618 = vmatprep.subr.bf16.mxu0 0
  %3619 = vmatpush1.bf16.msra.mxu0 0
  %3620 = vmatprep.subr.bf16.mxu0 0
  %3621 = vmatpush1.bf16.msra.mxu0 0
  %3622 = vmatprep.subr.bf16.mxu0 0
  %3623 = vmatpush1.bf16.msra.mxu0 0
  %3624 = vmatprep.subr.bf16.mxu0 0
  %3625 = vmatpush1.bf16.msra.mxu0 0
  %3626 = vmatprep.subr.bf16.mxu0 0
  %3627 = vmatpush1.bf16.msra.mxu0 %v3610
  %3628 = vmatprep.subr.bf16.mxu0 0
  %3629 = vmatpush2.bf16.msra.mxu0 0
  %3630 = vmatprep.subr.bf16.mxu0 0
  %3631 = vmatpush2.bf16.msra.mxu0 0
  %3632 = vmatprep.subr.bf16.mxu0 0
  %3633 = vmatpush2.bf16.msra.mxu0 0
  %3634 = vmatprep.subr.bf16.mxu0 0
  %3635 = vmatpush2.bf16.msra.mxu0 0
  %3636 = vmatprep.subr.bf16.mxu0 0
  %3637 = vmatpush2.bf16.msra.mxu0 0
  %3638 = vmatprep.subr.bf16.mxu0 0
  %3639 = vmatpush2.bf16.msra.mxu0 0
  %3640 = vmatprep.subr.bf16.mxu0 0
  %3641 = vmatpush2.bf16.msra.mxu0 0
  %3642 = vmatprep.subr.bf16.mxu0 0
  %3643 = vmatpush2.bf16.msra.mxu0 0
  %3644 = vmatprep.mubr.bf16.mxu0 0
  %3645 = vmatmul.mubr.bf16.gmra.mxu0 %v3586
  %v3646 = vpop.f32.mrf.mxu0
  %v3647 = vadd.f32 0.0, %v3646
  %v3648 = vpop.f32.mrf.mxu0
  %v3649 = vpop.f32.mrf.mxu0
  %v3650 = vadd.f32 0.0, %v3649
  %v3651 = vpop.f32.mrf.mxu0
  %3652 = vmatprep.mubr.bf16.mxu0 0
  %3653 = vmatmul.mubr.bf16.gmra.mxu0 %v3589
  %v3654 = vpop.f32.mrf.mxu0
  %v3655 = vadd.f32 0.0, %v3654
  %v3656 = vpop.f32.mrf.mxu0
  %v3657 = vpop.f32.mrf.mxu0
  %v3658 = vadd.f32 0.0, %v3657
  %v3659 = vpop.f32.mrf.mxu0
  %3660 = vmatprep.mubr.bf16.mxu0 0
  %3661 = vmatmul.mubr.bf16.gmra.mxu0 %v3592
  %v3662 = vpop.f32.mrf.mxu0
  %v3663 = vadd.f32 0.0, %v3662
  %v3664 = vpop.f32.mrf.mxu0
  %v3665 = vpop.f32.mrf.mxu0
  %v3666 = vadd.f32 0.0, %v3665
  %v3667 = vpop.f32.mrf.mxu0
  %3668 = vmatprep.mubr.bf16.mxu0 0
  %3669 = vmatmul.mubr.bf16.gmra.mxu0 %v3595
  %v3670 = vpop.f32.mrf.mxu0
  %v3671 = vadd.f32 0.0, %v3670
  %v3672 = vpop.f32.mrf.mxu0
  %v3673 = vpop.f32.mrf.mxu0
  %v3674 = vadd.f32 0.0, %v3673
  %v3675 = vpop.f32.mrf.mxu0
  %3676 = vmatprep.mubr.bf16.mxu0 0
  %3677 = vmatmul.mubr.bf16.gmra.mxu0 %v3598
  %v3678 = vpop.f32.mrf.mxu0
  %v3679 = vadd.f32 0.0, %v3678
  %v3680 = vpop.f32.mrf.mxu0
  %v3681 = vpop.f32.mrf.mxu0
  %v3682 = vadd.f32 0.0, %v3681
  %v3683 = vpop.f32.mrf.mxu0
  %3684 = vmatprep.mubr.bf16.mxu0 0
  %3685 = vmatmul.mubr.bf16.gmra.mxu0 %v3601
  %v3686 = vpop.f32.mrf.mxu0
  %v3687 = vadd.f32 0.0, %v3686
  %v3688 = vpop.f32.mrf.mxu0
  %v3689 = vpop.f32.mrf.mxu0
  %v3690 = vadd.f32 0.0, %v3689
  %v3691 = vpop.f32.mrf.mxu0
  %3692 = vmatprep.mubr.bf16.mxu0 0
  %3693 = vmatmul.mubr.bf16.gmra.mxu0 %v3604
  %v3694 = vpop.f32.mrf.mxu0
  %v3695 = vadd.f32 0.0, %v3694
  %v3696 = vpop.f32.mrf.mxu0
  %v3697 = vpop.f32.mrf.mxu0
  %v3698 = vadd.f32 0.0, %v3697
  %v3699 = vpop.f32.mrf.mxu0
  %3700 = vmatprep.mubr.bf16.mxu0 0
  %3701 = vmatmul.mubr.bf16.gmra.mxu0 %v3607
  %v3702 = vpop.f32.mrf.mxu0
  %v3703 = vadd.f32 0.0, %v3702
  %v3704 = vpop.f32.mrf.mxu0
  %v3705 = vpop.f32.mrf.mxu0
  %v3706 = vadd.f32 0.0, %v3705
  %v3707 = vpop.f32.mrf.mxu0
  %3708 = vdwg.mxu0
  %v3709 = vadd.f32 %v3086, %v3647
  %v3710 = vadd.f32 %v3087, %v3650
  %v3711 = vadd.f32 %v3088, %v3655
  %v3712 = vadd.f32 %v3089, %v3658
  %v3713 = vadd.f32 %v3090, %v3663
  %v3714 = vadd.f32 %v3091, %v3666
  %v3715 = vadd.f32 %v3092, %v3671
  %v3716 = vadd.f32 %v3093, %v3674
  %v3717 = vadd.f32 %v3094, %v3679
  %v3718 = vadd.f32 %v3095, %v3682
  %v3719 = vadd.f32 %v3096, %v3687
  %v3720 = vadd.f32 %v3097, %v3690
  %v3721 = vadd.f32 %v3098, %v3695
  %v3722 = vadd.f32 %v3099, %v3698
  %v3723 = vadd.f32 %v3100, %v3703
  %v3724 = vadd.f32 %v3101, %v3706
  %v3725 = vld [vmem:[#allocation2 + $0x8] sm:$0x8]
  %v3726 = vld [vmem:[#allocation2 + $0x48] sm:$0xf]
  %3727 = vset.pattern.permute.xlu0 6
  %3728 = vperm.xlu0 %3727, %v686
  %v3729 = vpop.permute.xlu0 %3728
  %v3732 = vunpack.c.l.s4 839922192
  %v3733 = vunpack.c.0.s8 %v3732
  %v3734 = vlaneseq
  %v3735 = vshrl.u32 %v3734, 7
  %v3736 = vsub.s32 %v3733, %v3735
  %v3737 = vrot.slane %v3729, %v3736
  %3738 = vset.pattern.permute.xlu0 6
  %3739 = vperm.xlu0 %3738, %v687
  %v3740 = vpop.permute.xlu0 %3739
  %v3743 = vunpack.c.l.s4 839922192
  %v3744 = vunpack.c.0.s8 %v3743
  %v3745 = vlaneseq
  %v3746 = vshrl.u32 %v3745, 7
  %v3747 = vsub.s32 %v3744, %v3746
  %v3748 = vrot.slane %v3740, %v3747
  %3749 = vset.pattern.permute.xlu0 6
  %3750 = vperm.xlu0 %3749, %v688
  %v3751 = vpop.permute.xlu0 %3750
  %v3754 = vunpack.c.l.s4 839922192
  %v3755 = vunpack.c.0.s8 %v3754
  %v3756 = vlaneseq
  %v3757 = vshrl.u32 %v3756, 7
  %v3758 = vsub.s32 %v3755, %v3757
  %v3759 = vrot.slane %v3751, %v3758
  %3760 = vset.pattern.permute.xlu0 6
  %3761 = vperm.xlu0 %3760, %v689
  %v3762 = vpop.permute.xlu0 %3761
  %v3765 = vunpack.c.l.s4 839922192
  %v3766 = vunpack.c.0.s8 %v3765
  %v3767 = vlaneseq
  %v3768 = vshrl.u32 %v3767, 7
  %v3769 = vsub.s32 %v3766, %v3768
  %v3770 = vrot.slane %v3762, %v3769
  %3771 = vset.pattern.permute.xlu0 6
  %3772 = vperm.xlu0 %3771, %v690
  %v3773 = vpop.permute.xlu0 %3772
  %v3776 = vunpack.c.l.s4 839922192
  %v3777 = vunpack.c.0.s8 %v3776
  %v3778 = vlaneseq
  %v3779 = vshrl.u32 %v3778, 7
  %v3780 = vsub.s32 %v3777, %v3779
  %v3781 = vrot.slane %v3773, %v3780
  %3782 = vset.pattern.permute.xlu0 6
  %3783 = vperm.xlu0 %3782, %v691
  %v3784 = vpop.permute.xlu0 %3783
  %v3787 = vunpack.c.l.s4 839922192
  %v3788 = vunpack.c.0.s8 %v3787
  %v3789 = vlaneseq
  %v3790 = vshrl.u32 %v3789, 7
  %v3791 = vsub.s32 %v3788, %v3790
  %v3792 = vrot.slane %v3784, %v3791
  %3793 = vset.pattern.permute.xlu0 6
  %3794 = vperm.xlu0 %3793, %v692
  %v3795 = vpop.permute.xlu0 %3794
  %v3798 = vunpack.c.l.s4 839922192
  %v3799 = vunpack.c.0.s8 %v3798
  %v3800 = vlaneseq
  %v3801 = vshrl.u32 %v3800, 7
  %v3802 = vsub.s32 %v3799, %v3801
  %v3803 = vrot.slane %v3795, %v3802
  %3804 = vset.pattern.permute.xlu0 6
  %3805 = vperm.xlu0 %3804, %v693
  %v3806 = vpop.permute.xlu0 %3805
  %v3809 = vunpack.c.l.s4 839922192
  %v3810 = vunpack.c.0.s8 %v3809
  %v3811 = vlaneseq
  %v3812 = vshrl.u32 %v3811, 7
  %v3813 = vsub.s32 %v3810, %v3812
  %v3814 = vrot.slane %v3806, %v3813
  %3815 = vset.pattern.permute.xlu0 6
  %3816 = vperm.xlu0 %3815, %v694
  %v3817 = vpop.permute.xlu0 %3816
  %v3820 = vunpack.c.l.s4 839922192
  %v3821 = vunpack.c.0.s8 %v3820
  %v3822 = vlaneseq
  %v3823 = vshrl.u32 %v3822, 7
  %v3824 = vsub.s32 %v3821, %v3823
  %v3825 = vrot.slane %v3817, %v3824
  %3826 = vset.pattern.permute.xlu0 6
  %3827 = vperm.xlu0 %3826, %v695
  %v3828 = vpop.permute.xlu0 %3827
  %v3831 = vunpack.c.l.s4 839922192
  %v3832 = vunpack.c.0.s8 %v3831
  %v3833 = vlaneseq
  %v3834 = vshrl.u32 %v3833, 7
  %v3835 = vsub.s32 %v3832, %v3834
  %v3836 = vrot.slane %v3828, %v3835
  %3837 = vset.pattern.permute.xlu0 6
  %3838 = vperm.xlu0 %3837, %v696
  %v3839 = vpop.permute.xlu0 %3838
  %v3842 = vunpack.c.l.s4 839922192
  %v3843 = vunpack.c.0.s8 %v3842
  %v3844 = vlaneseq
  %v3845 = vshrl.u32 %v3844, 7
  %v3846 = vsub.s32 %v3843, %v3845
  %v3847 = vrot.slane %v3839, %v3846
  %3848 = vset.pattern.permute.xlu0 6
  %3849 = vperm.xlu0 %3848, %v697
  %v3850 = vpop.permute.xlu0 %3849
  %v3853 = vunpack.c.l.s4 839922192
  %v3854 = vunpack.c.0.s8 %v3853
  %v3855 = vlaneseq
  %v3856 = vshrl.u32 %v3855, 7
  %v3857 = vsub.s32 %v3854, %v3856
  %v3858 = vrot.slane %v3850, %v3857
  %3859 = vset.pattern.permute.xlu0 6
  %3860 = vperm.xlu0 %3859, %v698
  %v3861 = vpop.permute.xlu0 %3860
  %v3864 = vunpack.c.l.s4 839922192
  %v3865 = vunpack.c.0.s8 %v3864
  %v3866 = vlaneseq
  %v3867 = vshrl.u32 %v3866, 7
  %v3868 = vsub.s32 %v3865, %v3867
  %v3869 = vrot.slane %v3861, %v3868
  %3870 = vset.pattern.permute.xlu0 6
  %3871 = vperm.xlu0 %3870, %v699
  %v3872 = vpop.permute.xlu0 %3871
  %v3875 = vunpack.c.l.s4 839922192
  %v3876 = vunpack.c.0.s8 %v3875
  %v3877 = vlaneseq
  %v3878 = vshrl.u32 %v3877, 7
  %v3879 = vsub.s32 %v3876, %v3878
  %v3880 = vrot.slane %v3872, %v3879
  %3881 = vset.pattern.permute.xlu0 6
  %3882 = vperm.xlu0 %3881, %v700
  %v3883 = vpop.permute.xlu0 %3882
  %v3886 = vunpack.c.l.s4 839922192
  %v3887 = vunpack.c.0.s8 %v3886
  %v3888 = vlaneseq
  %v3889 = vshrl.u32 %v3888, 7
  %v3890 = vsub.s32 %v3887, %v3889
  %v3891 = vrot.slane %v3883, %v3890
  %3892 = vset.pattern.permute.xlu0 6
  %3893 = vperm.xlu0 %3892, %v701
  %v3894 = vpop.permute.xlu0 %3893
  %v3897 = vunpack.c.l.s4 839922192
  %v3898 = vunpack.c.0.s8 %v3897
  %v3899 = vlaneseq
  %v3900 = vshrl.u32 %v3899, 7
  %v3901 = vsub.s32 %v3898, %v3900
  %v3902 = vrot.slane %v3894, %v3901
  %v3904 = vshll.u32 %v3737, 16
  %v3906 = vrot.slane %v3904, 5
  %v3907 = vshrl.u32 %v3737, 16
  %v3909 = vrot.slane %v3907, 4
  %v3910 = vor.u32 %v3909, %v3906
  %v3911 = vrot.slane %v3910, 4
  %v3913 = vshll.u32 %v3748, 16
  %v3915 = vrot.slane %v3913, 5
  %v3916 = vsel %vm896, %v3911, %v3915
  %v3917 = vshrl.u32 %v3748, 16
  %v3919 = vrot.slane %v3917, 4
  %v3920 = vor.u32 %v3919, %v3915
  %v3921 = vrot.slane %v3920, 4
  %v3923 = vshll.u32 %v3759, 16
  %v3925 = vrot.slane %v3923, 5
  %v3926 = vsel %vm896, %v3921, %v3925
  %v3927 = vshrl.u32 %v3759, 16
  %v3929 = vrot.slane %v3927, 4
  %v3930 = vor.u32 %v3929, %v3925
  %v3931 = vrot.slane %v3930, 4
  %v3933 = vshll.u32 %v3770, 16
  %v3935 = vrot.slane %v3933, 5
  %v3936 = vsel %vm896, %v3931, %v3935
  %v3937 = vshrl.u32 %v3770, 16
  %v3939 = vrot.slane %v3937, 4
  %v3940 = vor.u32 %v3939, %v3935
  %v3941 = vrot.slane %v3940, 4
  %v3943 = vshll.u32 %v3781, 16
  %v3945 = vrot.slane %v3943, 5
  %v3946 = vsel %vm896, %v3941, %v3945
  %v3947 = vshrl.u32 %v3781, 16
  %v3949 = vrot.slane %v3947, 4
  %v3950 = vor.u32 %v3949, %v3945
  %v3951 = vrot.slane %v3950, 4
  %v3953 = vshll.u32 %v3792, 16
  %v3955 = vrot.slane %v3953, 5
  %v3956 = vsel %vm896, %v3951, %v3955
  %v3957 = vshrl.u32 %v3792, 16
  %v3959 = vrot.slane %v3957, 4
  %v3960 = vor.u32 %v3959, %v3955
  %v3961 = vrot.slane %v3960, 4
  %v3963 = vshll.u32 %v3803, 16
  %v3965 = vrot.slane %v3963, 5
  %v3966 = vsel %vm896, %v3961, %v3965
  %v3967 = vshrl.u32 %v3803, 16
  %v3969 = vrot.slane %v3967, 4
  %v3970 = vor.u32 %v3969, %v3965
  %v3971 = vrot.slane %v3970, 4
  %v3973 = vshll.u32 %v3814, 16
  %v3975 = vrot.slane %v3973, 5
  %v3976 = vsel %vm896, %v3971, %v3975
  %v3977 = vshrl.u32 %v3814, 16
  %v3979 = vrot.slane %v3977, 4
  %v3980 = vor.u32 %v3979, %v3975
  %v3981 = vrot.slane %v3980, 4
  %v3983 = vshll.u32 %v3825, 16
  %v3985 = vrot.slane %v3983, 5
  %v3986 = vsel %vm896, %v3981, %v3985
  %v3987 = vshrl.u32 %v3825, 16
  %v3989 = vrot.slane %v3987, 4
  %v3990 = vor.u32 %v3989, %v3985
  %v3991 = vrot.slane %v3990, 4
  %v3993 = vshll.u32 %v3836, 16
  %v3995 = vrot.slane %v3993, 5
  %v3996 = vsel %vm896, %v3991, %v3995
  %v3997 = vshrl.u32 %v3836, 16
  %v3999 = vrot.slane %v3997, 4
  %v4000 = vor.u32 %v3999, %v3995
  %v4001 = vrot.slane %v4000, 4
  %v4003 = vshll.u32 %v3847, 16
  %v4005 = vrot.slane %v4003, 5
  %v4006 = vsel %vm896, %v4001, %v4005
  %v4007 = vshrl.u32 %v3847, 16
  %v4009 = vrot.slane %v4007, 4
  %v4010 = vor.u32 %v4009, %v4005
  %v4011 = vrot.slane %v4010, 4
  %v4013 = vshll.u32 %v3858, 16
  %v4015 = vrot.slane %v4013, 5
  %v4016 = vsel %vm896, %v4011, %v4015
  %v4017 = vshrl.u32 %v3858, 16
  %v4019 = vrot.slane %v4017, 4
  %v4020 = vor.u32 %v4019, %v4015
  %v4021 = vrot.slane %v4020, 4
  %v4023 = vshll.u32 %v3869, 16
  %v4025 = vrot.slane %v4023, 5
  %v4026 = vsel %vm896, %v4021, %v4025
  %v4027 = vshrl.u32 %v3869, 16
  %v4029 = vrot.slane %v4027, 4
  %v4030 = vor.u32 %v4029, %v4025
  %v4031 = vrot.slane %v4030, 4
  %v4033 = vshll.u32 %v3880, 16
  %v4035 = vrot.slane %v4033, 5
  %v4036 = vsel %vm896, %v4031, %v4035
  %v4037 = vshrl.u32 %v3880, 16
  %v4039 = vrot.slane %v4037, 4
  %v4040 = vor.u32 %v4039, %v4035
  %v4041 = vrot.slane %v4040, 4
  %v4043 = vshll.u32 %v3891, 16
  %v4045 = vrot.slane %v4043, 5
  %v4046 = vsel %vm896, %v4041, %v4045
  %v4047 = vshrl.u32 %v3891, 16
  %v4049 = vrot.slane %v4047, 4
  %v4050 = vor.u32 %v4049, %v4045
  %v4051 = vrot.slane %v4050, 4
  %v4053 = vshll.u32 %v3902, 16
  %v4055 = vrot.slane %v4053, 5
  %v4056 = vsel %vm896, %v4051, %v4055
  %v4057 = vshrl.u32 %v3902, 16
  %v4059 = vrot.slane %v4057, 4
  %v4060 = vor.u32 %v4059, %v4055
  %v4061 = vrot.slane %v4060, 4
  %v4079 = vmul.bf16 %v3725, %v3906
  %v4080 = vmul.bf16 %v3103, %v3916
  %v4081 = vmul.bf16 %v3104, %v3926
  %v4082 = vmul.bf16 %v3105, %v3936
  %v4083 = vmul.bf16 %v3106, %v3946
  %v4084 = vmul.bf16 %v3107, %v3956
  %v4085 = vmul.bf16 %v3108, %v3966
  %v4086 = vmul.bf16 %v3109, %v3976
  %v4087 = vmul.bf16 %v3110, %v3986
  %v4088 = vmul.bf16 %v3111, %v3996
  %v4089 = vmul.bf16 %v3112, %v4006
  %v4090 = vmul.bf16 %v3113, %v4016
  %v4091 = vmul.bf16 %v3114, %v4026
  %v4092 = vmul.bf16 %v3115, %v4036
  %v4093 = vmul.bf16 %v3116, %v4046
  %v4094 = vmul.bf16 %v3117, %v4056
  %v4095 = vmul.bf16 %v3726, %v4061
  %s4096 = scalar_lea.vmem %s6, 24
  %v4097 = vld [vmem:[%s4096] sm:$0xf]
  %v4115 = vunpack.c.l.b16 %v4079
  %v4116 = vunpack.c.l.b16 %v4080
  %v4117 = vunpack.c.l.b16 %v4081
  %v4118 = vunpack.c.l.b16 %v4082
  %v4119 = vunpack.c.l.b16 %v4083
  %v4120 = vunpack.c.l.b16 %v4084
  %v4121 = vunpack.c.l.b16 %v4085
  %v4122 = vunpack.c.l.b16 %v4086
  %v4123 = vunpack.c.l.b16 %v4087
  %v4124 = vunpack.c.l.b16 %v4088
  %v4125 = vunpack.c.l.b16 %v4089
  %v4126 = vunpack.c.l.b16 %v4090
  %v4127 = vunpack.c.l.b16 %v4091
  %v4128 = vunpack.c.l.b16 %v4092
  %v4129 = vunpack.c.l.b16 %v4093
  %v4130 = vunpack.c.l.b16 %v4094
  %v4131 = vunpack.c.l.b16 %v4095
  %v4132 = vpack.c.b16 %v4116, %v4115
  %v4133 = vpack.c.b16 %v4118, %v4117
  %v4134 = vpack.c.b16 %v4120, %v4119
  %v4135 = vpack.c.b16 %v4122, %v4121
  %v4136 = vpack.c.b16 %v4124, %v4123
  %v4137 = vpack.c.b16 %v4126, %v4125
  %v4138 = vpack.c.b16 %v4128, %v4127
  %v4139 = vpack.c.b16 %v4130, %v4129
  %v4140 = vpack.c.b16 %v4131, %v4131
  %v4142 = vshrl.u32 %v4132, 16
  %v4144 = vrot.slane %v4142, 3
  %v4145 = vshll.u32 %v4132, 16
  %v4147 = vrot.slane %v4145, 4
  %v4148 = vor.u32 %v4144, %v4147
  %v4150 = vshrl.u32 %v4133, 16
  %v4152 = vrot.slane %v4150, 3
  %v4153 = vshll.u32 %v4133, 16
  %v4155 = vrot.slane %v4153, 4
  %v4156 = vor.u32 %v4152, %v4155
  %v4157 = vsel %vm1134, %v4148, %v4156
  %v4159 = vshrl.u32 %v4134, 16
  %v4161 = vrot.slane %v4159, 3
  %v4162 = vshll.u32 %v4134, 16
  %v4164 = vrot.slane %v4162, 4
  %v4165 = vor.u32 %v4161, %v4164
  %v4166 = vsel %vm1134, %v4156, %v4165
  %v4168 = vshrl.u32 %v4135, 16
  %v4170 = vrot.slane %v4168, 3
  %v4171 = vshll.u32 %v4135, 16
  %v4173 = vrot.slane %v4171, 4
  %v4174 = vor.u32 %v4170, %v4173
  %v4175 = vsel %vm1134, %v4165, %v4174
  %v4177 = vshrl.u32 %v4136, 16
  %v4179 = vrot.slane %v4177, 3
  %v4180 = vshll.u32 %v4136, 16
  %v4182 = vrot.slane %v4180, 4
  %v4183 = vor.u32 %v4179, %v4182
  %v4184 = vsel %vm1134, %v4174, %v4183
  %v4186 = vshrl.u32 %v4137, 16
  %v4188 = vrot.slane %v4186, 3
  %v4189 = vshll.u32 %v4137, 16
  %v4191 = vrot.slane %v4189, 4
  %v4192 = vor.u32 %v4188, %v4191
  %v4193 = vsel %vm1134, %v4183, %v4192
  %v4195 = vshrl.u32 %v4138, 16
  %v4197 = vrot.slane %v4195, 3
  %v4198 = vshll.u32 %v4138, 16
  %v4200 = vrot.slane %v4198, 4
  %v4201 = vor.u32 %v4197, %v4200
  %v4202 = vsel %vm1134, %v4192, %v4201
  %v4204 = vshrl.u32 %v4139, 16
  %v4206 = vrot.slane %v4204, 3
  %v4207 = vshll.u32 %v4139, 16
  %v4209 = vrot.slane %v4207, 4
  %v4210 = vor.u32 %v4206, %v4209
  %v4211 = vsel %vm1134, %v4201, %v4210
  %v4213 = vshrl.u32 %v4140, 16
  %v4215 = vrot.slane %v4213, 3
  %v4216 = vshll.u32 %v4140, 16
  %v4218 = vrot.slane %v4216, 4
  %v4219 = vor.u32 %v4215, %v4218
  %v4220 = vsel %vm1134, %v4210, %v4219
  %v4222 = vsel %vm1215, %v4157, 0
  %v4225 = vsel %vm1215, %v4166, 0
  %v4228 = vsel %vm1215, %v4175, 0
  %v4231 = vsel %vm1215, %v4184, 0
  %v4234 = vsel %vm1215, %v4193, 0
  %v4237 = vsel %vm1215, %v4202, 0
  %v4240 = vsel %vm1215, %v4211, 0
  %v4243 = vsel %vm1215, %v4220, 0
  %v4246 = vsel %vm1240, %v4097, 0
  %4248 = vmatprep.subr.bf16.mxu0 0
  %4249 = vmatpush1.bf16.msra.mxu0 0
  %4250 = vmatprep.subr.bf16.mxu0 0
  %4251 = vmatpush1.bf16.msra.mxu0 0
  %4252 = vmatprep.subr.bf16.mxu0 0
  %4253 = vmatpush1.bf16.msra.mxu0 0
  %4254 = vmatprep.subr.bf16.mxu0 0
  %4255 = vmatpush1.bf16.msra.mxu0 0
  %4256 = vmatprep.subr.bf16.mxu0 0
  %4257 = vmatpush1.bf16.msra.mxu0 0
  %4258 = vmatprep.subr.bf16.mxu0 0
  %4259 = vmatpush1.bf16.msra.mxu0 0
  %4260 = vmatprep.subr.bf16.mxu0 0
  %4261 = vmatpush1.bf16.msra.mxu0 0
  %4262 = vmatprep.subr.bf16.mxu0 0
  %4263 = vmatpush1.bf16.msra.mxu0 %v4246
  %4264 = vmatprep.subr.bf16.mxu0 0
  %4265 = vmatpush2.bf16.msra.mxu0 0
  %4266 = vmatprep.subr.bf16.mxu0 0
  %4267 = vmatpush2.bf16.msra.mxu0 0
  %4268 = vmatprep.subr.bf16.mxu0 0
  %4269 = vmatpush2.bf16.msra.mxu0 0
  %4270 = vmatprep.subr.bf16.mxu0 0
  %4271 = vmatpush2.bf16.msra.mxu0 0
  %4272 = vmatprep.subr.bf16.mxu0 0
  %4273 = vmatpush2.bf16.msra.mxu0 0
  %4274 = vmatprep.subr.bf16.mxu0 0
  %4275 = vmatpush2.bf16.msra.mxu0 0
  %4276 = vmatprep.subr.bf16.mxu0 0
  %4277 = vmatpush2.bf16.msra.mxu0 0
  %4278 = vmatprep.subr.bf16.mxu0 0
  %4279 = vmatpush2.bf16.msra.mxu0 0
  %4280 = vmatprep.mubr.bf16.mxu0 0
  %4281 = vmatmul.mubr.bf16.gmra.mxu0 %v4222
  %v4282 = vpop.f32.mrf.mxu0
  %v4283 = vadd.f32 0.0, %v4282
  %v4284 = vpop.f32.mrf.mxu0
  %v4285 = vpop.f32.mrf.mxu0
  %v4286 = vadd.f32 0.0, %v4285
  %v4287 = vpop.f32.mrf.mxu0
  %4288 = vmatprep.mubr.bf16.mxu0 0
  %4289 = vmatmul.mubr.bf16.gmra.mxu0 %v4225
  %v4290 = vpop.f32.mrf.mxu0
  %v4291 = vadd.f32 0.0, %v4290
  %v4292 = vpop.f32.mrf.mxu0
  %v4293 = vpop.f32.mrf.mxu0
  %v4294 = vadd.f32 0.0, %v4293
  %v4295 = vpop.f32.mrf.mxu0
  %4296 = vmatprep.mubr.bf16.mxu0 0
  %4297 = vmatmul.mubr.bf16.gmra.mxu0 %v4228
  %v4298 = vpop.f32.mrf.mxu0
  %v4299 = vadd.f32 0.0, %v4298
  %v4300 = vpop.f32.mrf.mxu0
  %v4301 = vpop.f32.mrf.mxu0
  %v4302 = vadd.f32 0.0, %v4301
  %v4303 = vpop.f32.mrf.mxu0
  %4304 = vmatprep.mubr.bf16.mxu0 0
  %4305 = vmatmul.mubr.bf16.gmra.mxu0 %v4231
  %v4306 = vpop.f32.mrf.mxu0
  %v4307 = vadd.f32 0.0, %v4306
  %v4308 = vpop.f32.mrf.mxu0
  %v4309 = vpop.f32.mrf.mxu0
  %v4310 = vadd.f32 0.0, %v4309
  %v4311 = vpop.f32.mrf.mxu0
  %4312 = vmatprep.mubr.bf16.mxu0 0
  %4313 = vmatmul.mubr.bf16.gmra.mxu0 %v4234
  %v4314 = vpop.f32.mrf.mxu0
  %v4315 = vadd.f32 0.0, %v4314
  %v4316 = vpop.f32.mrf.mxu0
  %v4317 = vpop.f32.mrf.mxu0
  %v4318 = vadd.f32 0.0, %v4317
  %v4319 = vpop.f32.mrf.mxu0
  %4320 = vmatprep.mubr.bf16.mxu0 0
  %4321 = vmatmul.mubr.bf16.gmra.mxu0 %v4237
  %v4322 = vpop.f32.mrf.mxu0
  %v4323 = vadd.f32 0.0, %v4322
  %v4324 = vpop.f32.mrf.mxu0
  %v4325 = vpop.f32.mrf.mxu0
  %v4326 = vadd.f32 0.0, %v4325
  %v4327 = vpop.f32.mrf.mxu0
  %4328 = vmatprep.mubr.bf16.mxu0 0
  %4329 = vmatmul.mubr.bf16.gmra.mxu0 %v4240
  %v4330 = vpop.f32.mrf.mxu0
  %v4331 = vadd.f32 0.0, %v4330
  %v4332 = vpop.f32.mrf.mxu0
  %v4333 = vpop.f32.mrf.mxu0
  %v4334 = vadd.f32 0.0, %v4333
  %v4335 = vpop.f32.mrf.mxu0
  %4336 = vmatprep.mubr.bf16.mxu0 0
  %4337 = vmatmul.mubr.bf16.gmra.mxu0 %v4243
  %v4338 = vpop.f32.mrf.mxu0
  %v4339 = vadd.f32 0.0, %v4338
  %v4340 = vpop.f32.mrf.mxu0
  %v4341 = vpop.f32.mrf.mxu0
  %v4342 = vadd.f32 0.0, %v4341
  %v4343 = vpop.f32.mrf.mxu0
  %4344 = vdwg.mxu0
  %v4345 = vadd.f32 %v3709, %v4283
  %v4346 = vadd.f32 %v3710, %v4286
  %v4347 = vadd.f32 %v3711, %v4291
  %v4348 = vadd.f32 %v3712, %v4294
  %v4349 = vadd.f32 %v3713, %v4299
  %v4350 = vadd.f32 %v3714, %v4302
  %v4351 = vadd.f32 %v3715, %v4307
  %v4352 = vadd.f32 %v3716, %v4310
  %v4353 = vadd.f32 %v3717, %v4315
  %v4354 = vadd.f32 %v3718, %v4318
  %v4355 = vadd.f32 %v3719, %v4323
  %v4356 = vadd.f32 %v3720, %v4326
  %v4357 = vadd.f32 %v3721, %v4331
  %v4358 = vadd.f32 %v3722, %v4334
  %v4359 = vadd.f32 %v3723, %v4339
  %v4360 = vadd.f32 %v3724, %v4342
  %4361 = vset.pattern.permute.xlu0 7
  %4362 = vperm.xlu0 %4361, %v686
  %v4363 = vpop.permute.xlu0 %4362
  %v4366 = vunpack.c.l.s4 839922192
  %v4367 = vunpack.c.0.s8 %v4366
  %v4368 = vlaneseq
  %v4369 = vshrl.u32 %v4368, 7
  %v4370 = vsub.s32 %v4367, %v4369
  %v4371 = vrot.slane %v4363, %v4370
  %4372 = vset.pattern.permute.xlu0 7
  %4373 = vperm.xlu0 %4372, %v687
  %v4374 = vpop.permute.xlu0 %4373
  %v4377 = vunpack.c.l.s4 839922192
  %v4378 = vunpack.c.0.s8 %v4377
  %v4379 = vlaneseq
  %v4380 = vshrl.u32 %v4379, 7
  %v4381 = vsub.s32 %v4378, %v4380
  %v4382 = vrot.slane %v4374, %v4381
  %4383 = vset.pattern.permute.xlu0 7
  %4384 = vperm.xlu0 %4383, %v688
  %v4385 = vpop.permute.xlu0 %4384
  %v4388 = vunpack.c.l.s4 839922192
  %v4389 = vunpack.c.0.s8 %v4388
  %v4390 = vlaneseq
  %v4391 = vshrl.u32 %v4390, 7
  %v4392 = vsub.s32 %v4389, %v4391
  %v4393 = vrot.slane %v4385, %v4392
  %4394 = vset.pattern.permute.xlu0 7
  %4395 = vperm.xlu0 %4394, %v689
  %v4396 = vpop.permute.xlu0 %4395
  %v4399 = vunpack.c.l.s4 839922192
  %v4400 = vunpack.c.0.s8 %v4399
  %v4401 = vlaneseq
  %v4402 = vshrl.u32 %v4401, 7
  %v4403 = vsub.s32 %v4400, %v4402
  %v4404 = vrot.slane %v4396, %v4403
  %4405 = vset.pattern.permute.xlu0 7
  %4406 = vperm.xlu0 %4405, %v690
  %v4407 = vpop.permute.xlu0 %4406
  %v4410 = vunpack.c.l.s4 839922192
  %v4411 = vunpack.c.0.s8 %v4410
  %v4412 = vlaneseq
  %v4413 = vshrl.u32 %v4412, 7
  %v4414 = vsub.s32 %v4411, %v4413
  %v4415 = vrot.slane %v4407, %v4414
  %4416 = vset.pattern.permute.xlu0 7
  %4417 = vperm.xlu0 %4416, %v691
  %v4418 = vpop.permute.xlu0 %4417
  %v4421 = vunpack.c.l.s4 839922192
  %v4422 = vunpack.c.0.s8 %v4421
  %v4423 = vlaneseq
  %v4424 = vshrl.u32 %v4423, 7
  %v4425 = vsub.s32 %v4422, %v4424
  %v4426 = vrot.slane %v4418, %v4425
  %4427 = vset.pattern.permute.xlu0 7
  %4428 = vperm.xlu0 %4427, %v692
  %v4429 = vpop.permute.xlu0 %4428
  %v4432 = vunpack.c.l.s4 839922192
  %v4433 = vunpack.c.0.s8 %v4432
  %v4434 = vlaneseq
  %v4435 = vshrl.u32 %v4434, 7
  %v4436 = vsub.s32 %v4433, %v4435
  %v4437 = vrot.slane %v4429, %v4436
  %4438 = vset.pattern.permute.xlu0 7
  %4439 = vperm.xlu0 %4438, %v693
  %v4440 = vpop.permute.xlu0 %4439
  %v4443 = vunpack.c.l.s4 839922192
  %v4444 = vunpack.c.0.s8 %v4443
  %v4445 = vlaneseq
  %v4446 = vshrl.u32 %v4445, 7
  %v4447 = vsub.s32 %v4444, %v4446
  %v4448 = vrot.slane %v4440, %v4447
  %4449 = vset.pattern.permute.xlu0 7
  %4450 = vperm.xlu0 %4449, %v694
  %v4451 = vpop.permute.xlu0 %4450
  %v4454 = vunpack.c.l.s4 839922192
  %v4455 = vunpack.c.0.s8 %v4454
  %v4456 = vlaneseq
  %v4457 = vshrl.u32 %v4456, 7
  %v4458 = vsub.s32 %v4455, %v4457
  %v4459 = vrot.slane %v4451, %v4458
  %4460 = vset.pattern.permute.xlu0 7
  %4461 = vperm.xlu0 %4460, %v695
  %v4462 = vpop.permute.xlu0 %4461
  %v4465 = vunpack.c.l.s4 839922192
  %v4466 = vunpack.c.0.s8 %v4465
  %v4467 = vlaneseq
  %v4468 = vshrl.u32 %v4467, 7
  %v4469 = vsub.s32 %v4466, %v4468
  %v4470 = vrot.slane %v4462, %v4469
  %4471 = vset.pattern.permute.xlu0 7
  %4472 = vperm.xlu0 %4471, %v696
  %v4473 = vpop.permute.xlu0 %4472
  %v4476 = vunpack.c.l.s4 839922192
  %v4477 = vunpack.c.0.s8 %v4476
  %v4478 = vlaneseq
  %v4479 = vshrl.u32 %v4478, 7
  %v4480 = vsub.s32 %v4477, %v4479
  %v4481 = vrot.slane %v4473, %v4480
  %4482 = vset.pattern.permute.xlu0 7
  %4483 = vperm.xlu0 %4482, %v697
  %v4484 = vpop.permute.xlu0 %4483
  %v4487 = vunpack.c.l.s4 839922192
  %v4488 = vunpack.c.0.s8 %v4487
  %v4489 = vlaneseq
  %v4490 = vshrl.u32 %v4489, 7
  %v4491 = vsub.s32 %v4488, %v4490
  %v4492 = vrot.slane %v4484, %v4491
  %4493 = vset.pattern.permute.xlu0 7
  %4494 = vperm.xlu0 %4493, %v698
  %v4495 = vpop.permute.xlu0 %4494
  %v4498 = vunpack.c.l.s4 839922192
  %v4499 = vunpack.c.0.s8 %v4498
  %v4500 = vlaneseq
  %v4501 = vshrl.u32 %v4500, 7
  %v4502 = vsub.s32 %v4499, %v4501
  %v4503 = vrot.slane %v4495, %v4502
  %4504 = vset.pattern.permute.xlu0 7
  %4505 = vperm.xlu0 %4504, %v699
  %v4506 = vpop.permute.xlu0 %4505
  %v4509 = vunpack.c.l.s4 839922192
  %v4510 = vunpack.c.0.s8 %v4509
  %v4511 = vlaneseq
  %v4512 = vshrl.u32 %v4511, 7
  %v4513 = vsub.s32 %v4510, %v4512
  %v4514 = vrot.slane %v4506, %v4513
  %4515 = vset.pattern.permute.xlu0 7
  %4516 = vperm.xlu0 %4515, %v700
  %v4517 = vpop.permute.xlu0 %4516
  %v4520 = vunpack.c.l.s4 839922192
  %v4521 = vunpack.c.0.s8 %v4520
  %v4522 = vlaneseq
  %v4523 = vshrl.u32 %v4522, 7
  %v4524 = vsub.s32 %v4521, %v4523
  %v4525 = vrot.slane %v4517, %v4524
  %4526 = vset.pattern.permute.xlu0 7
  %4527 = vperm.xlu0 %4526, %v701
  %v4528 = vpop.permute.xlu0 %4527
  %v4531 = vunpack.c.l.s4 839922192
  %v4532 = vunpack.c.0.s8 %v4531
  %v4533 = vlaneseq
  %v4534 = vshrl.u32 %v4533, 7
  %v4535 = vsub.s32 %v4532, %v4534
  %v4536 = vrot.slane %v4528, %v4535
  %v4537 = vmul.bf16 %v3103, %v4371
  %v4538 = vmul.bf16 %v3104, %v4382
  %v4539 = vmul.bf16 %v3105, %v4393
  %v4540 = vmul.bf16 %v3106, %v4404
  %v4541 = vmul.bf16 %v3107, %v4415
  %v4542 = vmul.bf16 %v3108, %v4426
  %v4543 = vmul.bf16 %v3109, %v4437
  %v4544 = vmul.bf16 %v3110, %v4448
  %v4545 = vmul.bf16 %v3111, %v4459
  %v4546 = vmul.bf16 %v3112, %v4470
  %v4547 = vmul.bf16 %v3113, %v4481
  %v4548 = vmul.bf16 %v3114, %v4492
  %v4549 = vmul.bf16 %v3115, %v4503
  %v4550 = vmul.bf16 %v3116, %v4514
  %v4551 = vmul.bf16 %v3117, %v4525
  %v4552 = vmul.bf16 %v3726, %v4536
  %s4553 = scalar_lea.vmem %s6, 28
  %v4554 = vld [vmem:[%s4553] sm:$0xf]
  %v4571 = vunpack.c.l.b16 %v4537
  %v4572 = vunpack.c.l.b16 %v4538
  %v4573 = vunpack.c.l.b16 %v4539
  %v4574 = vunpack.c.l.b16 %v4540
  %v4575 = vunpack.c.l.b16 %v4541
  %v4576 = vunpack.c.l.b16 %v4542
  %v4577 = vunpack.c.l.b16 %v4543
  %v4578 = vunpack.c.l.b16 %v4544
  %v4579 = vunpack.c.l.b16 %v4545
  %v4580 = vunpack.c.l.b16 %v4546
  %v4581 = vunpack.c.l.b16 %v4547
  %v4582 = vunpack.c.l.b16 %v4548
  %v4583 = vunpack.c.l.b16 %v4549
  %v4584 = vunpack.c.l.b16 %v4550
  %v4585 = vunpack.c.l.b16 %v4551
  %v4586 = vunpack.c.l.b16 %v4552
  %v4587 = vpack.c.b16 %v4572, %v4571
  %v4588 = vpack.c.b16 %v4574, %v4573
  %v4589 = vpack.c.b16 %v4576, %v4575
  %v4590 = vpack.c.b16 %v4578, %v4577
  %v4591 = vpack.c.b16 %v4580, %v4579
  %v4592 = vpack.c.b16 %v4582, %v4581
  %v4593 = vpack.c.b16 %v4584, %v4583
  %v4594 = vpack.c.b16 %v4586, %v4585
  %v4596 = vsel %vm1215, %v4587, 0
  %v4599 = vsel %vm1215, %v4588, 0
  %v4602 = vsel %vm1215, %v4589, 0
  %v4605 = vsel %vm1215, %v4590, 0
  %v4608 = vsel %vm1215, %v4591, 0
  %v4611 = vsel %vm1215, %v4592, 0
  %v4614 = vsel %vm1215, %v4593, 0
  %v4617 = vsel %vm1215, %v4594, 0
  %v4620 = vsel %vm1240, %v4554, 0
  %4622 = vmatprep.subr.bf16.mxu0 0
  %4623 = vmatpush1.bf16.msra.mxu0 0
  %4624 = vmatprep.subr.bf16.mxu0 0
  %4625 = vmatpush1.bf16.msra.mxu0 0
  %4626 = vmatprep.subr.bf16.mxu0 0
  %4627 = vmatpush1.bf16.msra.mxu0 0
  %4628 = vmatprep.subr.bf16.mxu0 0
  %4629 = vmatpush1.bf16.msra.mxu0 0
  %4630 = vmatprep.subr.bf16.mxu0 0
  %4631 = vmatpush1.bf16.msra.mxu0 0
  %4632 = vmatprep.subr.bf16.mxu0 0
  %4633 = vmatpush1.bf16.msra.mxu0 0
  %4634 = vmatprep.subr.bf16.mxu0 0
  %4635 = vmatpush1.bf16.msra.mxu0 0
  %4636 = vmatprep.subr.bf16.mxu0 0
  %4637 = vmatpush1.bf16.msra.mxu0 %v4620
  %4638 = vmatprep.subr.bf16.mxu0 0
  %4639 = vmatpush2.bf16.msra.mxu0 0
  %4640 = vmatprep.subr.bf16.mxu0 0
  %4641 = vmatpush2.bf16.msra.mxu0 0
  %4642 = vmatprep.subr.bf16.mxu0 0
  %4643 = vmatpush2.bf16.msra.mxu0 0
  %4644 = vmatprep.subr.bf16.mxu0 0
  %4645 = vmatpush2.bf16.msra.mxu0 0
  %4646 = vmatprep.subr.bf16.mxu0 0
  %4647 = vmatpush2.bf16.msra.mxu0 0
  %4648 = vmatprep.subr.bf16.mxu0 0
  %4649 = vmatpush2.bf16.msra.mxu0 0
  %4650 = vmatprep.subr.bf16.mxu0 0
  %4651 = vmatpush2.bf16.msra.mxu0 0
  %4652 = vmatprep.subr.bf16.mxu0 0
  %4653 = vmatpush2.bf16.msra.mxu0 0
  %4654 = vmatprep.mubr.bf16.mxu0 0
  %4655 = vmatmul.mubr.bf16.gmra.mxu0 %v4596
  %v4656 = vpop.f32.mrf.mxu0
  %v4657 = vadd.f32 0.0, %v4656
  %v4658 = vpop.f32.mrf.mxu0
  %v4659 = vpop.f32.mrf.mxu0
  %v4660 = vadd.f32 0.0, %v4659
  %v4661 = vpop.f32.mrf.mxu0
  %4662 = vmatprep.mubr.bf16.mxu0 0
  %4663 = vmatmul.mubr.bf16.gmra.mxu0 %v4599
  %v4664 = vpop.f32.mrf.mxu0
  %v4665 = vadd.f32 0.0, %v4664
  %v4666 = vpop.f32.mrf.mxu0
  %v4667 = vpop.f32.mrf.mxu0
  %v4668 = vadd.f32 0.0, %v4667
  %v4669 = vpop.f32.mrf.mxu0
  %4670 = vmatprep.mubr.bf16.mxu0 0
  %4671 = vmatmul.mubr.bf16.gmra.mxu0 %v4602
  %v4672 = vpop.f32.mrf.mxu0
  %v4673 = vadd.f32 0.0, %v4672
  %v4674 = vpop.f32.mrf.mxu0
  %v4675 = vpop.f32.mrf.mxu0
  %v4676 = vadd.f32 0.0, %v4675
  %v4677 = vpop.f32.mrf.mxu0
  %4678 = vmatprep.mubr.bf16.mxu0 0
  %4679 = vmatmul.mubr.bf16.gmra.mxu0 %v4605
  %v4680 = vpop.f32.mrf.mxu0
  %v4681 = vadd.f32 0.0, %v4680
  %v4682 = vpop.f32.mrf.mxu0
  %v4683 = vpop.f32.mrf.mxu0
  %v4684 = vadd.f32 0.0, %v4683
  %v4685 = vpop.f32.mrf.mxu0
  %4686 = vmatprep.mubr.bf16.mxu0 0
  %4687 = vmatmul.mubr.bf16.gmra.mxu0 %v4608
  %v4688 = vpop.f32.mrf.mxu0
  %v4689 = vadd.f32 0.0, %v4688
  %v4690 = vpop.f32.mrf.mxu0
  %v4691 = vpop.f32.mrf.mxu0
  %v4692 = vadd.f32 0.0, %v4691
  %v4693 = vpop.f32.mrf.mxu0
  %4694 = vmatprep.mubr.bf16.mxu0 0
  %4695 = vmatmul.mubr.bf16.gmra.mxu0 %v4611
  %v4696 = vpop.f32.mrf.mxu0
  %v4697 = vadd.f32 0.0, %v4696
  %v4698 = vpop.f32.mrf.mxu0
  %v4699 = vpop.f32.mrf.mxu0
  %v4700 = vadd.f32 0.0, %v4699
  %v4701 = vpop.f32.mrf.mxu0
  %4702 = vmatprep.mubr.bf16.mxu0 0
  %4703 = vmatmul.mubr.bf16.gmra.mxu0 %v4614
  %v4704 = vpop.f32.mrf.mxu0
  %v4705 = vadd.f32 0.0, %v4704
  %v4706 = vpop.f32.mrf.mxu0
  %v4707 = vpop.f32.mrf.mxu0
  %v4708 = vadd.f32 0.0, %v4707
  %v4709 = vpop.f32.mrf.mxu0
  %4710 = vmatprep.mubr.bf16.mxu0 0
  %4711 = vmatmul.mubr.bf16.gmra.mxu0 %v4617
  %v4712 = vpop.f32.mrf.mxu0
  %v4713 = vadd.f32 0.0, %v4712
  %v4714 = vpop.f32.mrf.mxu0
  %v4715 = vpop.f32.mrf.mxu0
  %v4716 = vadd.f32 0.0, %v4715
  %v4717 = vpop.f32.mrf.mxu0
  %4718 = vdwg.mxu0
  %v4719 = vadd.f32 %v4345, %v4657
  %v4720 = vadd.f32 %v4346, %v4660
  %v4721 = vadd.f32 %v4347, %v4665
  %v4722 = vadd.f32 %v4348, %v4668
  %v4723 = vadd.f32 %v4349, %v4673
  %v4724 = vadd.f32 %v4350, %v4676
  %v4725 = vadd.f32 %v4351, %v4681
  %v4726 = vadd.f32 %v4352, %v4684
  %v4727 = vadd.f32 %v4353, %v4689
  %v4728 = vadd.f32 %v4354, %v4692
  %v4729 = vadd.f32 %v4355, %v4697
  %v4730 = vadd.f32 %v4356, %v4700
  %v4731 = vadd.f32 %v4357, %v4705
  %v4732 = vadd.f32 %v4358, %v4708
  %v4733 = vadd.f32 %v4359, %v4713
  %v4734 = vadd.f32 %v4360, %v4716
  %v4735 = vld [vmem:[#allocation2 + $0xc] sm:$0xf]
  %v4736 = vld [vmem:[#allocation2 + $0x10] sm:$0xf]
  %v4737 = vld [vmem:[#allocation2 + $0x14] sm:$0xf]
  %v4738 = vld [vmem:[#allocation2 + $0x18] sm:$0xf]
  %v4739 = vld [vmem:[#allocation2 + $0x1c] sm:$0xf]
  %v4740 = vld [vmem:[#allocation2 + $0x20] sm:$0xf]
  %v4741 = vld [vmem:[#allocation2 + $0x24] sm:$0xf]
  %v4742 = vld [vmem:[#allocation2 + $0x28] sm:$0xf]
  %v4743 = vld [vmem:[#allocation2 + $0x2c] sm:$0xf]
  %v4744 = vld [vmem:[#allocation2 + $0x30] sm:$0xf]
  %v4745 = vld [vmem:[#allocation2 + $0x34] sm:$0xf]
  %v4746 = vld [vmem:[#allocation2 + $0x38] sm:$0xf]
  %v4747 = vld [vmem:[#allocation2 + $0x3c] sm:$0xf]
  %v4748 = vld [vmem:[#allocation2 + $0x40] sm:$0xf]
  %v4749 = vld [vmem:[#allocation2 + $0x44] sm:$0xf]
  %v4750 = vld [vmem:[#allocation2 + $0x48] sm:$0xf]
  %v4751 = vld [vmem:[#allocation2 + $0x4c] sm:$0x1]
  %4752 = vset.pattern.permute.xlu0 8
  %4753 = vperm.xlu0 %4752, %v686
  %v4754 = vpop.permute.xlu0 %4753
  %v4757 = vunpack.c.l.s4 839922192
  %v4758 = vunpack.c.0.s8 %v4757
  %v4759 = vlaneseq
  %v4760 = vshrl.u32 %v4759, 7
  %v4761 = vsub.s32 %v4758, %v4760
  %v4762 = vrot.slane %v4754, %v4761
  %4763 = vset.pattern.permute.xlu0 8
  %4764 = vperm.xlu0 %4763, %v687
  %v4765 = vpop.permute.xlu0 %4764
  %v4768 = vunpack.c.l.s4 839922192
  %v4769 = vunpack.c.0.s8 %v4768
  %v4770 = vlaneseq
  %v4771 = vshrl.u32 %v4770, 7
  %v4772 = vsub.s32 %v4769, %v4771
  %v4773 = vrot.slane %v4765, %v4772
  %4774 = vset.pattern.permute.xlu0 8
  %4775 = vperm.xlu0 %4774, %v688
  %v4776 = vpop.permute.xlu0 %4775
  %v4779 = vunpack.c.l.s4 839922192
  %v4780 = vunpack.c.0.s8 %v4779
  %v4781 = vlaneseq
  %v4782 = vshrl.u32 %v4781, 7
  %v4783 = vsub.s32 %v4780, %v4782
  %v4784 = vrot.slane %v4776, %v4783
  %4785 = vset.pattern.permute.xlu0 8
  %4786 = vperm.xlu0 %4785, %v689
  %v4787 = vpop.permute.xlu0 %4786
  %v4790 = vunpack.c.l.s4 839922192
  %v4791 = vunpack.c.0.s8 %v4790
  %v4792 = vlaneseq
  %v4793 = vshrl.u32 %v4792, 7
  %v4794 = vsub.s32 %v4791, %v4793
  %v4795 = vrot.slane %v4787, %v4794
  %4796 = vset.pattern.permute.xlu0 8
  %4797 = vperm.xlu0 %4796, %v690
  %v4798 = vpop.permute.xlu0 %4797
  %v4801 = vunpack.c.l.s4 839922192
  %v4802 = vunpack.c.0.s8 %v4801
  %v4803 = vlaneseq
  %v4804 = vshrl.u32 %v4803, 7
  %v4805 = vsub.s32 %v4802, %v4804
  %v4806 = vrot.slane %v4798, %v4805
  %4807 = vset.pattern.permute.xlu0 8
  %4808 = vperm.xlu0 %4807, %v691
  %v4809 = vpop.permute.xlu0 %4808
  %v4812 = vunpack.c.l.s4 839922192
  %v4813 = vunpack.c.0.s8 %v4812
  %v4814 = vlaneseq
  %v4815 = vshrl.u32 %v4814, 7
  %v4816 = vsub.s32 %v4813, %v4815
  %v4817 = vrot.slane %v4809, %v4816
  %4818 = vset.pattern.permute.xlu0 8
  %4819 = vperm.xlu0 %4818, %v692
  %v4820 = vpop.permute.xlu0 %4819
  %v4823 = vunpack.c.l.s4 839922192
  %v4824 = vunpack.c.0.s8 %v4823
  %v4825 = vlaneseq
  %v4826 = vshrl.u32 %v4825, 7
  %v4827 = vsub.s32 %v4824, %v4826
  %v4828 = vrot.slane %v4820, %v4827
  %4829 = vset.pattern.permute.xlu0 8
  %4830 = vperm.xlu0 %4829, %v693
  %v4831 = vpop.permute.xlu0 %4830
  %v4834 = vunpack.c.l.s4 839922192
  %v4835 = vunpack.c.0.s8 %v4834
  %v4836 = vlaneseq
  %v4837 = vshrl.u32 %v4836, 7
  %v4838 = vsub.s32 %v4835, %v4837
  %v4839 = vrot.slane %v4831, %v4838
  %4840 = vset.pattern.permute.xlu0 8
  %4841 = vperm.xlu0 %4840, %v694
  %v4842 = vpop.permute.xlu0 %4841
  %v4845 = vunpack.c.l.s4 839922192
  %v4846 = vunpack.c.0.s8 %v4845
  %v4847 = vlaneseq
  %v4848 = vshrl.u32 %v4847, 7
  %v4849 = vsub.s32 %v4846, %v4848
  %v4850 = vrot.slane %v4842, %v4849
  %4851 = vset.pattern.permute.xlu0 8
  %4852 = vperm.xlu0 %4851, %v695
  %v4853 = vpop.permute.xlu0 %4852
  %v4856 = vunpack.c.l.s4 839922192
  %v4857 = vunpack.c.0.s8 %v4856
  %v4858 = vlaneseq
  %v4859 = vshrl.u32 %v4858, 7
  %v4860 = vsub.s32 %v4857, %v4859
  %v4861 = vrot.slane %v4853, %v4860
  %4862 = vset.pattern.permute.xlu0 8
  %4863 = vperm.xlu0 %4862, %v696
  %v4864 = vpop.permute.xlu0 %4863
  %v4867 = vunpack.c.l.s4 839922192
  %v4868 = vunpack.c.0.s8 %v4867
  %v4869 = vlaneseq
  %v4870 = vshrl.u32 %v4869, 7
  %v4871 = vsub.s32 %v4868, %v4870
  %v4872 = vrot.slane %v4864, %v4871
  %4873 = vset.pattern.permute.xlu0 8
  %4874 = vperm.xlu0 %4873, %v697
  %v4875 = vpop.permute.xlu0 %4874
  %v4878 = vunpack.c.l.s4 839922192
  %v4879 = vunpack.c.0.s8 %v4878
  %v4880 = vlaneseq
  %v4881 = vshrl.u32 %v4880, 7
  %v4882 = vsub.s32 %v4879, %v4881
  %v4883 = vrot.slane %v4875, %v4882
  %4884 = vset.pattern.permute.xlu0 8
  %4885 = vperm.xlu0 %4884, %v698
  %v4886 = vpop.permute.xlu0 %4885
  %v4889 = vunpack.c.l.s4 839922192
  %v4890 = vunpack.c.0.s8 %v4889
  %v4891 = vlaneseq
  %v4892 = vshrl.u32 %v4891, 7
  %v4893 = vsub.s32 %v4890, %v4892
  %v4894 = vrot.slane %v4886, %v4893
  %4895 = vset.pattern.permute.xlu0 8
  %4896 = vperm.xlu0 %4895, %v699
  %v4897 = vpop.permute.xlu0 %4896
  %v4900 = vunpack.c.l.s4 839922192
  %v4901 = vunpack.c.0.s8 %v4900
  %v4902 = vlaneseq
  %v4903 = vshrl.u32 %v4902, 7
  %v4904 = vsub.s32 %v4901, %v4903
  %v4905 = vrot.slane %v4897, %v4904
  %4906 = vset.pattern.permute.xlu0 8
  %4907 = vperm.xlu0 %4906, %v700
  %v4908 = vpop.permute.xlu0 %4907
  %v4911 = vunpack.c.l.s4 839922192
  %v4912 = vunpack.c.0.s8 %v4911
  %v4913 = vlaneseq
  %v4914 = vshrl.u32 %v4913, 7
  %v4915 = vsub.s32 %v4912, %v4914
  %v4916 = vrot.slane %v4908, %v4915
  %4917 = vset.pattern.permute.xlu0 8
  %4918 = vperm.xlu0 %4917, %v701
  %v4919 = vpop.permute.xlu0 %4918
  %v4922 = vunpack.c.l.s4 839922192
  %v4923 = vunpack.c.0.s8 %v4922
  %v4924 = vlaneseq
  %v4925 = vshrl.u32 %v4924, 7
  %v4926 = vsub.s32 %v4923, %v4925
  %v4927 = vrot.slane %v4919, %v4926
  %v4929 = vshrl.u32 %v4762, 16
  %v4931 = vrot.slane %v4929, 7
  %v4932 = vshll.u32 %v4762, 16
  %v4934 = vor.u32 %v4931, %v4932
  %v4935 = vrot.slane %v4931, 4
  %v4937 = vshrl.u32 %v4773, 16
  %v4939 = vrot.slane %v4937, 7
  %v4940 = vshll.u32 %v4773, 16
  %v4942 = vor.u32 %v4939, %v4940
  %v4943 = vsel %vm2034, %v4935, %v4942
  %v4944 = vrot.slane %v4939, 4
  %v4946 = vshrl.u32 %v4784, 16
  %v4948 = vrot.slane %v4946, 7
  %v4949 = vshll.u32 %v4784, 16
  %v4951 = vor.u32 %v4948, %v4949
  %v4952 = vsel %vm2034, %v4944, %v4951
  %v4953 = vrot.slane %v4948, 4
  %v4955 = vshrl.u32 %v4795, 16
  %v4957 = vrot.slane %v4955, 7
  %v4958 = vshll.u32 %v4795, 16
  %v4960 = vor.u32 %v4957, %v4958
  %v4961 = vsel %vm2034, %v4953, %v4960
  %v4962 = vrot.slane %v4957, 4
  %v4964 = vshrl.u32 %v4806, 16
  %v4966 = vrot.slane %v4964, 7
  %v4967 = vshll.u32 %v4806, 16
  %v4969 = vor.u32 %v4966, %v4967
  %v4970 = vsel %vm2034, %v4962, %v4969
  %v4971 = vrot.slane %v4966, 4
  %v4973 = vshrl.u32 %v4817, 16
  %v4975 = vrot.slane %v4973, 7
  %v4976 = vshll.u32 %v4817, 16
  %v4978 = vor.u32 %v4975, %v4976
  %v4979 = vsel %vm2034, %v4971, %v4978
  %v4980 = vrot.slane %v4975, 4
  %v4982 = vshrl.u32 %v4828, 16
  %v4984 = vrot.slane %v4982, 7
  %v4985 = vshll.u32 %v4828, 16
  %v4987 = vor.u32 %v4984, %v4985
  %v4988 = vsel %vm2034, %v4980, %v4987
  %v4989 = vrot.slane %v4984, 4
  %v4991 = vshrl.u32 %v4839, 16
  %v4993 = vrot.slane %v4991, 7
  %v4994 = vshll.u32 %v4839, 16
  %v4996 = vor.u32 %v4993, %v4994
  %v4997 = vsel %vm2034, %v4989, %v4996
  %v4998 = vrot.slane %v4993, 4
  %v5000 = vshrl.u32 %v4850, 16
  %v5002 = vrot.slane %v5000, 7
  %v5003 = vshll.u32 %v4850, 16
  %v5005 = vor.u32 %v5002, %v5003
  %v5006 = vsel %vm2034, %v4998, %v5005
  %v5007 = vrot.slane %v5002, 4
  %v5009 = vshrl.u32 %v4861, 16
  %v5011 = vrot.slane %v5009, 7
  %v5012 = vshll.u32 %v4861, 16
  %v5014 = vor.u32 %v5011, %v5012
  %v5015 = vsel %vm2034, %v5007, %v5014
  %v5016 = vrot.slane %v5011, 4
  %v5018 = vshrl.u32 %v4872, 16
  %v5020 = vrot.slane %v5018, 7
  %v5021 = vshll.u32 %v4872, 16
  %v5023 = vor.u32 %v5020, %v5021
  %v5024 = vsel %vm2034, %v5016, %v5023
  %v5025 = vrot.slane %v5020, 4
  %v5027 = vshrl.u32 %v4883, 16
  %v5029 = vrot.slane %v5027, 7
  %v5030 = vshll.u32 %v4883, 16
  %v5032 = vor.u32 %v5029, %v5030
  %v5033 = vsel %vm2034, %v5025, %v5032
  %v5034 = vrot.slane %v5029, 4
  %v5036 = vshrl.u32 %v4894, 16
  %v5038 = vrot.slane %v5036, 7
  %v5039 = vshll.u32 %v4894, 16
  %v5041 = vor.u32 %v5038, %v5039
  %v5042 = vsel %vm2034, %v5034, %v5041
  %v5043 = vrot.slane %v5038, 4
  %v5045 = vshrl.u32 %v4905, 16
  %v5047 = vrot.slane %v5045, 7
  %v5048 = vshll.u32 %v4905, 16
  %v5050 = vor.u32 %v5047, %v5048
  %v5051 = vsel %vm2034, %v5043, %v5050
  %v5052 = vrot.slane %v5047, 4
  %v5054 = vshrl.u32 %v4916, 16
  %v5056 = vrot.slane %v5054, 7
  %v5057 = vshll.u32 %v4916, 16
  %v5059 = vor.u32 %v5056, %v5057
  %v5060 = vsel %vm2034, %v5052, %v5059
  %v5061 = vrot.slane %v5056, 4
  %v5063 = vshrl.u32 %v4927, 16
  %v5065 = vrot.slane %v5063, 7
  %v5066 = vshll.u32 %v4927, 16
  %v5068 = vor.u32 %v5065, %v5066
  %v5069 = vsel %vm2034, %v5061, %v5068
  %v5070 = vrot.slane %v5065, 4
  %v5088 = vmul.bf16 %v4735, %v4934
  %v5089 = vmul.bf16 %v4736, %v4943
  %v5090 = vmul.bf16 %v4737, %v4952
  %v5091 = vmul.bf16 %v4738, %v4961
  %v5092 = vmul.bf16 %v4739, %v4970
  %v5093 = vmul.bf16 %v4740, %v4979
  %v5094 = vmul.bf16 %v4741, %v4988
  %v5095 = vmul.bf16 %v4742, %v4997
  %v5096 = vmul.bf16 %v4743, %v5006
  %v5097 = vmul.bf16 %v4744, %v5015
  %v5098 = vmul.bf16 %v4745, %v5024
  %v5099 = vmul.bf16 %v4746, %v5033
  %v5100 = vmul.bf16 %v4747, %v5042
  %v5101 = vmul.bf16 %v4748, %v5051
  %v5102 = vmul.bf16 %v4749, %v5060
  %v5103 = vmul.bf16 %v4750, %v5069
  %v5104 = vmul.bf16 %v4751, %v5070
  %s5105 = scalar_lea.vmem %s6, 32
  %v5106 = vld [vmem:[%s5105] sm:$0xf]
  %v5124 = vunpack.c.l.b16 %v5088
  %v5125 = vunpack.c.l.b16 %v5089
  %v5126 = vunpack.c.l.b16 %v5090
  %v5127 = vunpack.c.l.b16 %v5091
  %v5128 = vunpack.c.l.b16 %v5092
  %v5129 = vunpack.c.l.b16 %v5093
  %v5130 = vunpack.c.l.b16 %v5094
  %v5131 = vunpack.c.l.b16 %v5095
  %v5132 = vunpack.c.l.b16 %v5096
  %v5133 = vunpack.c.l.b16 %v5097
  %v5134 = vunpack.c.l.b16 %v5098
  %v5135 = vunpack.c.l.b16 %v5099
  %v5136 = vunpack.c.l.b16 %v5100
  %v5137 = vunpack.c.l.b16 %v5101
  %v5138 = vunpack.c.l.b16 %v5102
  %v5139 = vunpack.c.l.b16 %v5103
  %v5140 = vunpack.c.l.b16 %v5104
  %v5141 = vpack.c.b16 %v5125, %v5124
  %v5142 = vpack.c.b16 %v5127, %v5126
  %v5143 = vpack.c.b16 %v5129, %v5128
  %v5144 = vpack.c.b16 %v5131, %v5130
  %v5145 = vpack.c.b16 %v5133, %v5132
  %v5146 = vpack.c.b16 %v5135, %v5134
  %v5147 = vpack.c.b16 %v5137, %v5136
  %v5148 = vpack.c.b16 %v5139, %v5138
  %v5149 = vpack.c.b16 %v5140, %v5140
  %v5151 = vshrl.u32 %v5141, 16
  %v5153 = vshll.u32 %v5141, 16
  %v5155 = vrot.slane %v5153, 1
  %v5156 = vor.u32 %v5151, %v5155
  %v5158 = vshll.u32 %v5142, 16
  %v5160 = vrot.slane %v5158, 1
  %v5161 = vsel %vm2257, %v5156, %v5160
  %v5162 = vshrl.u32 %v5142, 16
  %v5164 = vor.u32 %v5162, %v5160
  %v5166 = vshll.u32 %v5143, 16
  %v5168 = vrot.slane %v5166, 1
  %v5169 = vsel %vm2257, %v5164, %v5168
  %v5170 = vshrl.u32 %v5143, 16
  %v5172 = vor.u32 %v5170, %v5168
  %v5174 = vshll.u32 %v5144, 16
  %v5176 = vrot.slane %v5174, 1
  %v5177 = vsel %vm2257, %v5172, %v5176
  %v5178 = vshrl.u32 %v5144, 16
  %v5180 = vor.u32 %v5178, %v5176
  %v5182 = vshll.u32 %v5145, 16
  %v5184 = vrot.slane %v5182, 1
  %v5185 = vsel %vm2257, %v5180, %v5184
  %v5186 = vshrl.u32 %v5145, 16
  %v5188 = vor.u32 %v5186, %v5184
  %v5190 = vshll.u32 %v5146, 16
  %v5192 = vrot.slane %v5190, 1
  %v5193 = vsel %vm2257, %v5188, %v5192
  %v5194 = vshrl.u32 %v5146, 16
  %v5196 = vor.u32 %v5194, %v5192
  %v5198 = vshll.u32 %v5147, 16
  %v5200 = vrot.slane %v5198, 1
  %v5201 = vsel %vm2257, %v5196, %v5200
  %v5202 = vshrl.u32 %v5147, 16
  %v5204 = vor.u32 %v5202, %v5200
  %v5206 = vshll.u32 %v5148, 16
  %v5208 = vrot.slane %v5206, 1
  %v5209 = vsel %vm2257, %v5204, %v5208
  %v5210 = vshrl.u32 %v5148, 16
  %v5212 = vor.u32 %v5210, %v5208
  %v5214 = vshll.u32 %v5149, 16
  %v5216 = vrot.slane %v5214, 1
  %v5217 = vsel %vm2257, %v5212, %v5216
  %v5219 = vsel %vm1215, %v5161, 0
  %v5222 = vsel %vm1215, %v5169, 0
  %v5225 = vsel %vm1215, %v5177, 0
  %v5228 = vsel %vm1215, %v5185, 0
  %v5231 = vsel %vm1215, %v5193, 0
  %v5234 = vsel %vm1215, %v5201, 0
  %v5237 = vsel %vm1215, %v5209, 0
  %v5240 = vsel %vm1215, %v5217, 0
  %v5243 = vsel %vm1240, %v5106, 0
  %5245 = vmatprep.subr.bf16.mxu0 0
  %5246 = vmatpush1.bf16.msra.mxu0 0
  %5247 = vmatprep.subr.bf16.mxu0 0
  %5248 = vmatpush1.bf16.msra.mxu0 0
  %5249 = vmatprep.subr.bf16.mxu0 0
  %5250 = vmatpush1.bf16.msra.mxu0 0
  %5251 = vmatprep.subr.bf16.mxu0 0
  %5252 = vmatpush1.bf16.msra.mxu0 0
  %5253 = vmatprep.subr.bf16.mxu0 0
  %5254 = vmatpush1.bf16.msra.mxu0 0
  %5255 = vmatprep.subr.bf16.mxu0 0
  %5256 = vmatpush1.bf16.msra.mxu0 0
  %5257 = vmatprep.subr.bf16.mxu0 0
  %5258 = vmatpush1.bf16.msra.mxu0 0
  %5259 = vmatprep.subr.bf16.mxu0 0
  %5260 = vmatpush1.bf16.msra.mxu0 %v5243
  %5261 = vmatprep.subr.bf16.mxu0 0
  %5262 = vmatpush2.bf16.msra.mxu0 0
  %5263 = vmatprep.subr.bf16.mxu0 0
  %5264 = vmatpush2.bf16.msra.mxu0 0
  %5265 = vmatprep.subr.bf16.mxu0 0
  %5266 = vmatpush2.bf16.msra.mxu0 0
  %5267 = vmatprep.subr.bf16.mxu0 0
  %5268 = vmatpush2.bf16.msra.mxu0 0
  %5269 = vmatprep.subr.bf16.mxu0 0
  %5270 = vmatpush2.bf16.msra.mxu0 0
  %5271 = vmatprep.subr.bf16.mxu0 0
  %5272 = vmatpush2.bf16.msra.mxu0 0
  %5273 = vmatprep.subr.bf16.mxu0 0
  %5274 = vmatpush2.bf16.msra.mxu0 0
  %5275 = vmatprep.subr.bf16.mxu0 0
  %5276 = vmatpush2.bf16.msra.mxu0 0
  %5277 = vmatprep.mubr.bf16.mxu0 0
  %5278 = vmatmul.mubr.bf16.gmra.mxu0 %v5219
  %v5279 = vpop.f32.mrf.mxu0
  %v5280 = vadd.f32 0.0, %v5279
  %v5281 = vpop.f32.mrf.mxu0
  %v5282 = vpop.f32.mrf.mxu0
  %v5283 = vadd.f32 0.0, %v5282
  %v5284 = vpop.f32.mrf.mxu0
  %5285 = vmatprep.mubr.bf16.mxu0 0
  %5286 = vmatmul.mubr.bf16.gmra.mxu0 %v5222
  %v5287 = vpop.f32.mrf.mxu0
  %v5288 = vadd.f32 0.0, %v5287
  %v5289 = vpop.f32.mrf.mxu0
  %v5290 = vpop.f32.mrf.mxu0
  %v5291 = vadd.f32 0.0, %v5290
  %v5292 = vpop.f32.mrf.mxu0
  %5293 = vmatprep.mubr.bf16.mxu0 0
  %5294 = vmatmul.mubr.bf16.gmra.mxu0 %v5225
  %v5295 = vpop.f32.mrf.mxu0
  %v5296 = vadd.f32 0.0, %v5295
  %v5297 = vpop.f32.mrf.mxu0
  %v5298 = vpop.f32.mrf.mxu0
  %v5299 = vadd.f32 0.0, %v5298
  %v5300 = vpop.f32.mrf.mxu0
  %5301 = vmatprep.mubr.bf16.mxu0 0
  %5302 = vmatmul.mubr.bf16.gmra.mxu0 %v5228
  %v5303 = vpop.f32.mrf.mxu0
  %v5304 = vadd.f32 0.0, %v5303
  %v5305 = vpop.f32.mrf.mxu0
  %v5306 = vpop.f32.mrf.mxu0
  %v5307 = vadd.f32 0.0, %v5306
  %v5308 = vpop.f32.mrf.mxu0
  %5309 = vmatprep.mubr.bf16.mxu0 0
  %5310 = vmatmul.mubr.bf16.gmra.mxu0 %v5231
  %v5311 = vpop.f32.mrf.mxu0
  %v5312 = vadd.f32 0.0, %v5311
  %v5313 = vpop.f32.mrf.mxu0
  %v5314 = vpop.f32.mrf.mxu0
  %v5315 = vadd.f32 0.0, %v5314
  %v5316 = vpop.f32.mrf.mxu0
  %5317 = vmatprep.mubr.bf16.mxu0 0
  %5318 = vmatmul.mubr.bf16.gmra.mxu0 %v5234
  %v5319 = vpop.f32.mrf.mxu0
  %v5320 = vadd.f32 0.0, %v5319
  %v5321 = vpop.f32.mrf.mxu0
  %v5322 = vpop.f32.mrf.mxu0
  %v5323 = vadd.f32 0.0, %v5322
  %v5324 = vpop.f32.mrf.mxu0
  %5325 = vmatprep.mubr.bf16.mxu0 0
  %5326 = vmatmul.mubr.bf16.gmra.mxu0 %v5237
  %v5327 = vpop.f32.mrf.mxu0
  %v5328 = vadd.f32 0.0, %v5327
  %v5329 = vpop.f32.mrf.mxu0
  %v5330 = vpop.f32.mrf.mxu0
  %v5331 = vadd.f32 0.0, %v5330
  %v5332 = vpop.f32.mrf.mxu0
  %5333 = vmatprep.mubr.bf16.mxu0 0
  %5334 = vmatmul.mubr.bf16.gmra.mxu0 %v5240
  %v5335 = vpop.f32.mrf.mxu0
  %v5336 = vadd.f32 0.0, %v5335
  %v5337 = vpop.f32.mrf.mxu0
  %v5338 = vpop.f32.mrf.mxu0
  %v5339 = vadd.f32 0.0, %v5338
  %v5340 = vpop.f32.mrf.mxu0
  %5341 = vdwg.mxu0
  %v5342 = vadd.f32 %v4719, %v5280
  %v5343 = vadd.f32 %v4720, %v5283
  %v5344 = vadd.f32 %v4721, %v5288
  %v5345 = vadd.f32 %v4722, %v5291
  %v5346 = vadd.f32 %v4723, %v5296
  %v5347 = vadd.f32 %v4724, %v5299
  %v5348 = vadd.f32 %v4725, %v5304
  %v5349 = vadd.f32 %v4726, %v5307
  %v5350 = vadd.f32 %v4727, %v5312
  %v5351 = vadd.f32 %v4728, %v5315
  %v5352 = vadd.f32 %v4729, %v5320
  %v5353 = vadd.f32 %v4730, %v5323
  %v5354 = vadd.f32 %v4731, %v5328
  %v5355 = vadd.f32 %v4732, %v5331
  %v5356 = vadd.f32 %v4733, %v5336
  %v5357 = vadd.f32 %v4734, %v5339
  %v5358 = vld [vmem:[%s7] sm:$0x1]
  %v5360 = vlaneseq
  %v5361 = vshrl.u32 %v5360, 7
  %v5362 = vsub.s32 0, %v5361
  %v5363 = vrot.slane %v5358, %v5362
  %v5365 = vmul.f32 %v5342, %v5363
  %v5366 = vmul.f32 %v5343, %v5363
  %v5367 = vmul.f32 %v5344, %v5363
  %v5368 = vmul.f32 %v5345, %v5363
  %v5369 = vmul.f32 %v5346, %v5363
  %v5370 = vmul.f32 %v5347, %v5363
  %v5371 = vmul.f32 %v5348, %v5363
  %v5372 = vmul.f32 %v5349, %v5363
  %v5373 = vmul.f32 %v5350, %v5363
  %v5374 = vmul.f32 %v5351, %v5363
  %v5375 = vmul.f32 %v5352, %v5363
  %v5376 = vmul.f32 %v5353, %v5363
  %v5377 = vmul.f32 %v5354, %v5363
  %v5378 = vmul.f32 %v5355, %v5363
  %v5379 = vmul.f32 %v5356, %v5363
  %v5380 = vmul.f32 %v5357, %v5363
  %v5381 = vld [vmem:[%s8] sm:$0x1]
  %v5383 = vlaneseq
  %v5384 = vshrl.u32 %v5383, 7
  %v5385 = vsub.s32 0, %v5384
  %v5386 = vrot.slane %v5381, %v5385
  %v5388 = vadd.f32 %v5365, %v5386
  %v5389 = vadd.f32 %v5366, %v5386
  %v5390 = vadd.f32 %v5367, %v5386
  %v5391 = vadd.f32 %v5368, %v5386
  %v5392 = vadd.f32 %v5369, %v5386
  %v5393 = vadd.f32 %v5370, %v5386
  %v5394 = vadd.f32 %v5371, %v5386
  %v5395 = vadd.f32 %v5372, %v5386
  %v5396 = vadd.f32 %v5373, %v5386
  %v5397 = vadd.f32 %v5374, %v5386
  %v5398 = vadd.f32 %v5375, %v5386
  %v5399 = vadd.f32 %v5376, %v5386
  %v5400 = vadd.f32 %v5377, %v5386
  %v5401 = vadd.f32 %v5378, %v5386
  %v5402 = vadd.f32 %v5379, %v5386
  %v5403 = vadd.f32 %v5380, %v5386
  %v5404 = vmul.f32 %v5388, 0.2
  %v5405 = vmul.f32 %v5389, 0.2
  %v5406 = vmul.f32 %v5390, 0.2
  %v5407 = vmul.f32 %v5391, 0.2
  %v5408 = vmul.f32 %v5392, 0.2
  %v5409 = vmul.f32 %v5393, 0.2
  %v5410 = vmul.f32 %v5394, 0.2
  %v5411 = vmul.f32 %v5395, 0.2
  %v5412 = vmul.f32 %v5396, 0.2
  %v5413 = vmul.f32 %v5397, 0.2
  %v5414 = vmul.f32 %v5398, 0.2
  %v5415 = vmul.f32 %v5399, 0.2
  %v5416 = vmul.f32 %v5400, 0.2
  %v5417 = vmul.f32 %v5401, 0.2
  %v5418 = vmul.f32 %v5402, 0.2
  %v5419 = vmul.f32 %v5403, 0.2
  %v5420 = vmax.f32 %v5388, %v5404
  %v5421 = vmax.f32 %v5389, %v5405
  %v5422 = vmax.f32 %v5390, %v5406
  %v5423 = vmax.f32 %v5391, %v5407
  %v5424 = vmax.f32 %v5392, %v5408
  %v5425 = vmax.f32 %v5393, %v5409
  %v5426 = vmax.f32 %v5394, %v5410
  %v5427 = vmax.f32 %v5395, %v5411
  %v5428 = vmax.f32 %v5396, %v5412
  %v5429 = vmax.f32 %v5397, %v5413
  %v5430 = vmax.f32 %v5398, %v5414
  %v5431 = vmax.f32 %v5399, %v5415
  %v5432 = vmax.f32 %v5400, %v5416
  %v5433 = vmax.f32 %v5401, %v5417
  %v5434 = vmax.f32 %v5402, %v5418
  %v5435 = vmax.f32 %v5403, %v5419
  %v5436 = vadd.f32 %v5420, %v579
  %v5437 = vadd.f32 %v5421, %v580
  %v5438 = vadd.f32 %v5422, %v581
  %v5439 = vadd.f32 %v5423, %v582
  %v5440 = vadd.f32 %v5424, %v583
  %v5441 = vadd.f32 %v5425, %v584
  %v5442 = vadd.f32 %v5426, %v585
  %v5443 = vadd.f32 %v5427, %v586
  %v5444 = vadd.f32 %v5428, %v587
  %v5445 = vadd.f32 %v5429, %v588
  %v5446 = vadd.f32 %v5430, %v589
  %v5447 = vadd.f32 %v5431, %v590
  %v5448 = vadd.f32 %v5432, %v591
  %v5449 = vadd.f32 %v5433, %v592
  %v5450 = vadd.f32 %v5434, %v593
  %v5451 = vadd.f32 %v5435, %v594
  %v5452 = vmul.f32 %v5436, 0.5
  %v5453 = vmul.f32 %v5437, 0.5
  %v5454 = vmul.f32 %v5438, 0.5
  %v5455 = vmul.f32 %v5439, 0.5
  %v5456 = vmul.f32 %v5440, 0.5
  %v5457 = vmul.f32 %v5441, 0.5
  %v5458 = vmul.f32 %v5442, 0.5
  %v5459 = vmul.f32 %v5443, 0.5
  %v5460 = vmul.f32 %v5444, 0.5
  %v5461 = vmul.f32 %v5445, 0.5
  %v5462 = vmul.f32 %v5446, 0.5
  %v5463 = vmul.f32 %v5447, 0.5
  %v5464 = vmul.f32 %v5448, 0.5
  %v5465 = vmul.f32 %v5449, 0.5
  %v5466 = vmul.f32 %v5450, 0.5
  %v5467 = vmul.f32 %v5451, 0.5
  %5468 = vst.msk [vmem:[%s12] sm:$0xff] %vm1215, %v5452
  %5469 = vst.msk [vmem:[%s12 + $0x8] sm:$0xff] %vm1215, %v5453
  %5470 = vst.msk [vmem:[%s12 + $0x10] sm:$0xff] %vm1215, %v5454
  %5471 = vst.msk [vmem:[%s12 + $0x18] sm:$0xff] %vm1215, %v5455
  %5472 = vst.msk [vmem:[%s12 + $0x20] sm:$0xff] %vm1215, %v5456
  %5473 = vst.msk [vmem:[%s12 + $0x28] sm:$0xff] %vm1215, %v5457
  %5474 = vst.msk [vmem:[%s12 + $0x30] sm:$0xff] %vm1215, %v5458
  %5475 = vst.msk [vmem:[%s12 + $0x38] sm:$0xff] %vm1215, %v5459
  %5476 = vst.msk [vmem:[%s12 + $0x40] sm:$0xff] %vm1215, %v5460
  %5477 = vst.msk [vmem:[%s12 + $0x48] sm:$0xff] %vm1215, %v5461
  %5478 = vst.msk [vmem:[%s12 + $0x50] sm:$0xff] %vm1215, %v5462
  %5479 = vst.msk [vmem:[%s12 + $0x58] sm:$0xff] %vm1215, %v5463
  %5480 = vst.msk [vmem:[%s12 + $0x60] sm:$0xff] %vm1215, %v5464
  %5481 = vst.msk [vmem:[%s12 + $0x68] sm:$0xff] %vm1215, %v5465
  %5482 = vst.msk [vmem:[%s12 + $0x70] sm:$0xff] %vm1215, %v5466
  %5483 = vst.msk [vmem:[%s12 + $0x78] sm:$0xff] %vm1215, %v5467
  // Predicated region
  $region50: #{tpu_custom_call.1} parent=0 // pred_check
    _
  $region51: #{tpu_custom_call.1} parent=0 // pred_check_branch
    %5485 = sbr.rel (0) target = $region53
  $region52: #{tpu_custom_call.1} parent=0 // pred_region
    _
  $region53: #{tpu_custom_call.1} parent=0 // pred_fallthru
    _
  // Predicated region
  $region54: #{tpu_custom_call.1} parent=0 // pred_check
    _
  $region55: #{tpu_custom_call.1} parent=0 // pred_check_branch
    %5487 = sbr.rel (0) target = $region57
  $region56: #{tpu_custom_call.1} parent=0 // pred_region
    _
  $region57: #{tpu_custom_call.1} parent=0 // pred_fallthru
    _

</llo_original>
